<compile_context>
chip_gen: v7x
topology: tpu7x:2x2x1
jax: 0.10.0
libtpu: 0.0.40
codegen_flags: <defaults>
</compile_context>

<pallas_src>
import math

import jax
import jax.numpy as jnp
from jax.experimental import pallas as pl
from jax.experimental.pallas import tpu as pltpu  # noqa: F401  (kept for TPU-specific tuning)

# ---------------- small synthetic BERT config ----------------
VOCAB = 100
TYPE_VOCAB = 2
MAX_POS = 16
HIDDEN = 32
NUM_HEADS = 4
HEAD_DIM = HIDDEN // NUM_HEADS
INTERMEDIATE = 64
NUM_LAYERS = 2
LN_EPS = 1e-12

HP = 128   # lane-padded hidden size   (vreg lane width)
IP = 128   # lane-padded intermediate size


# ---------------- fused Pallas kernel ----------------
def fused_bert_kernel(emb_ref, mask_ref, emb_g_ref, emb_b_ref,
                      wqkv_ref, bqkv_ref, wo_ref, bo_ref,
                      ln1_g_ref, ln1_b_ref, w1_ref, b1_ref,
                      w2_ref, b2_ref, ln2_g_ref, ln2_b_ref,
                      pool_w_ref, pool_b_ref,
                      hid_ref, pool_ref):
    f32 = jnp.float32
    # mask of the real hidden lanes (first HIDDEN of HP); padded lanes stay exactly 0
    lane_mask = (jax.lax.broadcasted_iota(jnp.int32, (1, HP), 1) < HIDDEN).astype(f32)
    inv_h = 1.0 / HIDDEN

    def layer_norm(x, g, b):
        # LayerNorm over the real HIDDEN features only (padded lanes excluded)
        xm = x * lane_mask
        mu = jnp.sum(xm, axis=-1, keepdims=True) * inv_h
        diff = (xm - mu) * lane_mask
        var = jnp.sum(diff * diff, axis=-1, keepdims=True) * inv_h
        return diff * jax.lax.rsqrt(var + LN_EPS) * g + b   # g,b zero-padded -> padded lanes stay 0

    def gelu(x):
        # TODO(synk): HF BERT default is exact erf GELU; tanh approximation used for robust Mosaic lowering.
        c = math.sqrt(2.0 / math.pi)
        return 0.5 * x * (1.0 + jnp.tanh(c * (x + 0.044715 * x * x * x)))

    add_mask = mask_ref[...]                                             # (BS, BS)
    x = layer_norm(emb_ref[...], emb_g_ref[...], emb_b_ref[...])         # (BS, HP)

    scale = 1.0 / math.sqrt(HEAD_DIM)
    for l in range(NUM_LAYERS):                                          # static unroll
        wqkv = wqkv_ref[l]                                               # (HP, 3*HP)
        wo = wo_ref[l]                                                   # (HP, HP)
        qkv = jnp.dot(x, wqkv, preferred_element_type=f32) + bqkv_ref[l]  # (BS, 3*HP)
        q = qkv[:, 0:HP] * scale                                         # scale folded once
        k = qkv[:, HP:2 * HP]
        v = qkv[:, 2 * HP:3 * HP]

        attn = bo_ref[l]                                                 # (1, HP) -> broadcast
        for h in range(NUM_HEADS):                                       # static unroll
            lo = h * HEAD_DIM
            qh = q[:, lo:lo + HEAD_DIM]                                  # (BS, hd)
            kh = k[:, lo:lo + HEAD_DIM]
            vh = v[:, lo:lo + HEAD_DIM]
            s = jax.lax.dot_general(qh, kh, (((1,), (1,)), ((), ())),
                                    preferred_element_type=f32) + add_mask   # (BS, BS)
            s = s - jnp.max(s, axis=-1, keepdims=True)
            p = jnp.exp(s)
            p = p * pl.reciprocal(jnp.sum(p, axis=-1, keepdims=True), approx=True)
            ctx = jnp.dot(p, vh, preferred_element_type=f32)             # (BS, hd)
            # concat-free head merge: sum_h ctx_h @ Wo[rows of head h]
            attn = attn + jnp.dot(ctx, wo[lo:lo + HEAD_DIM, :],
                                  preferred_element_type=f32)            # (BS, HP)

        h1 = layer_norm(x + attn, ln1_g_ref[l], ln1_b_ref[l])
        inter = gelu(jnp.dot(h1, w1_ref[l], preferred_element_type=f32) + b1_ref[l])
        ffn = jnp.dot(inter, w2_ref[l], preferred_element_type=f32) + b2_ref[l]
        x = layer_norm(h1 + ffn, ln2_g_ref[l], ln2_b_ref[l])

    hid_ref[...] = x                                                     # (BS, HP) lane-dense store
    # pooler epilogue: tanh(row @ Wp + bp) for all rows; wrapper selects CLS rows.
    pool_ref[...] = jnp.tanh(
        jnp.dot(x, pool_w_ref[...], preferred_element_type=f32) + pool_b_ref[...])


# ---------------- parameter packing (pad to 128 lanes, stack layers) ----------------
def _padw(w, r, c):
    return jnp.pad(w, ((0, r - w.shape[0]), (0, c - w.shape[1])))


def _padb(b, c):
    b = b.reshape(1, -1)
    return jnp.pad(b, ((0, 0), (0, c - b.shape[1])))


def _pack_params(params):
    packed = {
        "emb_g": _padb(params["emb_ln_g"], HP),
        "emb_b": _padb(params["emb_ln_b"], HP),
        "pool_w": _padw(params["pool_w"], HP, HP),
        "pool_b": _padb(params["pool_b"], HP),
    }
    acc = {n: [] for n in ("wqkv", "bqkv", "wo", "bo", "g1", "be1",
                           "w1", "b1", "w2", "b2", "g2", "be2")}
    for lp in params["layers"]:
        acc["wqkv"].append(jnp.concatenate([_padw(lp["wq"], HP, HP),
                                            _padw(lp["wk"], HP, HP),
                                            _padw(lp["wv"], HP, HP)], axis=1))
        acc["bqkv"].append(jnp.concatenate([_padb(lp["bq"], HP),
                                            _padb(lp["bk"], HP),
                                            _padb(lp["bv"], HP)], axis=1))
        acc["wo"].append(_padw(lp["wo"], HP, HP))
        acc["bo"].append(_padb(lp["bo"], HP))
        acc["g1"].append(_padb(lp["g1"], HP))
        acc["be1"].append(_padb(lp["be1"], HP))
        acc["w1"].append(_padw(lp["w1"], HP, IP))
        acc["b1"].append(_padb(lp["b1"], IP))
        acc["w2"].append(_padw(lp["w2"], IP, HP))
        acc["b2"].append(_padb(lp["b2"], HP))
        acc["g2"].append(_padb(lp["g2"], HP))
        acc["be2"].append(_padb(lp["be2"], HP))
    for n, lst in acc.items():
        packed[n] = jnp.stack(lst, axis=0)
    return packed


# ---------------- full forward (== TransformerBasedEncoder.forward, eval mode) ----------------
def transformer_based_encoder_forward(params, input_ids, attention_mask):
    B, S = input_ids.shape
    BS = B * S
    pk = _pack_params(params)

    # embeddings (gathers are glue in plain JAX)
    we = params["word_emb"][input_ids]                        # (B, S, H)
    pe = params["pos_emb"][:S][None, :, :]                    # (1, S, H)
    te = params["type_emb"][0][None, None, :]                 # token_type_ids == 0
    emb = (we + pe + te).reshape(BS, HIDDEN)
    emb_p = jnp.pad(emb, ((0, 0), (0, HP - HIDDEN)))          # (BS, HP)

    # combined additive mask (built once, reused by all layers/heads):
    # 0 where (same batch element AND key unpadded), -1e9 otherwise -> block-diagonal attention.
    row_batch = jnp.repeat(jnp.arange(B, dtype=jnp.int32), S)
    key_keep = attention_mask.reshape(BS).astype(jnp.float32)
    same_b = (row_batch[:, None] == row_batch[None, :]).astype(jnp.float32)
    add_mask = (same_b * key_keep[None, :] - 1.0) * 1e9       # (BS, BS)

    hid_p, pool_p = pl.pallas_call(
        fused_bert_kernel,
        out_shape=(jax.ShapeDtypeStruct((BS, HP), jnp.float32),
                   jax.ShapeDtypeStruct((BS, HP), jnp.float32)),
    )(emb_p, add_mask, pk["emb_g"], pk["emb_b"],
      pk["wqkv"], pk["bqkv"], pk["wo"], pk["bo"],
      pk["g1"], pk["be1"], pk["w1"], pk["b1"], pk["w2"], pk["b2"],
      pk["g2"], pk["be2"], pk["pool_w"], pk["pool_b"])

    last_hiddens = hid_p[:, :HIDDEN].reshape(B, S, HIDDEN)
    pooled = pool_p.reshape(B, S, HP)[:, 0, :HIDDEN]          # CLS rows only
    return {"last_hiddens": last_hiddens, "pooler": pooled}


# ---------------- deterministic parameter init (natural, unpadded shapes) ----------------
def init_params(key):
    def nrm(k, shape, std=0.02):
        return std * jax.random.normal(k, shape, jnp.float32)

    keys = iter(jax.random.split(key, 8 + NUM_LAYERS * 8))
    params = {
        "word_emb": nrm(next(keys), (VOCAB, HIDDEN)),
        "pos_emb": nrm(next(keys), (MAX_POS, HIDDEN)),
        "type_emb": nrm(next(keys), (TYPE_VOCAB, HIDDEN)),
        "emb_ln_g": jnp.ones((1, HIDDEN), jnp.float32),
        "emb_ln_b": jnp.zeros((1, HIDDEN), jnp.float32),
        "pool_w": nrm(next(keys), (HIDDEN, HIDDEN)),
        "pool_b": jnp.zeros((1, HIDDEN), jnp.float32),
        "layers": [],
    }
    for _ in range(NUM_LAYERS):
        lp = {
            "wq": nrm(next(keys), (HIDDEN, HIDDEN)), "bq": jnp.zeros((1, HIDDEN), jnp.float32),
            "wk": nrm(next(keys), (HIDDEN, HIDDEN)), "bk": jnp.zeros((1, HIDDEN), jnp.float32),
            "wv": nrm(next(keys), (HIDDEN, HIDDEN)), "bv": jnp.zeros((1, HIDDEN), jnp.float32),
            "wo": nrm(next(keys), (HIDDEN, HIDDEN)), "bo": jnp.zeros((1, HIDDEN), jnp.float32),
            "g1": jnp.ones((1, HIDDEN), jnp.float32), "be1": jnp.zeros((1, HIDDEN), jnp.float32),
            "w1": nrm(next(keys), (HIDDEN, INTERMEDIATE)), "b1": jnp.zeros((1, INTERMEDIATE), jnp.float32),
            "w2": nrm(next(keys), (INTERMEDIATE, HIDDEN)), "b2": jnp.zeros((1, HIDDEN), jnp.float32),
            "g2": jnp.ones((1, HIDDEN), jnp.float32), "be2": jnp.zeros((1, HIDDEN), jnp.float32),
        }
        params["layers"].append(lp)
    return params


if __name__ == "__main__":
    key = jax.random.PRNGKey(0)
    pkey, ikey = jax.random.split(key)
    params = init_params(pkey)

    B, S = 2, 8
    input_ids = jax.random.randint(ikey, (B, S), 0, VOCAB, dtype=jnp.int32)
    attention_mask = jnp.concatenate(
        [jnp.ones((B, 6), jnp.int32), jnp.zeros((B, 2), jnp.int32)], axis=1)

    fwd = jax.jit(transformer_based_encoder_forward)
    out = fwd(params, input_ids, attention_mask)
    jax.block_until_ready(out)
    assert out["last_hiddens"].shape == (B, S, HIDDEN)
    assert out["pooler"].shape == (B, HIDDEN)
    print("KERNEL_OK")
</pallas_src>

<mosaic_0001>
module attributes {stable_mosaic.version = 11 : i64} {
  func.func @fused_bert_kernel(%arg0: memref<16x128xf32, #tpu.memory_space<vmem>>, %arg1: memref<16x16xf32, #tpu.memory_space<vmem>>, %arg2: memref<1x128xf32, #tpu.memory_space<vmem>>, %arg3: memref<1x128xf32, #tpu.memory_space<vmem>>, %arg4: memref<2x128x384xf32, #tpu.memory_space<vmem>>, %arg5: memref<2x1x384xf32, #tpu.memory_space<vmem>>, %arg6: memref<2x128x128xf32, #tpu.memory_space<vmem>>, %arg7: memref<2x1x128xf32, #tpu.memory_space<vmem>>, %arg8: memref<2x1x128xf32, #tpu.memory_space<vmem>>, %arg9: memref<2x1x128xf32, #tpu.memory_space<vmem>>, %arg10: memref<2x128x128xf32, #tpu.memory_space<vmem>>, %arg11: memref<2x1x128xf32, #tpu.memory_space<vmem>>, %arg12: memref<2x128x128xf32, #tpu.memory_space<vmem>>, %arg13: memref<2x1x128xf32, #tpu.memory_space<vmem>>, %arg14: memref<2x1x128xf32, #tpu.memory_space<vmem>>, %arg15: memref<2x1x128xf32, #tpu.memory_space<vmem>>, %arg16: memref<128x128xf32, #tpu.memory_space<vmem>>, %arg17: memref<1x128xf32, #tpu.memory_space<vmem>>, %arg18: memref<16x128xf32, #tpu.memory_space<vmem>>, %arg19: memref<16x128xf32, #tpu.memory_space<vmem>>) attributes {dimension_semantics = [], scalar_prefetch = 0 : i64, scratch_operands = 0 : i64, tpu.core_type = #tpu.core_type<tc>} {
    %0 = tpu.iota {dimensions = array<i32: 1>} : vector<1x128xi32>
    %c32_i32 = arith.constant 32 : i32
    %1 = vector.broadcast %c32_i32 : i32 to vector<1x128xi32>
    %2 = arith.cmpi slt, %0, %1 : vector<1x128xi32>
    %3 = arith.extui %2 : vector<1x128xi1> to vector<1x128xi32>
    %4 = arith.sitofp %3 : vector<1x128xi32> to vector<1x128xf32>
    %c0 = arith.constant 0 : index
    %c0_0 = arith.constant 0 : index
    %5 = vector.load %arg1[%c0, %c0_0] : memref<16x16xf32, #tpu.memory_space<vmem>>, vector<16x16xf32>
    %c0_1 = arith.constant 0 : index
    %c0_2 = arith.constant 0 : index
    %6 = vector.load %arg0[%c0_1, %c0_2] : memref<16x128xf32, #tpu.memory_space<vmem>>, vector<16x128xf32>
    %c0_3 = arith.constant 0 : index
    %c0_4 = arith.constant 0 : index
    %7 = vector.load %arg2[%c0_3, %c0_4] : memref<1x128xf32, #tpu.memory_space<vmem>>, vector<1x128xf32>
    %c0_5 = arith.constant 0 : index
    %c0_6 = arith.constant 0 : index
    %8 = vector.load %arg3[%c0_5, %c0_6] : memref<1x128xf32, #tpu.memory_space<vmem>>, vector<1x128xf32>
    %9 = vector.broadcast %4 : vector<1x128xf32> to vector<16x128xf32>
    %10 = arith.mulf %6, %9 : vector<16x128xf32>
    %cst = arith.constant dense<0.000000e+00> : vector<16xf32>
    %11 = vector.multi_reduction <add>, %10, %cst [1] : vector<16x128xf32> to vector<16xf32>
    %12 = vector.shape_cast %11 : vector<16xf32> to vector<16x1xf32>
    %cst_7 = arith.constant 3.125000e-02 : f32
    %13 = vector.broadcast %cst_7 : f32 to vector<16x1xf32>
    %14 = arith.mulf %12, %13 : vector<16x1xf32>
    %15 = vector.broadcast %14 : vector<16x1xf32> to vector<16x128xf32>
    %16 = arith.subf %10, %15 : vector<16x128xf32>
    %17 = vector.broadcast %4 : vector<1x128xf32> to vector<16x128xf32>
    %18 = arith.mulf %16, %17 : vector<16x128xf32>
    %19 = arith.mulf %18, %18 : vector<16x128xf32>
    %cst_8 = arith.constant dense<0.000000e+00> : vector<16xf32>
    %20 = vector.multi_reduction <add>, %19, %cst_8 [1] : vector<16x128xf32> to vector<16xf32>
    %21 = vector.shape_cast %20 : vector<16xf32> to vector<16x1xf32>
    %cst_9 = arith.constant 3.125000e-02 : f32
    %22 = vector.broadcast %cst_9 : f32 to vector<16x1xf32>
    %23 = arith.mulf %21, %22 : vector<16x1xf32>
    %cst_10 = arith.constant 9.99999996E-13 : f32
    %24 = vector.broadcast %cst_10 : f32 to vector<16x1xf32>
    %25 = arith.addf %23, %24 : vector<16x1xf32>
    %26 = math.rsqrt %25 : vector<16x1xf32>
    %27 = vector.broadcast %26 : vector<16x1xf32> to vector<16x128xf32>
    %28 = arith.mulf %18, %27 : vector<16x128xf32>
    %29 = vector.broadcast %7 : vector<1x128xf32> to vector<16x128xf32>
    %30 = arith.mulf %28, %29 : vector<16x128xf32>
    %31 = vector.broadcast %8 : vector<1x128xf32> to vector<16x128xf32>
    %32 = arith.addf %30, %31 : vector<16x128xf32>
    %c0_11 = arith.constant 0 : index
    %c0_12 = arith.constant 0 : index
    %c0_13 = arith.constant 0 : index
    %33 = vector.load %arg4[%c0_11, %c0_12, %c0_13] : memref<2x128x384xf32, #tpu.memory_space<vmem>>, vector<1x128x384xf32>
    %34 = vector.shape_cast %33 : vector<1x128x384xf32> to vector<128x384xf32>
    %c0_14 = arith.constant 0 : index
    %c0_15 = arith.constant 0 : index
    %c0_16 = arith.constant 0 : index
    %35 = vector.load %arg6[%c0_14, %c0_15, %c0_16] : memref<2x128x128xf32, #tpu.memory_space<vmem>>, vector<1x128x128xf32>
    %36 = vector.shape_cast %35 : vector<1x128x128xf32> to vector<128x128xf32>
    %cst_17 = arith.constant dense<0.000000e+00> : vector<16x384xf32>
    %37 = tpu.matmul %32, %34, %cst_17 {dimension_numbers = #tpu.dot_dimension_numbers<[1], [0], [0], [1], [0, 0, 1, 1], [], []>} : vector<16x128xf32>, vector<128x384xf32>, vector<16x384xf32> -> vector<16x384xf32>
    %c0_18 = arith.constant 0 : index
    %c0_19 = arith.constant 0 : index
    %c0_20 = arith.constant 0 : index
    %38 = vector.load %arg5[%c0_18, %c0_19, %c0_20] : memref<2x1x384xf32, #tpu.memory_space<vmem>>, vector<1x1x384xf32>
    %39 = vector.shape_cast %38 : vector<1x1x384xf32> to vector<1x384xf32>
    %40 = vector.broadcast %39 : vector<1x384xf32> to vector<16x384xf32>
    %41 = arith.addf %37, %40 : vector<16x384xf32>
    %42 = vector.extract_strided_slice %41 {offsets = [0, 0], sizes = [16, 128], strides = [1, 1]} : vector<16x384xf32> to vector<16x128xf32>
    %cst_21 = arith.constant 0.353553385 : f32
    %43 = vector.broadcast %cst_21 : f32 to vector<16x128xf32>
    %44 = arith.mulf %42, %43 : vector<16x128xf32>
    %45 = vector.extract_strided_slice %41 {offsets = [0, 128], sizes = [16, 128], strides = [1, 1]} : vector<16x384xf32> to vector<16x128xf32>
    %46 = vector.extract_strided_slice %41 {offsets = [0, 256], sizes = [16, 128], strides = [1, 1]} : vector<16x384xf32> to vector<16x128xf32>
    %c0_22 = arith.constant 0 : index
    %c0_23 = arith.constant 0 : index
    %c0_24 = arith.constant 0 : index
    %47 = vector.load %arg7[%c0_22, %c0_23, %c0_24] : memref<2x1x128xf32, #tpu.memory_space<vmem>>, vector<1x1x128xf32>
    %48 = vector.shape_cast %47 : vector<1x1x128xf32> to vector<1x128xf32>
    %49 = vector.extract_strided_slice %44 {offsets = [0, 0], sizes = [16, 8], strides = [1, 1]} : vector<16x128xf32> to vector<16x8xf32>
    %50 = vector.extract_strided_slice %45 {offsets = [0, 0], sizes = [16, 8], strides = [1, 1]} : vector<16x128xf32> to vector<16x8xf32>
    %51 = vector.extract_strided_slice %46 {offsets = [0, 0], sizes = [16, 8], strides = [1, 1]} : vector<16x128xf32> to vector<16x8xf32>
    %cst_25 = arith.constant dense<0.000000e+00> : vector<16x16xf32>
    %52 = tpu.matmul %49, %50, %cst_25 {dimension_numbers = #tpu.dot_dimension_numbers<[1], [1], [0], [0], [0, 0, 1, 0], [], []>} : vector<16x8xf32>, vector<16x8xf32>, vector<16x16xf32> -> vector<16x16xf32>
    %53 = arith.addf %52, %5 : vector<16x16xf32>
    %cst_26 = arith.constant dense<0xFF800000> : vector<16xf32>
    %54 = vector.multi_reduction <maximumf>, %53, %cst_26 [1] : vector<16x16xf32> to vector<16xf32>
    %55 = vector.shape_cast %54 : vector<16xf32> to vector<16x1xf32>
    %56 = vector.broadcast %55 : vector<16x1xf32> to vector<16x16xf32>
    %57 = arith.subf %53, %56 : vector<16x16xf32>
    %58 = math.exp %57 : vector<16x16xf32>
    %cst_27 = arith.constant dense<0.000000e+00> : vector<16xf32>
    %59 = vector.multi_reduction <add>, %58, %cst_27 [1] : vector<16x16xf32> to vector<16xf32>
    %60 = vector.shape_cast %59 : vector<16xf32> to vector<16x1xf32>
    %61 = tpu.reciprocal %60 {approx = true} : vector<16x1xf32> -> vector<16x1xf32>
    %62 = vector.broadcast %61 : vector<16x1xf32> to vector<16x16xf32>
    %63 = arith.mulf %58, %62 : vector<16x16xf32>
    %cst_28 = arith.constant dense<0.000000e+00> : vector<16x8xf32>
    %64 = tpu.matmul %63, %51, %cst_28 {dimension_numbers = #tpu.dot_dimension_numbers<[1], [0], [0], [1], [0, 0, 1, 1], [], []>} : vector<16x16xf32>, vector<16x8xf32>, vector<16x8xf32> -> vector<16x8xf32>
    %65 = vector.extract_strided_slice %36 {offsets = [0, 0], sizes = [8, 128], strides = [1, 1]} : vector<128x128xf32> to vector<8x128xf32>
    %cst_29 = arith.constant dense<0.000000e+00> : vector<16x128xf32>
    %66 = tpu.matmul %64, %65, %cst_29 {dimension_numbers = #tpu.dot_dimension_numbers<[1], [0], [0], [1], [0, 0, 1, 1], [], []>} : vector<16x8xf32>, vector<8x128xf32>, vector<16x128xf32> -> vector<16x128xf32>
    %67 = vector.broadcast %48 : vector<1x128xf32> to vector<16x128xf32>
    %68 = arith.addf %67, %66 : vector<16x128xf32>
    %69 = vector.extract_strided_slice %44 {offsets = [0, 8], sizes = [16, 8], strides = [1, 1]} : vector<16x128xf32> to vector<16x8xf32>
    %70 = vector.extract_strided_slice %45 {offsets = [0, 8], sizes = [16, 8], strides = [1, 1]} : vector<16x128xf32> to vector<16x8xf32>
    %71 = vector.extract_strided_slice %46 {offsets = [0, 8], sizes = [16, 8], strides = [1, 1]} : vector<16x128xf32> to vector<16x8xf32>
    %cst_30 = arith.constant dense<0.000000e+00> : vector<16x16xf32>
    %72 = tpu.matmul %69, %70, %cst_30 {dimension_numbers = #tpu.dot_dimension_numbers<[1], [1], [0], [0], [0, 0, 1, 0], [], []>} : vector<16x8xf32>, vector<16x8xf32>, vector<16x16xf32> -> vector<16x16xf32>
    %73 = arith.addf %72, %5 : vector<16x16xf32>
    %cst_31 = arith.constant dense<0xFF800000> : vector<16xf32>
    %74 = vector.multi_reduction <maximumf>, %73, %cst_31 [1] : vector<16x16xf32> to vector<16xf32>
    %75 = vector.shape_cast %74 : vector<16xf32> to vector<16x1xf32>
    %76 = vector.broadcast %75 : vector<16x1xf32> to vector<16x16xf32>
    %77 = arith.subf %73, %76 : vector<16x16xf32>
    %78 = math.exp %77 : vector<16x16xf32>
    %cst_32 = arith.constant dense<0.000000e+00> : vector<16xf32>
    %79 = vector.multi_reduction <add>, %78, %cst_32 [1] : vector<16x16xf32> to vector<16xf32>
    %80 = vector.shape_cast %79 : vector<16xf32> to vector<16x1xf32>
    %81 = tpu.reciprocal %80 {approx = true} : vector<16x1xf32> -> vector<16x1xf32>
    %82 = vector.broadcast %81 : vector<16x1xf32> to vector<16x16xf32>
    %83 = arith.mulf %78, %82 : vector<16x16xf32>
    %cst_33 = arith.constant dense<0.000000e+00> : vector<16x8xf32>
    %84 = tpu.matmul %83, %71, %cst_33 {dimension_numbers = #tpu.dot_dimension_numbers<[1], [0], [0], [1], [0, 0, 1, 1], [], []>} : vector<16x16xf32>, vector<16x8xf32>, vector<16x8xf32> -> vector<16x8xf32>
    %85 = vector.extract_strided_slice %36 {offsets = [8, 0], sizes = [8, 128], strides = [1, 1]} : vector<128x128xf32> to vector<8x128xf32>
    %cst_34 = arith.constant dense<0.000000e+00> : vector<16x128xf32>
    %86 = tpu.matmul %84, %85, %cst_34 {dimension_numbers = #tpu.dot_dimension_numbers<[1], [0], [0], [1], [0, 0, 1, 1], [], []>} : vector<16x8xf32>, vector<8x128xf32>, vector<16x128xf32> -> vector<16x128xf32>
    %87 = arith.addf %68, %86 : vector<16x128xf32>
    %88 = vector.extract_strided_slice %44 {offsets = [0, 16], sizes = [16, 8], strides = [1, 1]} : vector<16x128xf32> to vector<16x8xf32>
    %89 = vector.extract_strided_slice %45 {offsets = [0, 16], sizes = [16, 8], strides = [1, 1]} : vector<16x128xf32> to vector<16x8xf32>
    %90 = vector.extract_strided_slice %46 {offsets = [0, 16], sizes = [16, 8], strides = [1, 1]} : vector<16x128xf32> to vector<16x8xf32>
    %cst_35 = arith.constant dense<0.000000e+00> : vector<16x16xf32>
    %91 = tpu.matmul %88, %89, %cst_35 {dimension_numbers = #tpu.dot_dimension_numbers<[1], [1], [0], [0], [0, 0, 1, 0], [], []>} : vector<16x8xf32>, vector<16x8xf32>, vector<16x16xf32> -> vector<16x16xf32>
    %92 = arith.addf %91, %5 : vector<16x16xf32>
    %cst_36 = arith.constant dense<0xFF800000> : vector<16xf32>
    %93 = vector.multi_reduction <maximumf>, %92, %cst_36 [1] : vector<16x16xf32> to vector<16xf32>
    %94 = vector.shape_cast %93 : vector<16xf32> to vector<16x1xf32>
    %95 = vector.broadcast %94 : vector<16x1xf32> to vector<16x16xf32>
    %96 = arith.subf %92, %95 : vector<16x16xf32>
    %97 = math.exp %96 : vector<16x16xf32>
    %cst_37 = arith.constant dense<0.000000e+00> : vector<16xf32>
    %98 = vector.multi_reduction <add>, %97, %cst_37 [1] : vector<16x16xf32> to vector<16xf32>
    %99 = vector.shape_cast %98 : vector<16xf32> to vector<16x1xf32>
    %100 = tpu.reciprocal %99 {approx = true} : vector<16x1xf32> -> vector<16x1xf32>
    %101 = vector.broadcast %100 : vector<16x1xf32> to vector<16x16xf32>
    %102 = arith.mulf %97, %101 : vector<16x16xf32>
    %cst_38 = arith.constant dense<0.000000e+00> : vector<16x8xf32>
    %103 = tpu.matmul %102, %90, %cst_38 {dimension_numbers = #tpu.dot_dimension_numbers<[1], [0], [0], [1], [0, 0, 1, 1], [], []>} : vector<16x16xf32>, vector<16x8xf32>, vector<16x8xf32> -> vector<16x8xf32>
    %104 = vector.extract_strided_slice %36 {offsets = [16, 0], sizes = [8, 128], strides = [1, 1]} : vector<128x128xf32> to vector<8x128xf32>
    %cst_39 = arith.constant dense<0.000000e+00> : vector<16x128xf32>
    %105 = tpu.matmul %103, %104, %cst_39 {dimension_numbers = #tpu.dot_dimension_numbers<[1], [0], [0], [1], [0, 0, 1, 1], [], []>} : vector<16x8xf32>, vector<8x128xf32>, vector<16x128xf32> -> vector<16x128xf32>
    %106 = arith.addf %87, %105 : vector<16x128xf32>
    %107 = vector.extract_strided_slice %44 {offsets = [0, 24], sizes = [16, 8], strides = [1, 1]} : vector<16x128xf32> to vector<16x8xf32>
    %108 = vector.extract_strided_slice %45 {offsets = [0, 24], sizes = [16, 8], strides = [1, 1]} : vector<16x128xf32> to vector<16x8xf32>
    %109 = vector.extract_strided_slice %46 {offsets = [0, 24], sizes = [16, 8], strides = [1, 1]} : vector<16x128xf32> to vector<16x8xf32>
    %cst_40 = arith.constant dense<0.000000e+00> : vector<16x16xf32>
    %110 = tpu.matmul %107, %108, %cst_40 {dimension_numbers = #tpu.dot_dimension_numbers<[1], [1], [0], [0], [0, 0, 1, 0], [], []>} : vector<16x8xf32>, vector<16x8xf32>, vector<16x16xf32> -> vector<16x16xf32>
    %111 = arith.addf %110, %5 : vector<16x16xf32>
    %cst_41 = arith.constant dense<0xFF800000> : vector<16xf32>
    %112 = vector.multi_reduction <maximumf>, %111, %cst_41 [1] : vector<16x16xf32> to vector<16xf32>
    %113 = vector.shape_cast %112 : vector<16xf32> to vector<16x1xf32>
    %114 = vector.broadcast %113 : vector<16x1xf32> to vector<16x16xf32>
    %115 = arith.subf %111, %114 : vector<16x16xf32>
    %116 = math.exp %115 : vector<16x16xf32>
    %cst_42 = arith.constant dense<0.000000e+00> : vector<16xf32>
    %117 = vector.multi_reduction <add>, %116, %cst_42 [1] : vector<16x16xf32> to vector<16xf32>
    %118 = vector.shape_cast %117 : vector<16xf32> to vector<16x1xf32>
    %119 = tpu.reciprocal %118 {approx = true} : vector<16x1xf32> -> vector<16x1xf32>
    %120 = vector.broadcast %119 : vector<16x1xf32> to vector<16x16xf32>
    %121 = arith.mulf %116, %120 : vector<16x16xf32>
    %cst_43 = arith.constant dense<0.000000e+00> : vector<16x8xf32>
    %122 = tpu.matmul %121, %109, %cst_43 {dimension_numbers = #tpu.dot_dimension_numbers<[1], [0], [0], [1], [0, 0, 1, 1], [], []>} : vector<16x16xf32>, vector<16x8xf32>, vector<16x8xf32> -> vector<16x8xf32>
    %123 = vector.extract_strided_slice %36 {offsets = [24, 0], sizes = [8, 128], strides = [1, 1]} : vector<128x128xf32> to vector<8x128xf32>
    %cst_44 = arith.constant dense<0.000000e+00> : vector<16x128xf32>
    %124 = tpu.matmul %122, %123, %cst_44 {dimension_numbers = #tpu.dot_dimension_numbers<[1], [0], [0], [1], [0, 0, 1, 1], [], []>} : vector<16x8xf32>, vector<8x128xf32>, vector<16x128xf32> -> vector<16x128xf32>
    %125 = arith.addf %106, %124 : vector<16x128xf32>
    %126 = arith.addf %32, %125 : vector<16x128xf32>
    %c0_45 = arith.constant 0 : index
    %c0_46 = arith.constant 0 : index
    %c0_47 = arith.constant 0 : index
    %127 = vector.load %arg8[%c0_45, %c0_46, %c0_47] : memref<2x1x128xf32, #tpu.memory_space<vmem>>, vector<1x1x128xf32>
    %128 = vector.shape_cast %127 : vector<1x1x128xf32> to vector<1x128xf32>
    %c0_48 = arith.constant 0 : index
    %c0_49 = arith.constant 0 : index
    %c0_50 = arith.constant 0 : index
    %129 = vector.load %arg9[%c0_48, %c0_49, %c0_50] : memref<2x1x128xf32, #tpu.memory_space<vmem>>, vector<1x1x128xf32>
    %130 = vector.shape_cast %129 : vector<1x1x128xf32> to vector<1x128xf32>
    %131 = vector.broadcast %4 : vector<1x128xf32> to vector<16x128xf32>
    %132 = arith.mulf %126, %131 : vector<16x128xf32>
    %cst_51 = arith.constant dense<0.000000e+00> : vector<16xf32>
    %133 = vector.multi_reduction <add>, %132, %cst_51 [1] : vector<16x128xf32> to vector<16xf32>
    %134 = vector.shape_cast %133 : vector<16xf32> to vector<16x1xf32>
    %cst_52 = arith.constant 3.125000e-02 : f32
    %135 = vector.broadcast %cst_52 : f32 to vector<16x1xf32>
    %136 = arith.mulf %134, %135 : vector<16x1xf32>
    %137 = vector.broadcast %136 : vector<16x1xf32> to vector<16x128xf32>
    %138 = arith.subf %132, %137 : vector<16x128xf32>
    %139 = vector.broadcast %4 : vector<1x128xf32> to vector<16x128xf32>
    %140 = arith.mulf %138, %139 : vector<16x128xf32>
    %141 = arith.mulf %140, %140 : vector<16x128xf32>
    %cst_53 = arith.constant dense<0.000000e+00> : vector<16xf32>
    %142 = vector.multi_reduction <add>, %141, %cst_53 [1] : vector<16x128xf32> to vector<16xf32>
    %143 = vector.shape_cast %142 : vector<16xf32> to vector<16x1xf32>
    %cst_54 = arith.constant 3.125000e-02 : f32
    %144 = vector.broadcast %cst_54 : f32 to vector<16x1xf32>
    %145 = arith.mulf %143, %144 : vector<16x1xf32>
    %cst_55 = arith.constant 9.99999996E-13 : f32
    %146 = vector.broadcast %cst_55 : f32 to vector<16x1xf32>
    %147 = arith.addf %145, %146 : vector<16x1xf32>
    %148 = math.rsqrt %147 : vector<16x1xf32>
    %149 = vector.broadcast %148 : vector<16x1xf32> to vector<16x128xf32>
    %150 = arith.mulf %140, %149 : vector<16x128xf32>
    %151 = vector.broadcast %128 : vector<1x128xf32> to vector<16x128xf32>
    %152 = arith.mulf %150, %151 : vector<16x128xf32>
    %153 = vector.broadcast %130 : vector<1x128xf32> to vector<16x128xf32>
    %154 = arith.addf %152, %153 : vector<16x128xf32>
    %c0_56 = arith.constant 0 : index
    %c0_57 = arith.constant 0 : index
    %c0_58 = arith.constant 0 : index
    %155 = vector.load %arg10[%c0_56, %c0_57, %c0_58] : memref<2x128x128xf32, #tpu.memory_space<vmem>>, vector<1x128x128xf32>
    %156 = vector.shape_cast %155 : vector<1x128x128xf32> to vector<128x128xf32>
    %cst_59 = arith.constant dense<0.000000e+00> : vector<16x128xf32>
    %157 = tpu.matmul %154, %156, %cst_59 {dimension_numbers = #tpu.dot_dimension_numbers<[1], [0], [0], [1], [0, 0, 1, 1], [], []>} : vector<16x128xf32>, vector<128x128xf32>, vector<16x128xf32> -> vector<16x128xf32>
    %c0_60 = arith.constant 0 : index
    %c0_61 = arith.constant 0 : index
    %c0_62 = arith.constant 0 : index
    %158 = vector.load %arg11[%c0_60, %c0_61, %c0_62] : memref<2x1x128xf32, #tpu.memory_space<vmem>>, vector<1x1x128xf32>
    %159 = vector.shape_cast %158 : vector<1x1x128xf32> to vector<1x128xf32>
    %160 = vector.broadcast %159 : vector<1x128xf32> to vector<16x128xf32>
    %161 = arith.addf %157, %160 : vector<16x128xf32>
    %cst_63 = arith.constant 5.000000e-01 : f32
    %162 = vector.broadcast %cst_63 : f32 to vector<16x128xf32>
    %163 = arith.mulf %162, %161 : vector<16x128xf32>
    %cst_64 = arith.constant 4.471500e-02 : f32
    %164 = vector.broadcast %cst_64 : f32 to vector<16x128xf32>
    %165 = arith.mulf %164, %161 : vector<16x128xf32>
    %166 = arith.mulf %165, %161 : vector<16x128xf32>
    %167 = arith.mulf %166, %161 : vector<16x128xf32>
    %168 = arith.addf %161, %167 : vector<16x128xf32>
    %cst_65 = arith.constant 0.797884583 : f32
    %169 = vector.broadcast %cst_65 : f32 to vector<16x128xf32>
    %170 = arith.mulf %169, %168 : vector<16x128xf32>
    %171 = math.tanh %170 : vector<16x128xf32>
    %cst_66 = arith.constant 1.000000e+00 : f32
    %172 = vector.broadcast %cst_66 : f32 to vector<16x128xf32>
    %173 = arith.addf %172, %171 : vector<16x128xf32>
    %174 = arith.mulf %163, %173 : vector<16x128xf32>
    %c0_67 = arith.constant 0 : index
    %c0_68 = arith.constant 0 : index
    %c0_69 = arith.constant 0 : index
    %175 = vector.load %arg12[%c0_67, %c0_68, %c0_69] : memref<2x128x128xf32, #tpu.memory_space<vmem>>, vector<1x128x128xf32>
    %176 = vector.shape_cast %175 : vector<1x128x128xf32> to vector<128x128xf32>
    %cst_70 = arith.constant dense<0.000000e+00> : vector<16x128xf32>
    %177 = tpu.matmul %174, %176, %cst_70 {dimension_numbers = #tpu.dot_dimension_numbers<[1], [0], [0], [1], [0, 0, 1, 1], [], []>} : vector<16x128xf32>, vector<128x128xf32>, vector<16x128xf32> -> vector<16x128xf32>
    %c0_71 = arith.constant 0 : index
    %c0_72 = arith.constant 0 : index
    %c0_73 = arith.constant 0 : index
    %178 = vector.load %arg13[%c0_71, %c0_72, %c0_73] : memref<2x1x128xf32, #tpu.memory_space<vmem>>, vector<1x1x128xf32>
    %179 = vector.shape_cast %178 : vector<1x1x128xf32> to vector<1x128xf32>
    %180 = vector.broadcast %179 : vector<1x128xf32> to vector<16x128xf32>
    %181 = arith.addf %177, %180 : vector<16x128xf32>
    %182 = arith.addf %154, %181 : vector<16x128xf32>
    %c0_74 = arith.constant 0 : index
    %c0_75 = arith.constant 0 : index
    %c0_76 = arith.constant 0 : index
    %183 = vector.load %arg14[%c0_74, %c0_75, %c0_76] : memref<2x1x128xf32, #tpu.memory_space<vmem>>, vector<1x1x128xf32>
    %184 = vector.shape_cast %183 : vector<1x1x128xf32> to vector<1x128xf32>
    %c0_77 = arith.constant 0 : index
    %c0_78 = arith.constant 0 : index
    %c0_79 = arith.constant 0 : index
    %185 = vector.load %arg15[%c0_77, %c0_78, %c0_79] : memref<2x1x128xf32, #tpu.memory_space<vmem>>, vector<1x1x128xf32>
    %186 = vector.shape_cast %185 : vector<1x1x128xf32> to vector<1x128xf32>
    %187 = vector.broadcast %4 : vector<1x128xf32> to vector<16x128xf32>
    %188 = arith.mulf %182, %187 : vector<16x128xf32>
    %cst_80 = arith.constant dense<0.000000e+00> : vector<16xf32>
    %189 = vector.multi_reduction <add>, %188, %cst_80 [1] : vector<16x128xf32> to vector<16xf32>
    %190 = vector.shape_cast %189 : vector<16xf32> to vector<16x1xf32>
    %cst_81 = arith.constant 3.125000e-02 : f32
    %191 = vector.broadcast %cst_81 : f32 to vector<16x1xf32>
    %192 = arith.mulf %190, %191 : vector<16x1xf32>
    %193 = vector.broadcast %192 : vector<16x1xf32> to vector<16x128xf32>
    %194 = arith.subf %188, %193 : vector<16x128xf32>
    %195 = vector.broadcast %4 : vector<1x128xf32> to vector<16x128xf32>
    %196 = arith.mulf %194, %195 : vector<16x128xf32>
    %197 = arith.mulf %196, %196 : vector<16x128xf32>
    %cst_82 = arith.constant dense<0.000000e+00> : vector<16xf32>
    %198 = vector.multi_reduction <add>, %197, %cst_82 [1] : vector<16x128xf32> to vector<16xf32>
    %199 = vector.shape_cast %198 : vector<16xf32> to vector<16x1xf32>
    %cst_83 = arith.constant 3.125000e-02 : f32
    %200 = vector.broadcast %cst_83 : f32 to vector<16x1xf32>
    %201 = arith.mulf %199, %200 : vector<16x1xf32>
    %cst_84 = arith.constant 9.99999996E-13 : f32
    %202 = vector.broadcast %cst_84 : f32 to vector<16x1xf32>
    %203 = arith.addf %201, %202 : vector<16x1xf32>
    %204 = math.rsqrt %203 : vector<16x1xf32>
    %205 = vector.broadcast %204 : vector<16x1xf32> to vector<16x128xf32>
    %206 = arith.mulf %196, %205 : vector<16x128xf32>
    %207 = vector.broadcast %184 : vector<1x128xf32> to vector<16x128xf32>
    %208 = arith.mulf %206, %207 : vector<16x128xf32>
    %209 = vector.broadcast %186 : vector<1x128xf32> to vector<16x128xf32>
    %210 = arith.addf %208, %209 : vector<16x128xf32>
    %c1 = arith.constant 1 : index
    %c0_85 = arith.constant 0 : index
    %c0_86 = arith.constant 0 : index
    %211 = vector.load %arg4[%c1, %c0_85, %c0_86] : memref<2x128x384xf32, #tpu.memory_space<vmem>>, vector<1x128x384xf32>
    %212 = vector.shape_cast %211 : vector<1x128x384xf32> to vector<128x384xf32>
    %c1_87 = arith.constant 1 : index
    %c0_88 = arith.constant 0 : index
    %c0_89 = arith.constant 0 : index
    %213 = vector.load %arg6[%c1_87, %c0_88, %c0_89] : memref<2x128x128xf32, #tpu.memory_space<vmem>>, vector<1x128x128xf32>
    %214 = vector.shape_cast %213 : vector<1x128x128xf32> to vector<128x128xf32>
    %cst_90 = arith.constant dense<0.000000e+00> : vector<16x384xf32>
    %215 = tpu.matmul %210, %212, %cst_90 {dimension_numbers = #tpu.dot_dimension_numbers<[1], [0], [0], [1], [0, 0, 1, 1], [], []>} : vector<16x128xf32>, vector<128x384xf32>, vector<16x384xf32> -> vector<16x384xf32>
    %c1_91 = arith.constant 1 : index
    %c0_92 = arith.constant 0 : index
    %c0_93 = arith.constant 0 : index
    %216 = vector.load %arg5[%c1_91, %c0_92, %c0_93] : memref<2x1x384xf32, #tpu.memory_space<vmem>>, vector<1x1x384xf32>
    %217 = vector.shape_cast %216 : vector<1x1x384xf32> to vector<1x384xf32>
    %218 = vector.broadcast %217 : vector<1x384xf32> to vector<16x384xf32>
    %219 = arith.addf %215, %218 : vector<16x384xf32>
    %220 = vector.extract_strided_slice %219 {offsets = [0, 0], sizes = [16, 128], strides = [1, 1]} : vector<16x384xf32> to vector<16x128xf32>
    %cst_94 = arith.constant 0.353553385 : f32
    %221 = vector.broadcast %cst_94 : f32 to vector<16x128xf32>
    %222 = arith.mulf %220, %221 : vector<16x128xf32>
    %223 = vector.extract_strided_slice %219 {offsets = [0, 128], sizes = [16, 128], strides = [1, 1]} : vector<16x384xf32> to vector<16x128xf32>
    %224 = vector.extract_strided_slice %219 {offsets = [0, 256], sizes = [16, 128], strides = [1, 1]} : vector<16x384xf32> to vector<16x128xf32>
    %c1_95 = arith.constant 1 : index
    %c0_96 = arith.constant 0 : index
    %c0_97 = arith.constant 0 : index
    %225 = vector.load %arg7[%c1_95, %c0_96, %c0_97] : memref<2x1x128xf32, #tpu.memory_space<vmem>>, vector<1x1x128xf32>
    %226 = vector.shape_cast %225 : vector<1x1x128xf32> to vector<1x128xf32>
    %227 = vector.extract_strided_slice %222 {offsets = [0, 0], sizes = [16, 8], strides = [1, 1]} : vector<16x128xf32> to vector<16x8xf32>
    %228 = vector.extract_strided_slice %223 {offsets = [0, 0], sizes = [16, 8], strides = [1, 1]} : vector<16x128xf32> to vector<16x8xf32>
    %229 = vector.extract_strided_slice %224 {offsets = [0, 0], sizes = [16, 8], strides = [1, 1]} : vector<16x128xf32> to vector<16x8xf32>
    %cst_98 = arith.constant dense<0.000000e+00> : vector<16x16xf32>
    %230 = tpu.matmul %227, %228, %cst_98 {dimension_numbers = #tpu.dot_dimension_numbers<[1], [1], [0], [0], [0, 0, 1, 0], [], []>} : vector<16x8xf32>, vector<16x8xf32>, vector<16x16xf32> -> vector<16x16xf32>
    %231 = arith.addf %230, %5 : vector<16x16xf32>
    %cst_99 = arith.constant dense<0xFF800000> : vector<16xf32>
    %232 = vector.multi_reduction <maximumf>, %231, %cst_99 [1] : vector<16x16xf32> to vector<16xf32>
    %233 = vector.shape_cast %232 : vector<16xf32> to vector<16x1xf32>
    %234 = vector.broadcast %233 : vector<16x1xf32> to vector<16x16xf32>
    %235 = arith.subf %231, %234 : vector<16x16xf32>
    %236 = math.exp %235 : vector<16x16xf32>
    %cst_100 = arith.constant dense<0.000000e+00> : vector<16xf32>
    %237 = vector.multi_reduction <add>, %236, %cst_100 [1] : vector<16x16xf32> to vector<16xf32>
    %238 = vector.shape_cast %237 : vector<16xf32> to vector<16x1xf32>
    %239 = tpu.reciprocal %238 {approx = true} : vector<16x1xf32> -> vector<16x1xf32>
    %240 = vector.broadcast %239 : vector<16x1xf32> to vector<16x16xf32>
    %241 = arith.mulf %236, %240 : vector<16x16xf32>
    %cst_101 = arith.constant dense<0.000000e+00> : vector<16x8xf32>
    %242 = tpu.matmul %241, %229, %cst_101 {dimension_numbers = #tpu.dot_dimension_numbers<[1], [0], [0], [1], [0, 0, 1, 1], [], []>} : vector<16x16xf32>, vector<16x8xf32>, vector<16x8xf32> -> vector<16x8xf32>
    %243 = vector.extract_strided_slice %214 {offsets = [0, 0], sizes = [8, 128], strides = [1, 1]} : vector<128x128xf32> to vector<8x128xf32>
    %cst_102 = arith.constant dense<0.000000e+00> : vector<16x128xf32>
    %244 = tpu.matmul %242, %243, %cst_102 {dimension_numbers = #tpu.dot_dimension_numbers<[1], [0], [0], [1], [0, 0, 1, 1], [], []>} : vector<16x8xf32>, vector<8x128xf32>, vector<16x128xf32> -> vector<16x128xf32>
    %245 = vector.broadcast %226 : vector<1x128xf32> to vector<16x128xf32>
    %246 = arith.addf %245, %244 : vector<16x128xf32>
    %247 = vector.extract_strided_slice %222 {offsets = [0, 8], sizes = [16, 8], strides = [1, 1]} : vector<16x128xf32> to vector<16x8xf32>
    %248 = vector.extract_strided_slice %223 {offsets = [0, 8], sizes = [16, 8], strides = [1, 1]} : vector<16x128xf32> to vector<16x8xf32>
    %249 = vector.extract_strided_slice %224 {offsets = [0, 8], sizes = [16, 8], strides = [1, 1]} : vector<16x128xf32> to vector<16x8xf32>
    %cst_103 = arith.constant dense<0.000000e+00> : vector<16x16xf32>
    %250 = tpu.matmul %247, %248, %cst_103 {dimension_numbers = #tpu.dot_dimension_numbers<[1], [1], [0], [0], [0, 0, 1, 0], [], []>} : vector<16x8xf32>, vector<16x8xf32>, vector<16x16xf32> -> vector<16x16xf32>
    %251 = arith.addf %250, %5 : vector<16x16xf32>
    %cst_104 = arith.constant dense<0xFF800000> : vector<16xf32>
    %252 = vector.multi_reduction <maximumf>, %251, %cst_104 [1] : vector<16x16xf32> to vector<16xf32>
    %253 = vector.shape_cast %252 : vector<16xf32> to vector<16x1xf32>
    %254 = vector.broadcast %253 : vector<16x1xf32> to vector<16x16xf32>
    %255 = arith.subf %251, %254 : vector<16x16xf32>
    %256 = math.exp %255 : vector<16x16xf32>
    %cst_105 = arith.constant dense<0.000000e+00> : vector<16xf32>
    %257 = vector.multi_reduction <add>, %256, %cst_105 [1] : vector<16x16xf32> to vector<16xf32>
    %258 = vector.shape_cast %257 : vector<16xf32> to vector<16x1xf32>
    %259 = tpu.reciprocal %258 {approx = true} : vector<16x1xf32> -> vector<16x1xf32>
    %260 = vector.broadcast %259 : vector<16x1xf32> to vector<16x16xf32>
    %261 = arith.mulf %256, %260 : vector<16x16xf32>
    %cst_106 = arith.constant dense<0.000000e+00> : vector<16x8xf32>
    %262 = tpu.matmul %261, %249, %cst_106 {dimension_numbers = #tpu.dot_dimension_numbers<[1], [0], [0], [1], [0, 0, 1, 1], [], []>} : vector<16x16xf32>, vector<16x8xf32>, vector<16x8xf32> -> vector<16x8xf32>
    %263 = vector.extract_strided_slice %214 {offsets = [8, 0], sizes = [8, 128], strides = [1, 1]} : vector<128x128xf32> to vector<8x128xf32>
    %cst_107 = arith.constant dense<0.000000e+00> : vector<16x128xf32>
    %264 = tpu.matmul %262, %263, %cst_107 {dimension_numbers = #tpu.dot_dimension_numbers<[1], [0], [0], [1], [0, 0, 1, 1], [], []>} : vector<16x8xf32>, vector<8x128xf32>, vector<16x128xf32> -> vector<16x128xf32>
    %265 = arith.addf %246, %264 : vector<16x128xf32>
    %266 = vector.extract_strided_slice %222 {offsets = [0, 16], sizes = [16, 8], strides = [1, 1]} : vector<16x128xf32> to vector<16x8xf32>
    %267 = vector.extract_strided_slice %223 {offsets = [0, 16], sizes = [16, 8], strides = [1, 1]} : vector<16x128xf32> to vector<16x8xf32>
    %268 = vector.extract_strided_slice %224 {offsets = [0, 16], sizes = [16, 8], strides = [1, 1]} : vector<16x128xf32> to vector<16x8xf32>
    %cst_108 = arith.constant dense<0.000000e+00> : vector<16x16xf32>
    %269 = tpu.matmul %266, %267, %cst_108 {dimension_numbers = #tpu.dot_dimension_numbers<[1], [1], [0], [0], [0, 0, 1, 0], [], []>} : vector<16x8xf32>, vector<16x8xf32>, vector<16x16xf32> -> vector<16x16xf32>
    %270 = arith.addf %269, %5 : vector<16x16xf32>
    %cst_109 = arith.constant dense<0xFF800000> : vector<16xf32>
    %271 = vector.multi_reduction <maximumf>, %270, %cst_109 [1] : vector<16x16xf32> to vector<16xf32>
    %272 = vector.shape_cast %271 : vector<16xf32> to vector<16x1xf32>
    %273 = vector.broadcast %272 : vector<16x1xf32> to vector<16x16xf32>
    %274 = arith.subf %270, %273 : vector<16x16xf32>
    %275 = math.exp %274 : vector<16x16xf32>
    %cst_110 = arith.constant dense<0.000000e+00> : vector<16xf32>
    %276 = vector.multi_reduction <add>, %275, %cst_110 [1] : vector<16x16xf32> to vector<16xf32>
    %277 = vector.shape_cast %276 : vector<16xf32> to vector<16x1xf32>
    %278 = tpu.reciprocal %277 {approx = true} : vector<16x1xf32> -> vector<16x1xf32>
    %279 = vector.broadcast %278 : vector<16x1xf32> to vector<16x16xf32>
    %280 = arith.mulf %275, %279 : vector<16x16xf32>
    %cst_111 = arith.constant dense<0.000000e+00> : vector<16x8xf32>
    %281 = tpu.matmul %280, %268, %cst_111 {dimension_numbers = #tpu.dot_dimension_numbers<[1], [0], [0], [1], [0, 0, 1, 1], [], []>} : vector<16x16xf32>, vector<16x8xf32>, vector<16x8xf32> -> vector<16x8xf32>
    %282 = vector.extract_strided_slice %214 {offsets = [16, 0], sizes = [8, 128], strides = [1, 1]} : vector<128x128xf32> to vector<8x128xf32>
    %cst_112 = arith.constant dense<0.000000e+00> : vector<16x128xf32>
    %283 = tpu.matmul %281, %282, %cst_112 {dimension_numbers = #tpu.dot_dimension_numbers<[1], [0], [0], [1], [0, 0, 1, 1], [], []>} : vector<16x8xf32>, vector<8x128xf32>, vector<16x128xf32> -> vector<16x128xf32>
    %284 = arith.addf %265, %283 : vector<16x128xf32>
    %285 = vector.extract_strided_slice %222 {offsets = [0, 24], sizes = [16, 8], strides = [1, 1]} : vector<16x128xf32> to vector<16x8xf32>
    %286 = vector.extract_strided_slice %223 {offsets = [0, 24], sizes = [16, 8], strides = [1, 1]} : vector<16x128xf32> to vector<16x8xf32>
    %287 = vector.extract_strided_slice %224 {offsets = [0, 24], sizes = [16, 8], strides = [1, 1]} : vector<16x128xf32> to vector<16x8xf32>
    %cst_113 = arith.constant dense<0.000000e+00> : vector<16x16xf32>
    %288 = tpu.matmul %285, %286, %cst_113 {dimension_numbers = #tpu.dot_dimension_numbers<[1], [1], [0], [0], [0, 0, 1, 0], [], []>} : vector<16x8xf32>, vector<16x8xf32>, vector<16x16xf32> -> vector<16x16xf32>
    %289 = arith.addf %288, %5 : vector<16x16xf32>
    %cst_114 = arith.constant dense<0xFF800000> : vector<16xf32>
    %290 = vector.multi_reduction <maximumf>, %289, %cst_114 [1] : vector<16x16xf32> to vector<16xf32>
    %291 = vector.shape_cast %290 : vector<16xf32> to vector<16x1xf32>
    %292 = vector.broadcast %291 : vector<16x1xf32> to vector<16x16xf32>
    %293 = arith.subf %289, %292 : vector<16x16xf32>
    %294 = math.exp %293 : vector<16x16xf32>
    %cst_115 = arith.constant dense<0.000000e+00> : vector<16xf32>
    %295 = vector.multi_reduction <add>, %294, %cst_115 [1] : vector<16x16xf32> to vector<16xf32>
    %296 = vector.shape_cast %295 : vector<16xf32> to vector<16x1xf32>
    %297 = tpu.reciprocal %296 {approx = true} : vector<16x1xf32> -> vector<16x1xf32>
    %298 = vector.broadcast %297 : vector<16x1xf32> to vector<16x16xf32>
    %299 = arith.mulf %294, %298 : vector<16x16xf32>
    %cst_116 = arith.constant dense<0.000000e+00> : vector<16x8xf32>
    %300 = tpu.matmul %299, %287, %cst_116 {dimension_numbers = #tpu.dot_dimension_numbers<[1], [0], [0], [1], [0, 0, 1, 1], [], []>} : vector<16x16xf32>, vector<16x8xf32>, vector<16x8xf32> -> vector<16x8xf32>
    %301 = vector.extract_strided_slice %214 {offsets = [24, 0], sizes = [8, 128], strides = [1, 1]} : vector<128x128xf32> to vector<8x128xf32>
    %cst_117 = arith.constant dense<0.000000e+00> : vector<16x128xf32>
    %302 = tpu.matmul %300, %301, %cst_117 {dimension_numbers = #tpu.dot_dimension_numbers<[1], [0], [0], [1], [0, 0, 1, 1], [], []>} : vector<16x8xf32>, vector<8x128xf32>, vector<16x128xf32> -> vector<16x128xf32>
    %303 = arith.addf %284, %302 : vector<16x128xf32>
    %304 = arith.addf %210, %303 : vector<16x128xf32>
    %c1_118 = arith.constant 1 : index
    %c0_119 = arith.constant 0 : index
    %c0_120 = arith.constant 0 : index
    %305 = vector.load %arg8[%c1_118, %c0_119, %c0_120] : memref<2x1x128xf32, #tpu.memory_space<vmem>>, vector<1x1x128xf32>
    %306 = vector.shape_cast %305 : vector<1x1x128xf32> to vector<1x128xf32>
    %c1_121 = arith.constant 1 : index
    %c0_122 = arith.constant 0 : index
    %c0_123 = arith.constant 0 : index
    %307 = vector.load %arg9[%c1_121, %c0_122, %c0_123] : memref<2x1x128xf32, #tpu.memory_space<vmem>>, vector<1x1x128xf32>
    %308 = vector.shape_cast %307 : vector<1x1x128xf32> to vector<1x128xf32>
    %309 = vector.broadcast %4 : vector<1x128xf32> to vector<16x128xf32>
    %310 = arith.mulf %304, %309 : vector<16x128xf32>
    %cst_124 = arith.constant dense<0.000000e+00> : vector<16xf32>
    %311 = vector.multi_reduction <add>, %310, %cst_124 [1] : vector<16x128xf32> to vector<16xf32>
    %312 = vector.shape_cast %311 : vector<16xf32> to vector<16x1xf32>
    %cst_125 = arith.constant 3.125000e-02 : f32
    %313 = vector.broadcast %cst_125 : f32 to vector<16x1xf32>
    %314 = arith.mulf %312, %313 : vector<16x1xf32>
    %315 = vector.broadcast %314 : vector<16x1xf32> to vector<16x128xf32>
    %316 = arith.subf %310, %315 : vector<16x128xf32>
    %317 = vector.broadcast %4 : vector<1x128xf32> to vector<16x128xf32>
    %318 = arith.mulf %316, %317 : vector<16x128xf32>
    %319 = arith.mulf %318, %318 : vector<16x128xf32>
    %cst_126 = arith.constant dense<0.000000e+00> : vector<16xf32>
    %320 = vector.multi_reduction <add>, %319, %cst_126 [1] : vector<16x128xf32> to vector<16xf32>
    %321 = vector.shape_cast %320 : vector<16xf32> to vector<16x1xf32>
    %cst_127 = arith.constant 3.125000e-02 : f32
    %322 = vector.broadcast %cst_127 : f32 to vector<16x1xf32>
    %323 = arith.mulf %321, %322 : vector<16x1xf32>
    %cst_128 = arith.constant 9.99999996E-13 : f32
    %324 = vector.broadcast %cst_128 : f32 to vector<16x1xf32>
    %325 = arith.addf %323, %324 : vector<16x1xf32>
    %326 = math.rsqrt %325 : vector<16x1xf32>
    %327 = vector.broadcast %326 : vector<16x1xf32> to vector<16x128xf32>
    %328 = arith.mulf %318, %327 : vector<16x128xf32>
    %329 = vector.broadcast %306 : vector<1x128xf32> to vector<16x128xf32>
    %330 = arith.mulf %328, %329 : vector<16x128xf32>
    %331 = vector.broadcast %308 : vector<1x128xf32> to vector<16x128xf32>
    %332 = arith.addf %330, %331 : vector<16x128xf32>
    %c1_129 = arith.constant 1 : index
    %c0_130 = arith.constant 0 : index
    %c0_131 = arith.constant 0 : index
    %333 = vector.load %arg10[%c1_129, %c0_130, %c0_131] : memref<2x128x128xf32, #tpu.memory_space<vmem>>, vector<1x128x128xf32>
    %334 = vector.shape_cast %333 : vector<1x128x128xf32> to vector<128x128xf32>
    %cst_132 = arith.constant dense<0.000000e+00> : vector<16x128xf32>
    %335 = tpu.matmul %332, %334, %cst_132 {dimension_numbers = #tpu.dot_dimension_numbers<[1], [0], [0], [1], [0, 0, 1, 1], [], []>} : vector<16x128xf32>, vector<128x128xf32>, vector<16x128xf32> -> vector<16x128xf32>
    %c1_133 = arith.constant 1 : index
    %c0_134 = arith.constant 0 : index
    %c0_135 = arith.constant 0 : index
    %336 = vector.load %arg11[%c1_133, %c0_134, %c0_135] : memref<2x1x128xf32, #tpu.memory_space<vmem>>, vector<1x1x128xf32>
    %337 = vector.shape_cast %336 : vector<1x1x128xf32> to vector<1x128xf32>
    %338 = vector.broadcast %337 : vector<1x128xf32> to vector<16x128xf32>
    %339 = arith.addf %335, %338 : vector<16x128xf32>
    %cst_136 = arith.constant 5.000000e-01 : f32
    %340 = vector.broadcast %cst_136 : f32 to vector<16x128xf32>
    %341 = arith.mulf %340, %339 : vector<16x128xf32>
    %cst_137 = arith.constant 4.471500e-02 : f32
    %342 = vector.broadcast %cst_137 : f32 to vector<16x128xf32>
    %343 = arith.mulf %342, %339 : vector<16x128xf32>
    %344 = arith.mulf %343, %339 : vector<16x128xf32>
    %345 = arith.mulf %344, %339 : vector<16x128xf32>
    %346 = arith.addf %339, %345 : vector<16x128xf32>
    %cst_138 = arith.constant 0.797884583 : f32
    %347 = vector.broadcast %cst_138 : f32 to vector<16x128xf32>
    %348 = arith.mulf %347, %346 : vector<16x128xf32>
    %349 = math.tanh %348 : vector<16x128xf32>
    %cst_139 = arith.constant 1.000000e+00 : f32
    %350 = vector.broadcast %cst_139 : f32 to vector<16x128xf32>
    %351 = arith.addf %350, %349 : vector<16x128xf32>
    %352 = arith.mulf %341, %351 : vector<16x128xf32>
    %c1_140 = arith.constant 1 : index
    %c0_141 = arith.constant 0 : index
    %c0_142 = arith.constant 0 : index
    %353 = vector.load %arg12[%c1_140, %c0_141, %c0_142] : memref<2x128x128xf32, #tpu.memory_space<vmem>>, vector<1x128x128xf32>
    %354 = vector.shape_cast %353 : vector<1x128x128xf32> to vector<128x128xf32>
    %cst_143 = arith.constant dense<0.000000e+00> : vector<16x128xf32>
    %355 = tpu.matmul %352, %354, %cst_143 {dimension_numbers = #tpu.dot_dimension_numbers<[1], [0], [0], [1], [0, 0, 1, 1], [], []>} : vector<16x128xf32>, vector<128x128xf32>, vector<16x128xf32> -> vector<16x128xf32>
    %c1_144 = arith.constant 1 : index
    %c0_145 = arith.constant 0 : index
    %c0_146 = arith.constant 0 : index
    %356 = vector.load %arg13[%c1_144, %c0_145, %c0_146] : memref<2x1x128xf32, #tpu.memory_space<vmem>>, vector<1x1x128xf32>
    %357 = vector.shape_cast %356 : vector<1x1x128xf32> to vector<1x128xf32>
    %358 = vector.broadcast %357 : vector<1x128xf32> to vector<16x128xf32>
    %359 = arith.addf %355, %358 : vector<16x128xf32>
    %360 = arith.addf %332, %359 : vector<16x128xf32>
    %c1_147 = arith.constant 1 : index
    %c0_148 = arith.constant 0 : index
    %c0_149 = arith.constant 0 : index
    %361 = vector.load %arg14[%c1_147, %c0_148, %c0_149] : memref<2x1x128xf32, #tpu.memory_space<vmem>>, vector<1x1x128xf32>
    %362 = vector.shape_cast %361 : vector<1x1x128xf32> to vector<1x128xf32>
    %c1_150 = arith.constant 1 : index
    %c0_151 = arith.constant 0 : index
    %c0_152 = arith.constant 0 : index
    %363 = vector.load %arg15[%c1_150, %c0_151, %c0_152] : memref<2x1x128xf32, #tpu.memory_space<vmem>>, vector<1x1x128xf32>
    %364 = vector.shape_cast %363 : vector<1x1x128xf32> to vector<1x128xf32>
    %365 = vector.broadcast %4 : vector<1x128xf32> to vector<16x128xf32>
    %366 = arith.mulf %360, %365 : vector<16x128xf32>
    %cst_153 = arith.constant dense<0.000000e+00> : vector<16xf32>
    %367 = vector.multi_reduction <add>, %366, %cst_153 [1] : vector<16x128xf32> to vector<16xf32>
    %368 = vector.shape_cast %367 : vector<16xf32> to vector<16x1xf32>
    %cst_154 = arith.constant 3.125000e-02 : f32
    %369 = vector.broadcast %cst_154 : f32 to vector<16x1xf32>
    %370 = arith.mulf %368, %369 : vector<16x1xf32>
    %371 = vector.broadcast %370 : vector<16x1xf32> to vector<16x128xf32>
    %372 = arith.subf %366, %371 : vector<16x128xf32>
    %373 = vector.broadcast %4 : vector<1x128xf32> to vector<16x128xf32>
    %374 = arith.mulf %372, %373 : vector<16x128xf32>
    %375 = arith.mulf %374, %374 : vector<16x128xf32>
    %cst_155 = arith.constant dense<0.000000e+00> : vector<16xf32>
    %376 = vector.multi_reduction <add>, %375, %cst_155 [1] : vector<16x128xf32> to vector<16xf32>
    %377 = vector.shape_cast %376 : vector<16xf32> to vector<16x1xf32>
    %cst_156 = arith.constant 3.125000e-02 : f32
    %378 = vector.broadcast %cst_156 : f32 to vector<16x1xf32>
    %379 = arith.mulf %377, %378 : vector<16x1xf32>
    %cst_157 = arith.constant 9.99999996E-13 : f32
    %380 = vector.broadcast %cst_157 : f32 to vector<16x1xf32>
    %381 = arith.addf %379, %380 : vector<16x1xf32>
    %382 = math.rsqrt %381 : vector<16x1xf32>
    %383 = vector.broadcast %382 : vector<16x1xf32> to vector<16x128xf32>
    %384 = arith.mulf %374, %383 : vector<16x128xf32>
    %385 = vector.broadcast %362 : vector<1x128xf32> to vector<16x128xf32>
    %386 = arith.mulf %384, %385 : vector<16x128xf32>
    %387 = vector.broadcast %364 : vector<1x128xf32> to vector<16x128xf32>
    %388 = arith.addf %386, %387 : vector<16x128xf32>
    %c0_158 = arith.constant 0 : index
    %c0_159 = arith.constant 0 : index
    %389 = vector.load %arg18[%c0_158, %c0_159] : memref<16x128xf32, #tpu.memory_space<vmem>>, vector<16x128xf32>
    tpu.vector_store %arg18[%c0_158, %c0_159], %388 {strides = array<i32>} : memref<16x128xf32, #tpu.memory_space<vmem>>, vector<16x128xf32>,
    %c0_160 = arith.constant 0 : index
    %c0_161 = arith.constant 0 : index
    %390 = vector.load %arg16[%c0_160, %c0_161] : memref<128x128xf32, #tpu.memory_space<vmem>>, vector<128x128xf32>
    %cst_162 = arith.constant dense<0.000000e+00> : vector<16x128xf32>
    %391 = tpu.matmul %388, %390, %cst_162 {dimension_numbers = #tpu.dot_dimension_numbers<[1], [0], [0], [1], [0, 0, 1, 1], [], []>} : vector<16x128xf32>, vector<128x128xf32>, vector<16x128xf32> -> vector<16x128xf32>
    %c0_163 = arith.constant 0 : index
    %c0_164 = arith.constant 0 : index
    %392 = vector.load %arg17[%c0_163, %c0_164] : memref<1x128xf32, #tpu.memory_space<vmem>>, vector<1x128xf32>
    %393 = vector.broadcast %392 : vector<1x128xf32> to vector<16x128xf32>
    %394 = arith.addf %391, %393 : vector<16x128xf32>
    %395 = math.tanh %394 : vector<16x128xf32>
    %c0_165 = arith.constant 0 : index
    %c0_166 = arith.constant 0 : index
    %396 = vector.load %arg19[%c0_165, %c0_166] : memref<16x128xf32, #tpu.memory_space<vmem>>, vector<16x128xf32>
    tpu.vector_store %arg19[%c0_165, %c0_166], %395 {strides = array<i32>} : memref<16x128xf32, #tpu.memory_space<vmem>>, vector<16x128xf32>,
    return
  }
}

</mosaic_0001>

<llo_original>
// kernel: transformer_based_encoder_forward.1
$region0: #{transformer_based_encoder_forward.1}
  #allocation0 [shape = 'u32[]', space=smem, size = 0x4, offset = 0x4, fixed_abs, tag = 'smem constant byte address 0x4 - core index']
  #allocation1 [shape = 'u32[144,128]{1,0:T(1,128)}', space=vmem, size = 0x12000, scoped, tag = 'internal scratch']
  %s0 = inlined_call_operand.vmem [shape: f32[16,128], index: 0, kind: input, shape index: {}]
  %s1 = inlined_call_operand.vmem [shape: f32[16,16], index: 1, kind: input, shape index: {}]
  %s2 = inlined_call_operand.vmem [shape: f32[1,128], index: 2, kind: input, shape index: {}]
  %s3 = inlined_call_operand.vmem [shape: f32[1,128], index: 3, kind: input, shape index: {}]
  %s4 = inlined_call_operand.vmem [shape: f32[2,128,384], index: 4, kind: input, shape index: {}]
  %s5 = inlined_call_operand.vmem [shape: f32[2,1,384], index: 5, kind: input, shape index: {}]
  %s6 = inlined_call_operand.vmem [shape: f32[2,128,128], index: 6, kind: input, shape index: {}]
  %s7 = inlined_call_operand.vmem [shape: f32[2,1,128], index: 7, kind: input, shape index: {}]
  %s8 = inlined_call_operand.vmem [shape: f32[2,1,128], index: 8, kind: input, shape index: {}]
  %s9 = inlined_call_operand.vmem [shape: f32[2,1,128], index: 9, kind: input, shape index: {}]
  %s10 = inlined_call_operand.vmem [shape: f32[2,128,128], index: 10, kind: input, shape index: {}]
  %s11 = inlined_call_operand.vmem [shape: f32[2,1,128], index: 11, kind: input, shape index: {}]
  %s12 = inlined_call_operand.vmem [shape: f32[2,128,128], index: 12, kind: input, shape index: {}]
  %s13 = inlined_call_operand.vmem [shape: f32[2,1,128], index: 13, kind: input, shape index: {}]
  %s14 = inlined_call_operand.vmem [shape: f32[2,1,128], index: 14, kind: input, shape index: {}]
  %s15 = inlined_call_operand.vmem [shape: f32[2,1,128], index: 15, kind: input, shape index: {}]
  %s16 = inlined_call_operand.vmem [shape: f32[128,128], index: 16, kind: input, shape index: {}]
  %s17 = inlined_call_operand.vmem [shape: f32[1,128], index: 17, kind: input, shape index: {}]
  %s18 = inlined_call_operand.vmem [shape: f32[16,128], index: 18, kind: output, shape index: {0}]
  %s19 = inlined_call_operand.vmem [shape: f32[16,128], index: 19, kind: output, shape index: {1}]
  %20 = xla_tuple %s18, %s19
  %s21 = sld [smem:[#allocation0]]
  $region90: #{transformer_based_encoder_forward.1} parent=0
    _
  %s23 = ssub.s32 1, %s21
  %s24 = scalar_select 0, %s23, %s21
  // Predicated region
  $region2: #{transformer_based_encoder_forward.1} parent=0 // pred_check
    _
  $region3: #{transformer_based_encoder_forward.1} parent=0 // pred_check_branch
    %26 = sbr.rel (0) target = $region5
  $region4: #{transformer_based_encoder_forward.1} parent=0 // pred_region
    _
  $region5: #{transformer_based_encoder_forward.1} parent=0 // pred_fallthru
    _
  // Predicated region
  $region6: #{transformer_based_encoder_forward.1} parent=0 // pred_check
    _
  $region7: #{transformer_based_encoder_forward.1} parent=0 // pred_check_branch
    %28 = sbr.rel (0) target = $region9
  $region8: #{transformer_based_encoder_forward.1} parent=0 // pred_region
    _
  $region9: #{transformer_based_encoder_forward.1} parent=0 // pred_fallthru
    _
  // Predicated region
  $region10: #{transformer_based_encoder_forward.1} parent=0 // pred_check
    _
  $region11: #{transformer_based_encoder_forward.1} parent=0 // pred_check_branch
    %30 = sbr.rel (0) target = $region13
  $region12: #{transformer_based_encoder_forward.1} parent=0 // pred_region
    _
  $region13: #{transformer_based_encoder_forward.1} parent=0 // pred_fallthru
    _
  // Predicated region
  $region14: #{transformer_based_encoder_forward.1} parent=0 // pred_check
    _
  $region15: #{transformer_based_encoder_forward.1} parent=0 // pred_check_branch
    %32 = sbr.rel (0) target = $region17
  $region16: #{transformer_based_encoder_forward.1} parent=0 // pred_region
    _
  $region17: #{transformer_based_encoder_forward.1} parent=0 // pred_fallthru
    _
  // Predicated region
  $region18: #{transformer_based_encoder_forward.1} parent=0 // pred_check
    _
  $region19: #{transformer_based_encoder_forward.1} parent=0 // pred_check_branch
    %34 = sbr.rel (0) target = $region21
  $region20: #{transformer_based_encoder_forward.1} parent=0 // pred_region
    _
  $region21: #{transformer_based_encoder_forward.1} parent=0 // pred_fallthru
    _
  // Predicated region
  $region22: #{transformer_based_encoder_forward.1} parent=0 // pred_check
    _
  $region23: #{transformer_based_encoder_forward.1} parent=0 // pred_check_branch
    %36 = sbr.rel (0) target = $region25
  $region24: #{transformer_based_encoder_forward.1} parent=0 // pred_region
    _
  $region25: #{transformer_based_encoder_forward.1} parent=0 // pred_fallthru
    _
  // Predicated region
  $region26: #{transformer_based_encoder_forward.1} parent=0 // pred_check
    _
  $region27: #{transformer_based_encoder_forward.1} parent=0 // pred_check_branch
    %38 = sbr.rel (0) target = $region29
  $region28: #{transformer_based_encoder_forward.1} parent=0 // pred_region
    _
  $region29: #{transformer_based_encoder_forward.1} parent=0 // pred_fallthru
    _
  // Predicated region
  $region30: #{transformer_based_encoder_forward.1} parent=0 // pred_check
    _
  $region31: #{transformer_based_encoder_forward.1} parent=0 // pred_check_branch
    %40 = sbr.rel (0) target = $region33
  $region32: #{transformer_based_encoder_forward.1} parent=0 // pred_region
    _
  $region33: #{transformer_based_encoder_forward.1} parent=0 // pred_fallthru
    _
  // Predicated region
  $region34: #{transformer_based_encoder_forward.1} parent=0 // pred_check
    _
  $region35: #{transformer_based_encoder_forward.1} parent=0 // pred_check_branch
    %42 = sbr.rel (0) target = $region37
  $region36: #{transformer_based_encoder_forward.1} parent=0 // pred_region
    _
  $region37: #{transformer_based_encoder_forward.1} parent=0 // pred_fallthru
    _
  // Predicated region
  $region38: #{transformer_based_encoder_forward.1} parent=0 // pred_check
    _
  $region39: #{transformer_based_encoder_forward.1} parent=0 // pred_check_branch
    %44 = sbr.rel (0) target = $region41
  $region40: #{transformer_based_encoder_forward.1} parent=0 // pred_region
    _
  $region41: #{transformer_based_encoder_forward.1} parent=0 // pred_fallthru
    _
  // Predicated region
  $region42: #{transformer_based_encoder_forward.1} parent=0 // pred_check
    _
  $region43: #{transformer_based_encoder_forward.1} parent=0 // pred_check_branch
    %46 = sbr.rel (0) target = $region45
  $region44: #{transformer_based_encoder_forward.1} parent=0 // pred_region
    _
  $region45: #{transformer_based_encoder_forward.1} parent=0 // pred_fallthru
    _
  // Predicated region
  $region46: #{transformer_based_encoder_forward.1} parent=0 // pred_check
    _
  $region47: #{transformer_based_encoder_forward.1} parent=0 // pred_check_branch
    %48 = sbr.rel (0) target = $region49
  $region48: #{transformer_based_encoder_forward.1} parent=0 // pred_region
    _
  $region49: #{transformer_based_encoder_forward.1} parent=0 // pred_fallthru
    _
  // Predicated region
  $region50: #{transformer_based_encoder_forward.1} parent=0 // pred_check
    _
  $region51: #{transformer_based_encoder_forward.1} parent=0 // pred_check_branch
    %50 = sbr.rel (0) target = $region53
  $region52: #{transformer_based_encoder_forward.1} parent=0 // pred_region
    _
  $region53: #{transformer_based_encoder_forward.1} parent=0 // pred_fallthru
    _
  // Predicated region
  $region54: #{transformer_based_encoder_forward.1} parent=0 // pred_check
    _
  $region55: #{transformer_based_encoder_forward.1} parent=0 // pred_check_branch
    %52 = sbr.rel (0) target = $region57
  $region56: #{transformer_based_encoder_forward.1} parent=0 // pred_region
    _
  $region57: #{transformer_based_encoder_forward.1} parent=0 // pred_fallthru
    _
  // Predicated region
  $region58: #{transformer_based_encoder_forward.1} parent=0 // pred_check
    _
  $region59: #{transformer_based_encoder_forward.1} parent=0 // pred_check_branch
    %54 = sbr.rel (0) target = $region61
  $region60: #{transformer_based_encoder_forward.1} parent=0 // pred_region
    _
  $region61: #{transformer_based_encoder_forward.1} parent=0 // pred_fallthru
    _
  // Predicated region
  $region62: #{transformer_based_encoder_forward.1} parent=0 // pred_check
    _
  $region63: #{transformer_based_encoder_forward.1} parent=0 // pred_check_branch
    %56 = sbr.rel (0) target = $region65
  $region64: #{transformer_based_encoder_forward.1} parent=0 // pred_region
    _
  $region65: #{transformer_based_encoder_forward.1} parent=0 // pred_fallthru
    _
  // Predicated region
  $region66: #{transformer_based_encoder_forward.1} parent=0 // pred_check
    _
  $region67: #{transformer_based_encoder_forward.1} parent=0 // pred_check_branch
    %58 = sbr.rel (0) target = $region69
  $region68: #{transformer_based_encoder_forward.1} parent=0 // pred_region
    _
  $region69: #{transformer_based_encoder_forward.1} parent=0 // pred_fallthru
    _
  // Predicated region
  $region70: #{transformer_based_encoder_forward.1} parent=0 // pred_check
    _
  $region71: #{transformer_based_encoder_forward.1} parent=0 // pred_check_branch
    %60 = sbr.rel (0) target = $region73
  $region72: #{transformer_based_encoder_forward.1} parent=0 // pred_region
    _
  $region73: #{transformer_based_encoder_forward.1} parent=0 // pred_fallthru
    _
  %v61 = vlaneseq
  %v62 = vand.u32 %v61, 127
  %vm63 = vcmp.lt.s32.totalorder %v62, 32
  %v64 = vsel %vm63, 1, 0
  %v65 = vcvt.s32.f32 %v64
  %v66 = vld [vmem:[%s1] sm:$0xff]
  %v67 = vld [vmem:[%s1 + $0x8] sm:$0xff]
  %v68 = vld [vmem:[%s0] sm:$0xff]
  %v69 = vld [vmem:[%s0 + $0x8] sm:$0xff]
  %v70 = vld [vmem:[%s2] sm:$0x1]
  %v71 = vld [vmem:[%s3] sm:$0x1]
  %v72 = vmul.f32 %v68, %v65
  %v73 = vmul.f32 %v69, %v65
  %74 = vadd.xlane.f32.xlu0 %v72
  %v75 = vpop.xlane.xlu0 %74
  %76 = vadd.xlane.f32.xlu0 %v73
  %v77 = vpop.xlane.xlu0 %76
  %v78 = vmul.f32 %v75, 0.03125
  %v79 = vmul.f32 %v77, 0.03125
  %v80 = vsub.f32 %v72, %v78
  %v81 = vsub.f32 %v73, %v79
  %v82 = vmul.f32 %v80, %v65
  %v83 = vmul.f32 %v81, %v65
  %v84 = vmul.f32 %v82, %v82
  %v85 = vmul.f32 %v83, %v83
  %86 = vadd.xlane.f32.xlu0 %v84
  %v87 = vpop.xlane.xlu0 %86
  %88 = vadd.xlane.f32.xlu0 %v85
  %v89 = vpop.xlane.xlu0 %88
  %v90 = vmul.f32 %v87, 0.03125
  %v91 = vmul.f32 %v89, 0.03125
  %v92 = vadd.f32 %v90, 1e-12
  %v93 = vadd.f32 %v91, 1e-12
  %v94 = vrsqrt.pop %v92
  %v95 = vrsqrt.pop %v93
  %v96 = vmul.f32 %v82, %v94
  %v97 = vmul.f32 %v83, %v95
  %v99 = vlaneseq
  %v100 = vshrl.u32 %v99, 7
  %v101 = vsub.s32 0, %v100
  %v102 = vrot.slane %v70, %v101
  %v104 = vmul.f32 %v96, %v102
  %v105 = vmul.f32 %v97, %v102
  %v107 = vlaneseq
  %v108 = vshrl.u32 %v107, 7
  %v109 = vsub.s32 0, %v108
  %v110 = vrot.slane %v71, %v109
  %v112 = vadd.f32 %v104, %v110
  %v113 = vadd.f32 %v105, %v110
  %v114 = vld [vmem:[%s4] sm:$0xff]
  %v115 = vld [vmem:[%s4 + $0x8] sm:$0xff]
  %v116 = vld [vmem:[%s4 + $0x10] sm:$0xff]
  %v117 = vld [vmem:[%s4 + $0x18] sm:$0xff]
  %v118 = vld [vmem:[%s4 + $0x20] sm:$0xff]
  %v119 = vld [vmem:[%s4 + $0x28] sm:$0xff]
  %v120 = vld [vmem:[%s4 + $0x30] sm:$0xff]
  %v121 = vld [vmem:[%s4 + $0x38] sm:$0xff]
  %v122 = vld [vmem:[%s4 + $0x40] sm:$0xff]
  %v123 = vld [vmem:[%s4 + $0x48] sm:$0xff]
  %v124 = vld [vmem:[%s4 + $0x50] sm:$0xff]
  %v125 = vld [vmem:[%s4 + $0x58] sm:$0xff]
  %v126 = vld [vmem:[%s4 + $0x60] sm:$0xff]
  %v127 = vld [vmem:[%s4 + $0x68] sm:$0xff]
  %v128 = vld [vmem:[%s4 + $0x70] sm:$0xff]
  %v129 = vld [vmem:[%s4 + $0x78] sm:$0xff]
  %v130 = vld [vmem:[%s4 + $0x80] sm:$0xff]
  %v131 = vld [vmem:[%s4 + $0x88] sm:$0xff]
  %v132 = vld [vmem:[%s4 + $0x90] sm:$0xff]
  %v133 = vld [vmem:[%s4 + $0x98] sm:$0xff]
  %v134 = vld [vmem:[%s4 + $0xa0] sm:$0xff]
  %v135 = vld [vmem:[%s4 + $0xa8] sm:$0xff]
  %v136 = vld [vmem:[%s4 + $0xb0] sm:$0xff]
  %v137 = vld [vmem:[%s4 + $0xb8] sm:$0xff]
  %v138 = vld [vmem:[%s4 + $0xc0] sm:$0xff]
  %v139 = vld [vmem:[%s4 + $0xc8] sm:$0xff]
  %v140 = vld [vmem:[%s4 + $0xd0] sm:$0xff]
  %v141 = vld [vmem:[%s4 + $0xd8] sm:$0xff]
  %v142 = vld [vmem:[%s4 + $0xe0] sm:$0xff]
  %v143 = vld [vmem:[%s4 + $0xe8] sm:$0xff]
  %v144 = vld [vmem:[%s4 + $0xf0] sm:$0xff]
  %v145 = vld [vmem:[%s4 + $0xf8] sm:$0xff]
  %v146 = vld [vmem:[%s4 + $0x100] sm:$0xff]
  %v147 = vld [vmem:[%s4 + $0x108] sm:$0xff]
  %v148 = vld [vmem:[%s4 + $0x110] sm:$0xff]
  %v149 = vld [vmem:[%s4 + $0x118] sm:$0xff]
  %v150 = vld [vmem:[%s4 + $0x120] sm:$0xff]
  %v151 = vld [vmem:[%s4 + $0x128] sm:$0xff]
  %v152 = vld [vmem:[%s4 + $0x130] sm:$0xff]
  %v153 = vld [vmem:[%s4 + $0x138] sm:$0xff]
  %v154 = vld [vmem:[%s4 + $0x140] sm:$0xff]
  %v155 = vld [vmem:[%s4 + $0x148] sm:$0xff]
  %v156 = vld [vmem:[%s4 + $0x150] sm:$0xff]
  %v157 = vld [vmem:[%s4 + $0x158] sm:$0xff]
  %v158 = vld [vmem:[%s4 + $0x160] sm:$0xff]
  %v159 = vld [vmem:[%s4 + $0x168] sm:$0xff]
  %v160 = vld [vmem:[%s4 + $0x170] sm:$0xff]
  %v161 = vld [vmem:[%s4 + $0x178] sm:$0xff]
  %v162 = vld [vmem:[%s6] sm:$0xff]
  %v163 = vld [vmem:[%s6 + $0x8] sm:$0xff]
  %v164 = vld [vmem:[%s6 + $0x10] sm:$0xff]
  %v165 = vld [vmem:[%s6 + $0x18] sm:$0xff]
  %v166 = vld [vmem:[%s5] sm:$0x7]
  %v168 = vlaneseq
  %v169 = vshrl.u32 %v168, 7
  %v170 = vsub.s32 0, %v169
  %v171 = vrot.slane %v166, %v170
  %v172 = vlaneseq
  %v173 = vshrl.u32 %v172, 7
  %v174 = vsub.s32 1, %v173
  %v175 = vrot.slane %v166, %v174
  %v176 = vlaneseq
  %v177 = vshrl.u32 %v176, 7
  %v178 = vsub.s32 2, %v177
  %v179 = vrot.slane %v166, %v178
  %183 = vmatprep.subr.mxu0 %v115
  %184 = vmatpush1.msra.mxu0 %v114
  %185 = vmatprep.subr.mxu0 %v118
  %186 = vmatpush1.msra.mxu0 %v117
  %187 = vmatprep.subr.mxu0 %v121
  %188 = vmatpush1.msra.mxu0 %v120
  %189 = vmatprep.subr.mxu0 %v124
  %190 = vmatpush1.msra.mxu0 %v123
  %191 = vmatprep.subr.mxu0 %v127
  %192 = vmatpush1.msra.mxu0 %v126
  %193 = vmatprep.subr.mxu0 %v130
  %194 = vmatpush1.msra.mxu0 %v129
  %195 = vmatprep.subr.mxu0 %v133
  %196 = vmatpush1.msra.mxu0 %v132
  %197 = vmatprep.subr.mxu0 %v136
  %198 = vmatpush1.msra.mxu0 %v135
  %199 = vmatprep.subr.mxu0 %v139
  %200 = vmatpush1.msra.mxu0 %v138
  %201 = vmatprep.subr.mxu0 %v142
  %202 = vmatpush1.msra.mxu0 %v141
  %203 = vmatprep.subr.mxu0 %v145
  %204 = vmatpush1.msra.mxu0 %v144
  %205 = vmatprep.subr.mxu0 %v148
  %206 = vmatpush1.msra.mxu0 %v147
  %207 = vmatprep.subr.mxu0 %v151
  %208 = vmatpush1.msra.mxu0 %v150
  %209 = vmatprep.subr.mxu0 %v154
  %210 = vmatpush1.msra.mxu0 %v153
  %211 = vmatprep.subr.mxu0 %v157
  %212 = vmatpush1.msra.mxu0 %v156
  %213 = vmatprep.subr.mxu0 %v160
  %214 = vmatpush1.msra.mxu0 %v159
  %215 = vmatprep.subr.mxu0 0.0
  %216 = vmatpush1.msra.mxu0 0.0
  %217 = vmatprep.subr.mxu0 0.0
  %218 = vmatpush1.msra.mxu0 0.0
  %219 = vmatprep.subr.mxu0 0.0
  %220 = vmatpush1.msra.mxu0 0.0
  %221 = vmatprep.subr.mxu0 0.0
  %222 = vmatpush1.msra.mxu0 0.0
  %223 = vmatprep.subr.mxu0 0.0
  %224 = vmatpush1.msra.mxu0 0.0
  %225 = vmatprep.subr.mxu0 0.0
  %226 = vmatpush1.msra.mxu0 0.0
  %227 = vmatprep.subr.mxu0 0.0
  %228 = vmatpush1.msra.mxu0 0.0
  %229 = vmatprep.subr.mxu0 0.0
  %230 = vmatpush1.msra.mxu0 0.0
  %231 = vmatprep.subr.mxu0 0.0
  %232 = vmatpush1.msra.mxu0 0.0
  %233 = vmatprep.subr.mxu0 0.0
  %234 = vmatpush1.msra.mxu0 0.0
  %235 = vmatprep.subr.mxu0 0.0
  %236 = vmatpush1.msra.mxu0 0.0
  %237 = vmatprep.subr.mxu0 0.0
  %238 = vmatpush1.msra.mxu0 0.0
  %239 = vmatprep.subr.mxu0 0.0
  %240 = vmatpush1.msra.mxu0 0.0
  %241 = vmatprep.subr.mxu0 0.0
  %242 = vmatpush1.msra.mxu0 0.0
  %243 = vmatprep.subr.mxu0 0.0
  %244 = vmatpush1.msra.mxu0 0.0
  %245 = vmatprep.subr.mxu0 0.0
  %246 = vmatpush1.msra.mxu0 0.0
  %247 = vmatprep.mubr.f32.mxu0 0.0
  %248 = vmatmul.mubr.f32.gmra.mrb[0].mxu0 %v112
  %v249 = vpop.f32.mrb[0].mxu0
  %v250 = vadd.f32 %v171, %v249
  %v251 = vpop.f32.mrb[0].mxu0
  %v252 = vadd.f32 %v175, %v251
  %253 = vmatprep.mubr.f32.mxu0 0.0
  %254 = vmatmul.mubr.f32.gmra.mrb[0].mxu0 %v113
  %v255 = vpop.f32.mrb[0].mxu0
  %v256 = vadd.f32 %v171, %v255
  %v257 = vpop.f32.mrb[0].mxu0
  %v258 = vadd.f32 %v175, %v257
  %259 = vdwg.mxu0
  %260 = vmatprep.subr.mxu0 0.0
  %261 = vmatpush1.msra.mxu0 %v116
  %262 = vmatprep.subr.mxu0 0.0
  %263 = vmatpush1.msra.mxu0 %v119
  %264 = vmatprep.subr.mxu0 0.0
  %265 = vmatpush1.msra.mxu0 %v122
  %266 = vmatprep.subr.mxu0 0.0
  %267 = vmatpush1.msra.mxu0 %v125
  %268 = vmatprep.subr.mxu0 0.0
  %269 = vmatpush1.msra.mxu0 %v128
  %270 = vmatprep.subr.mxu0 0.0
  %271 = vmatpush1.msra.mxu0 %v131
  %272 = vmatprep.subr.mxu0 0.0
  %273 = vmatpush1.msra.mxu0 %v134
  %274 = vmatprep.subr.mxu0 0.0
  %275 = vmatpush1.msra.mxu0 %v137
  %276 = vmatprep.subr.mxu0 0.0
  %277 = vmatpush1.msra.mxu0 %v140
  %278 = vmatprep.subr.mxu0 0.0
  %279 = vmatpush1.msra.mxu0 %v143
  %280 = vmatprep.subr.mxu0 0.0
  %281 = vmatpush1.msra.mxu0 %v146
  %282 = vmatprep.subr.mxu0 0.0
  %283 = vmatpush1.msra.mxu0 %v149
  %284 = vmatprep.subr.mxu0 0.0
  %285 = vmatpush1.msra.mxu0 %v152
  %286 = vmatprep.subr.mxu0 0.0
  %287 = vmatpush1.msra.mxu0 %v155
  %288 = vmatprep.subr.mxu0 0.0
  %289 = vmatpush1.msra.mxu0 %v158
  %290 = vmatprep.subr.mxu0 0.0
  %291 = vmatpush1.msra.mxu0 %v161
  %292 = vmatprep.subr.mxu0 0.0
  %293 = vmatpush1.msra.mxu0 0.0
  %294 = vmatprep.subr.mxu0 0.0
  %295 = vmatpush1.msra.mxu0 0.0
  %296 = vmatprep.subr.mxu0 0.0
  %297 = vmatpush1.msra.mxu0 0.0
  %298 = vmatprep.subr.mxu0 0.0
  %299 = vmatpush1.msra.mxu0 0.0
  %300 = vmatprep.subr.mxu0 0.0
  %301 = vmatpush1.msra.mxu0 0.0
  %302 = vmatprep.subr.mxu0 0.0
  %303 = vmatpush1.msra.mxu0 0.0
  %304 = vmatprep.subr.mxu0 0.0
  %305 = vmatpush1.msra.mxu0 0.0
  %306 = vmatprep.subr.mxu0 0.0
  %307 = vmatpush1.msra.mxu0 0.0
  %308 = vmatprep.subr.mxu0 0.0
  %309 = vmatpush1.msra.mxu0 0.0
  %310 = vmatprep.subr.mxu0 0.0
  %311 = vmatpush1.msra.mxu0 0.0
  %312 = vmatprep.subr.mxu0 0.0
  %313 = vmatpush1.msra.mxu0 0.0
  %314 = vmatprep.subr.mxu0 0.0
  %315 = vmatpush1.msra.mxu0 0.0
  %316 = vmatprep.subr.mxu0 0.0
  %317 = vmatpush1.msra.mxu0 0.0
  %318 = vmatprep.subr.mxu0 0.0
  %319 = vmatpush1.msra.mxu0 0.0
  %320 = vmatprep.subr.mxu0 0.0
  %321 = vmatpush1.msra.mxu0 0.0
  %322 = vmatprep.subr.mxu0 0.0
  %323 = vmatpush1.msra.mxu0 0.0
  %324 = vmatprep.mubr.f32.mxu0 0.0
  %325 = vmatmul.mubr.f32.gmra.mrb[0].mxu0 %v112
  %v326 = vpop.f32.mrb[0].mxu0
  %v327 = vadd.f32 %v179, %v326
  %v328 = vpop.f32.mrb[0].mxu0
  %329 = vmatprep.mubr.f32.mxu0 0.0
  %330 = vmatmul.mubr.f32.gmra.mrb[0].mxu0 %v113
  %v331 = vpop.f32.mrb[0].mxu0
  %v332 = vadd.f32 %v179, %v331
  %v333 = vpop.f32.mrb[0].mxu0
  %334 = vdwg.mxu0
  %v335 = vmul.f32 %v250, 0.35355338
  %v336 = vmul.f32 %v256, 0.35355338
  %v337 = vld [vmem:[%s7] sm:$0x1]
  %vm338 = vcmask 64512
  %v340 = vsel %vm338, %v335, 0
  %v343 = vsel %vm338, %v336, 0
  %v346 = vsel %vm338, %v252, 0
  %v349 = vsel %vm338, %v258, 0
  %351 = vmatprep.subr.mxu0 0.0
  %352 = vmatpush1.xpose.msra.mxu0 %v346
  %353 = vmatprep.subr.mxu0 0.0
  %354 = vmatpush1.xpose.msra.mxu0 %v349
  %355 = vmatprep.subr.mxu0 0.0
  %356 = vmatpush1.xpose.msra.mxu0 0.0
  %357 = vmatprep.subr.mxu0 0.0
  %358 = vmatpush1.xpose.msra.mxu0 0.0
  %359 = vmatprep.subr.mxu0 0.0
  %360 = vmatpush1.xpose.msra.mxu0 0.0
  %361 = vmatprep.subr.mxu0 0.0
  %362 = vmatpush1.xpose.msra.mxu0 0.0
  %363 = vmatprep.subr.mxu0 0.0
  %364 = vmatpush1.xpose.msra.mxu0 0.0
  %365 = vmatprep.subr.mxu0 0.0
  %366 = vmatpush1.xpose.msra.mxu0 0.0
  %367 = vmatprep.subr.mxu0 0.0
  %368 = vmatpush1.xpose.msra.mxu0 0.0
  %369 = vmatprep.subr.mxu0 0.0
  %370 = vmatpush1.xpose.msra.mxu0 0.0
  %371 = vmatprep.subr.mxu0 0.0
  %372 = vmatpush1.xpose.msra.mxu0 0.0
  %373 = vmatprep.subr.mxu0 0.0
  %374 = vmatpush1.xpose.msra.mxu0 0.0
  %375 = vmatprep.subr.mxu0 0.0
  %376 = vmatpush1.xpose.msra.mxu0 0.0
  %377 = vmatprep.subr.mxu0 0.0
  %378 = vmatpush1.xpose.msra.mxu0 0.0
  %379 = vmatprep.subr.mxu0 0.0
  %380 = vmatpush1.xpose.msra.mxu0 0.0
  %381 = vmatprep.subr.mxu0 0.0
  %382 = vmatpush1.xpose.msra.mxu0 0.0
  %383 = vmatprep.subr.mxu0 0.0
  %384 = vmatpush1.xpose.msra.mxu0 0.0
  %385 = vmatprep.subr.mxu0 0.0
  %386 = vmatpush1.xpose.msra.mxu0 0.0
  %387 = vmatprep.subr.mxu0 0.0
  %388 = vmatpush1.xpose.msra.mxu0 0.0
  %389 = vmatprep.subr.mxu0 0.0
  %390 = vmatpush1.xpose.msra.mxu0 0.0
  %391 = vmatprep.subr.mxu0 0.0
  %392 = vmatpush1.xpose.msra.mxu0 0.0
  %393 = vmatprep.subr.mxu0 0.0
  %394 = vmatpush1.xpose.msra.mxu0 0.0
  %395 = vmatprep.subr.mxu0 0.0
  %396 = vmatpush1.xpose.msra.mxu0 0.0
  %397 = vmatprep.subr.mxu0 0.0
  %398 = vmatpush1.xpose.msra.mxu0 0.0
  %399 = vmatprep.subr.mxu0 0.0
  %400 = vmatpush1.xpose.msra.mxu0 0.0
  %401 = vmatprep.subr.mxu0 0.0
  %402 = vmatpush1.xpose.msra.mxu0 0.0
  %403 = vmatprep.subr.mxu0 0.0
  %404 = vmatpush1.xpose.msra.mxu0 0.0
  %405 = vmatprep.subr.mxu0 0.0
  %406 = vmatpush1.xpose.msra.mxu0 0.0
  %407 = vmatprep.subr.mxu0 0.0
  %408 = vmatpush1.xpose.msra.mxu0 0.0
  %409 = vmatprep.subr.mxu0 0.0
  %410 = vmatpush1.xpose.msra.mxu0 0.0
  %411 = vmatprep.subr.mxu0 0.0
  %412 = vmatpush1.xpose.msra.mxu0 0.0
  %413 = vmatprep.subr.mxu0 0.0
  %414 = vmatpush1.xpose.msra.mxu0 0.0
  %415 = vmatprep.mubr.f32.mxu0 0.0
  %416 = vmatmul.mubr.f32.gmra.mrb[0].mxu0 %v340
  %v417 = vpop.f32.mrb[0].mxu0
  %v418 = vadd.f32 %v66, %v417
  %v419 = vpop.f32.mrb[0].mxu0
  %420 = vmatprep.mubr.f32.mxu0 0.0
  %421 = vmatmul.mubr.f32.gmra.mrb[0].mxu0 %v343
  %v422 = vpop.f32.mrb[0].mxu0
  %v423 = vadd.f32 %v67, %v422
  %v424 = vpop.f32.mrb[0].mxu0
  %425 = vdwg.mxu0
  %vm426 = vcmask 130048
  %v427 = vsel %vm426, %v418, -inf
  %428 = vmax.xlane.f32.xlu0 %v427
  %v429 = vpop.xlane.xlu0 %428
  %v430 = vsel %vm426, %v423, -inf
  %431 = vmax.xlane.f32.xlu0 %v430
  %v432 = vpop.xlane.xlu0 %431
  %v433 = vsub.f32 %v418, %v429
  %v434 = vsub.f32 %v423, %v432
  %v435 = vmul.f32 %v433, 1.442695
  %v436 = vpow.pop %v435
  %v437 = vmul.f32 %v434, 1.442695
  %v438 = vpow.pop %v437
  %v439 = vsel %vm426, %v436, 0.0
  %440 = vadd.xlane.f32.xlu0 %v439
  %v441 = vpop.xlane.xlu0 %440
  %v442 = vsel %vm426, %v438, 0.0
  %443 = vadd.xlane.f32.xlu0 %v442
  %v444 = vpop.xlane.xlu0 %443
  %v445 = vrcp.pop %v441
  %v446 = vrcp.pop %v444
  %v447 = vmul.f32 %v436, %v445
  %v448 = vmul.f32 %v438, %v446
  %v450 = vsel %vm426, %v447, 0
  %v453 = vsel %vm426, %v448, 0
  %455 = vmatprep.subr.mxu0 0.0
  %456 = vmatpush1.msra.mxu0 %v327
  %457 = vmatprep.subr.mxu0 0.0
  %458 = vmatpush1.msra.mxu0 %v332
  %459 = vmatprep.subr.mxu0 0.0
  %460 = vmatpush1.msra.mxu0 0.0
  %461 = vmatprep.subr.mxu0 0.0
  %462 = vmatpush1.msra.mxu0 0.0
  %463 = vmatprep.subr.mxu0 0.0
  %464 = vmatpush1.msra.mxu0 0.0
  %465 = vmatprep.subr.mxu0 0.0
  %466 = vmatpush1.msra.mxu0 0.0
  %467 = vmatprep.subr.mxu0 0.0
  %468 = vmatpush1.msra.mxu0 0.0
  %469 = vmatprep.subr.mxu0 0.0
  %470 = vmatpush1.msra.mxu0 0.0
  %471 = vmatprep.subr.mxu0 0.0
  %472 = vmatpush1.msra.mxu0 0.0
  %473 = vmatprep.subr.mxu0 0.0
  %474 = vmatpush1.msra.mxu0 0.0
  %475 = vmatprep.subr.mxu0 0.0
  %476 = vmatpush1.msra.mxu0 0.0
  %477 = vmatprep.subr.mxu0 0.0
  %478 = vmatpush1.msra.mxu0 0.0
  %479 = vmatprep.subr.mxu0 0.0
  %480 = vmatpush1.msra.mxu0 0.0
  %481 = vmatprep.subr.mxu0 0.0
  %482 = vmatpush1.msra.mxu0 0.0
  %483 = vmatprep.subr.mxu0 0.0
  %484 = vmatpush1.msra.mxu0 0.0
  %485 = vmatprep.subr.mxu0 0.0
  %486 = vmatpush1.msra.mxu0 0.0
  %487 = vmatprep.subr.mxu0 0.0
  %488 = vmatpush1.msra.mxu0 0.0
  %489 = vmatprep.subr.mxu0 0.0
  %490 = vmatpush1.msra.mxu0 0.0
  %491 = vmatprep.subr.mxu0 0.0
  %492 = vmatpush1.msra.mxu0 0.0
  %493 = vmatprep.subr.mxu0 0.0
  %494 = vmatpush1.msra.mxu0 0.0
  %495 = vmatprep.subr.mxu0 0.0
  %496 = vmatpush1.msra.mxu0 0.0
  %497 = vmatprep.subr.mxu0 0.0
  %498 = vmatpush1.msra.mxu0 0.0
  %499 = vmatprep.subr.mxu0 0.0
  %500 = vmatpush1.msra.mxu0 0.0
  %501 = vmatprep.subr.mxu0 0.0
  %502 = vmatpush1.msra.mxu0 0.0
  %503 = vmatprep.subr.mxu0 0.0
  %504 = vmatpush1.msra.mxu0 0.0
  %505 = vmatprep.subr.mxu0 0.0
  %506 = vmatpush1.msra.mxu0 0.0
  %507 = vmatprep.subr.mxu0 0.0
  %508 = vmatpush1.msra.mxu0 0.0
  %509 = vmatprep.subr.mxu0 0.0
  %510 = vmatpush1.msra.mxu0 0.0
  %511 = vmatprep.subr.mxu0 0.0
  %512 = vmatpush1.msra.mxu0 0.0
  %513 = vmatprep.subr.mxu0 0.0
  %514 = vmatpush1.msra.mxu0 0.0
  %515 = vmatprep.subr.mxu0 0.0
  %516 = vmatpush1.msra.mxu0 0.0
  %517 = vmatprep.subr.mxu0 0.0
  %518 = vmatpush1.msra.mxu0 0.0
  %519 = vmatprep.mubr.f32.mxu0 0.0
  %520 = vmatmul.mubr.f32.gmra.mrb[0].mxu0 %v450
  %v521 = vpop.f32.mrb[0].mxu0
  %v522 = vadd.f32 0.0, %v521
  %v523 = vpop.f32.mrb[0].mxu0
  %524 = vmatprep.mubr.f32.mxu0 0.0
  %525 = vmatmul.mubr.f32.gmra.mrb[0].mxu0 %v453
  %v526 = vpop.f32.mrb[0].mxu0
  %v527 = vadd.f32 0.0, %v526
  %v528 = vpop.f32.mrb[0].mxu0
  %529 = vdwg.mxu0
  %v531 = vsel %vm338, %v522, 0
  %v534 = vsel %vm338, %v527, 0
  %536 = vmatprep.subr.mxu0 0.0
  %537 = vmatpush1.msra.mxu0 %v162
  %538 = vmatprep.subr.mxu0 0.0
  %539 = vmatpush1.msra.mxu0 0.0
  %540 = vmatprep.subr.mxu0 0.0
  %541 = vmatpush1.msra.mxu0 0.0
  %542 = vmatprep.subr.mxu0 0.0
  %543 = vmatpush1.msra.mxu0 0.0
  %544 = vmatprep.subr.mxu0 0.0
  %545 = vmatpush1.msra.mxu0 0.0
  %546 = vmatprep.subr.mxu0 0.0
  %547 = vmatpush1.msra.mxu0 0.0
  %548 = vmatprep.subr.mxu0 0.0
  %549 = vmatpush1.msra.mxu0 0.0
  %550 = vmatprep.subr.mxu0 0.0
  %551 = vmatpush1.msra.mxu0 0.0
  %552 = vmatprep.subr.mxu0 0.0
  %553 = vmatpush1.msra.mxu0 0.0
  %554 = vmatprep.subr.mxu0 0.0
  %555 = vmatpush1.msra.mxu0 0.0
  %556 = vmatprep.subr.mxu0 0.0
  %557 = vmatpush1.msra.mxu0 0.0
  %558 = vmatprep.subr.mxu0 0.0
  %559 = vmatpush1.msra.mxu0 0.0
  %560 = vmatprep.subr.mxu0 0.0
  %561 = vmatpush1.msra.mxu0 0.0
  %562 = vmatprep.subr.mxu0 0.0
  %563 = vmatpush1.msra.mxu0 0.0
  %564 = vmatprep.subr.mxu0 0.0
  %565 = vmatpush1.msra.mxu0 0.0
  %566 = vmatprep.subr.mxu0 0.0
  %567 = vmatpush1.msra.mxu0 0.0
  %568 = vmatprep.subr.mxu0 0.0
  %569 = vmatpush1.msra.mxu0 0.0
  %570 = vmatprep.subr.mxu0 0.0
  %571 = vmatpush1.msra.mxu0 0.0
  %572 = vmatprep.subr.mxu0 0.0
  %573 = vmatpush1.msra.mxu0 0.0
  %574 = vmatprep.subr.mxu0 0.0
  %575 = vmatpush1.msra.mxu0 0.0
  %576 = vmatprep.subr.mxu0 0.0
  %577 = vmatpush1.msra.mxu0 0.0
  %578 = vmatprep.subr.mxu0 0.0
  %579 = vmatpush1.msra.mxu0 0.0
  %580 = vmatprep.subr.mxu0 0.0
  %581 = vmatpush1.msra.mxu0 0.0
  %582 = vmatprep.subr.mxu0 0.0
  %583 = vmatpush1.msra.mxu0 0.0
  %584 = vmatprep.subr.mxu0 0.0
  %585 = vmatpush1.msra.mxu0 0.0
  %586 = vmatprep.subr.mxu0 0.0
  %587 = vmatpush1.msra.mxu0 0.0
  %588 = vmatprep.subr.mxu0 0.0
  %589 = vmatpush1.msra.mxu0 0.0
  %590 = vmatprep.subr.mxu0 0.0
  %591 = vmatpush1.msra.mxu0 0.0
  %592 = vmatprep.subr.mxu0 0.0
  %593 = vmatpush1.msra.mxu0 0.0
  %594 = vmatprep.subr.mxu0 0.0
  %595 = vmatpush1.msra.mxu0 0.0
  %596 = vmatprep.subr.mxu0 0.0
  %597 = vmatpush1.msra.mxu0 0.0
  %598 = vmatprep.subr.mxu0 0.0
  %599 = vmatpush1.msra.mxu0 0.0
  %600 = vmatprep.mubr.f32.mxu0 0.0
  %601 = vmatmul.mubr.f32.gmra.mrb[0].mxu0 %v531
  %v602 = vpop.f32.mrb[0].mxu0
  %v603 = vadd.f32 0.0, %v602
  %v604 = vpop.f32.mrb[0].mxu0
  %605 = vmatprep.mubr.f32.mxu0 0.0
  %606 = vmatmul.mubr.f32.gmra.mrb[0].mxu0 %v534
  %v607 = vpop.f32.mrb[0].mxu0
  %v608 = vadd.f32 0.0, %v607
  %v609 = vpop.f32.mrb[0].mxu0
  %610 = vdwg.mxu0
  %v612 = vlaneseq
  %v613 = vshrl.u32 %v612, 7
  %v614 = vsub.s32 0, %v613
  %v615 = vrot.slane %v337, %v614
  %v617 = vadd.f32 %v615, %v603
  %v618 = vadd.f32 %v615, %v608
  %619 = vrot.lane.b32.xlu0 %v335, 120
  %v620 = vpop.permute.xlu0 %619
  %621 = vrot.lane.b32.xlu0 %v336, 120
  %v622 = vpop.permute.xlu0 %621
  %623 = vrot.lane.b32.xlu0 %v252, 120
  %v624 = vpop.permute.xlu0 %623
  %625 = vrot.lane.b32.xlu0 %v258, 120
  %v626 = vpop.permute.xlu0 %625
  %v627 = vsel %vm338, %v620, 0
  %v629 = vsel %vm338, %v622, 0
  %v631 = vsel %vm338, %v624, 0
  %v633 = vsel %vm338, %v626, 0
  %635 = vmatprep.subr.mxu0 0.0
  %636 = vmatpush1.xpose.msra.mxu0 %v631
  %637 = vmatprep.subr.mxu0 0.0
  %638 = vmatpush1.xpose.msra.mxu0 %v633
  %639 = vmatprep.subr.mxu0 0.0
  %640 = vmatpush1.xpose.msra.mxu0 0.0
  %641 = vmatprep.subr.mxu0 0.0
  %642 = vmatpush1.xpose.msra.mxu0 0.0
  %643 = vmatprep.subr.mxu0 0.0
  %644 = vmatpush1.xpose.msra.mxu0 0.0
  %645 = vmatprep.subr.mxu0 0.0
  %646 = vmatpush1.xpose.msra.mxu0 0.0
  %647 = vmatprep.subr.mxu0 0.0
  %648 = vmatpush1.xpose.msra.mxu0 0.0
  %649 = vmatprep.subr.mxu0 0.0
  %650 = vmatpush1.xpose.msra.mxu0 0.0
  %651 = vmatprep.subr.mxu0 0.0
  %652 = vmatpush1.xpose.msra.mxu0 0.0
  %653 = vmatprep.subr.mxu0 0.0
  %654 = vmatpush1.xpose.msra.mxu0 0.0
  %655 = vmatprep.subr.mxu0 0.0
  %656 = vmatpush1.xpose.msra.mxu0 0.0
  %657 = vmatprep.subr.mxu0 0.0
  %658 = vmatpush1.xpose.msra.mxu0 0.0
  %659 = vmatprep.subr.mxu0 0.0
  %660 = vmatpush1.xpose.msra.mxu0 0.0
  %661 = vmatprep.subr.mxu0 0.0
  %662 = vmatpush1.xpose.msra.mxu0 0.0
  %663 = vmatprep.subr.mxu0 0.0
  %664 = vmatpush1.xpose.msra.mxu0 0.0
  %665 = vmatprep.subr.mxu0 0.0
  %666 = vmatpush1.xpose.msra.mxu0 0.0
  %667 = vmatprep.subr.mxu0 0.0
  %668 = vmatpush1.xpose.msra.mxu0 0.0
  %669 = vmatprep.subr.mxu0 0.0
  %670 = vmatpush1.xpose.msra.mxu0 0.0
  %671 = vmatprep.subr.mxu0 0.0
  %672 = vmatpush1.xpose.msra.mxu0 0.0
  %673 = vmatprep.subr.mxu0 0.0
  %674 = vmatpush1.xpose.msra.mxu0 0.0
  %675 = vmatprep.subr.mxu0 0.0
  %676 = vmatpush1.xpose.msra.mxu0 0.0
  %677 = vmatprep.subr.mxu0 0.0
  %678 = vmatpush1.xpose.msra.mxu0 0.0
  %679 = vmatprep.subr.mxu0 0.0
  %680 = vmatpush1.xpose.msra.mxu0 0.0
  %681 = vmatprep.subr.mxu0 0.0
  %682 = vmatpush1.xpose.msra.mxu0 0.0
  %683 = vmatprep.subr.mxu0 0.0
  %684 = vmatpush1.xpose.msra.mxu0 0.0
  %685 = vmatprep.subr.mxu0 0.0
  %686 = vmatpush1.xpose.msra.mxu0 0.0
  %687 = vmatprep.subr.mxu0 0.0
  %688 = vmatpush1.xpose.msra.mxu0 0.0
  %689 = vmatprep.subr.mxu0 0.0
  %690 = vmatpush1.xpose.msra.mxu0 0.0
  %691 = vmatprep.subr.mxu0 0.0
  %692 = vmatpush1.xpose.msra.mxu0 0.0
  %693 = vmatprep.subr.mxu0 0.0
  %694 = vmatpush1.xpose.msra.mxu0 0.0
  %695 = vmatprep.subr.mxu0 0.0
  %696 = vmatpush1.xpose.msra.mxu0 0.0
  %697 = vmatprep.subr.mxu0 0.0
  %698 = vmatpush1.xpose.msra.mxu0 0.0
  %699 = vmatprep.mubr.f32.mxu0 0.0
  %700 = vmatmul.mubr.f32.gmra.mrb[0].mxu0 %v627
  %v701 = vpop.f32.mrb[0].mxu0
  %v702 = vadd.f32 %v66, %v701
  %v703 = vpop.f32.mrb[0].mxu0
  %704 = vmatprep.mubr.f32.mxu0 0.0
  %705 = vmatmul.mubr.f32.gmra.mrb[0].mxu0 %v629
  %v706 = vpop.f32.mrb[0].mxu0
  %v707 = vadd.f32 %v67, %v706
  %v708 = vpop.f32.mrb[0].mxu0
  %709 = vdwg.mxu0
  %v710 = vsel %vm426, %v702, -inf
  %711 = vmax.xlane.f32.xlu0 %v710
  %v712 = vpop.xlane.xlu0 %711
  %v713 = vsel %vm426, %v707, -inf
  %714 = vmax.xlane.f32.xlu0 %v713
  %v715 = vpop.xlane.xlu0 %714
  %v716 = vsub.f32 %v702, %v712
  %v717 = vsub.f32 %v707, %v715
  %v718 = vmul.f32 %v716, 1.442695
  %v719 = vpow.pop %v718
  %v720 = vmul.f32 %v717, 1.442695
  %v721 = vpow.pop %v720
  %v722 = vsel %vm426, %v719, 0.0
  %723 = vadd.xlane.f32.xlu0 %v722
  %v724 = vpop.xlane.xlu0 %723
  %v725 = vsel %vm426, %v721, 0.0
  %726 = vadd.xlane.f32.xlu0 %v725
  %v727 = vpop.xlane.xlu0 %726
  %v728 = vrcp.pop %v724
  %v729 = vrcp.pop %v727
  %v730 = vmul.f32 %v719, %v728
  %v731 = vmul.f32 %v721, %v729
  %734 = vrot.lane.b32.xlu0 %v327, 120
  %v735 = vpop.permute.xlu0 %734
  %736 = vrot.lane.b32.xlu0 %v332, 120
  %v737 = vpop.permute.xlu0 %736
  %v741 = vsel %vm426, %v730, 0
  %v744 = vsel %vm426, %v731, 0
  %746 = vmatprep.subr.mxu0 0.0
  %747 = vmatpush1.msra.mxu0 %v735
  %748 = vmatprep.subr.mxu0 0.0
  %749 = vmatpush1.msra.mxu0 %v737
  %750 = vmatprep.subr.mxu0 0.0
  %751 = vmatpush1.msra.mxu0 0.0
  %752 = vmatprep.subr.mxu0 0.0
  %753 = vmatpush1.msra.mxu0 0.0
  %754 = vmatprep.subr.mxu0 0.0
  %755 = vmatpush1.msra.mxu0 0.0
  %756 = vmatprep.subr.mxu0 0.0
  %757 = vmatpush1.msra.mxu0 0.0
  %758 = vmatprep.subr.mxu0 0.0
  %759 = vmatpush1.msra.mxu0 0.0
  %760 = vmatprep.subr.mxu0 0.0
  %761 = vmatpush1.msra.mxu0 0.0
  %762 = vmatprep.subr.mxu0 0.0
  %763 = vmatpush1.msra.mxu0 0.0
  %764 = vmatprep.subr.mxu0 0.0
  %765 = vmatpush1.msra.mxu0 0.0
  %766 = vmatprep.subr.mxu0 0.0
  %767 = vmatpush1.msra.mxu0 0.0
  %768 = vmatprep.subr.mxu0 0.0
  %769 = vmatpush1.msra.mxu0 0.0
  %770 = vmatprep.subr.mxu0 0.0
  %771 = vmatpush1.msra.mxu0 0.0
  %772 = vmatprep.subr.mxu0 0.0
  %773 = vmatpush1.msra.mxu0 0.0
  %774 = vmatprep.subr.mxu0 0.0
  %775 = vmatpush1.msra.mxu0 0.0
  %776 = vmatprep.subr.mxu0 0.0
  %777 = vmatpush1.msra.mxu0 0.0
  %778 = vmatprep.subr.mxu0 0.0
  %779 = vmatpush1.msra.mxu0 0.0
  %780 = vmatprep.subr.mxu0 0.0
  %781 = vmatpush1.msra.mxu0 0.0
  %782 = vmatprep.subr.mxu0 0.0
  %783 = vmatpush1.msra.mxu0 0.0
  %784 = vmatprep.subr.mxu0 0.0
  %785 = vmatpush1.msra.mxu0 0.0
  %786 = vmatprep.subr.mxu0 0.0
  %787 = vmatpush1.msra.mxu0 0.0
  %788 = vmatprep.subr.mxu0 0.0
  %789 = vmatpush1.msra.mxu0 0.0
  %790 = vmatprep.subr.mxu0 0.0
  %791 = vmatpush1.msra.mxu0 0.0
  %792 = vmatprep.subr.mxu0 0.0
  %793 = vmatpush1.msra.mxu0 0.0
  %794 = vmatprep.subr.mxu0 0.0
  %795 = vmatpush1.msra.mxu0 0.0
  %796 = vmatprep.subr.mxu0 0.0
  %797 = vmatpush1.msra.mxu0 0.0
  %798 = vmatprep.subr.mxu0 0.0
  %799 = vmatpush1.msra.mxu0 0.0
  %800 = vmatprep.subr.mxu0 0.0
  %801 = vmatpush1.msra.mxu0 0.0
  %802 = vmatprep.subr.mxu0 0.0
  %803 = vmatpush1.msra.mxu0 0.0
  %804 = vmatprep.subr.mxu0 0.0
  %805 = vmatpush1.msra.mxu0 0.0
  %806 = vmatprep.subr.mxu0 0.0
  %807 = vmatpush1.msra.mxu0 0.0
  %808 = vmatprep.subr.mxu0 0.0
  %809 = vmatpush1.msra.mxu0 0.0
  %810 = vmatprep.mubr.f32.mxu0 0.0
  %811 = vmatmul.mubr.f32.gmra.mrb[0].mxu0 %v741
  %v812 = vpop.f32.mrb[0].mxu0
  %v813 = vadd.f32 0.0, %v812
  %v814 = vpop.f32.mrb[0].mxu0
  %815 = vmatprep.mubr.f32.mxu0 0.0
  %816 = vmatmul.mubr.f32.gmra.mrb[0].mxu0 %v744
  %v817 = vpop.f32.mrb[0].mxu0
  %v818 = vadd.f32 0.0, %v817
  %v819 = vpop.f32.mrb[0].mxu0
  %820 = vdwg.mxu0
  %v822 = vsel %vm338, %v813, 0
  %v825 = vsel %vm338, %v818, 0
  %827 = vmatprep.subr.mxu0 0.0
  %828 = vmatpush1.msra.mxu0 %v163
  %829 = vmatprep.subr.mxu0 0.0
  %830 = vmatpush1.msra.mxu0 0.0
  %831 = vmatprep.subr.mxu0 0.0
  %832 = vmatpush1.msra.mxu0 0.0
  %833 = vmatprep.subr.mxu0 0.0
  %834 = vmatpush1.msra.mxu0 0.0
  %835 = vmatprep.subr.mxu0 0.0
  %836 = vmatpush1.msra.mxu0 0.0
  %837 = vmatprep.subr.mxu0 0.0
  %838 = vmatpush1.msra.mxu0 0.0
  %839 = vmatprep.subr.mxu0 0.0
  %840 = vmatpush1.msra.mxu0 0.0
  %841 = vmatprep.subr.mxu0 0.0
  %842 = vmatpush1.msra.mxu0 0.0
  %843 = vmatprep.subr.mxu0 0.0
  %844 = vmatpush1.msra.mxu0 0.0
  %845 = vmatprep.subr.mxu0 0.0
  %846 = vmatpush1.msra.mxu0 0.0
  %847 = vmatprep.subr.mxu0 0.0
  %848 = vmatpush1.msra.mxu0 0.0
  %849 = vmatprep.subr.mxu0 0.0
  %850 = vmatpush1.msra.mxu0 0.0
  %851 = vmatprep.subr.mxu0 0.0
  %852 = vmatpush1.msra.mxu0 0.0
  %853 = vmatprep.subr.mxu0 0.0
  %854 = vmatpush1.msra.mxu0 0.0
  %855 = vmatprep.subr.mxu0 0.0
  %856 = vmatpush1.msra.mxu0 0.0
  %857 = vmatprep.subr.mxu0 0.0
  %858 = vmatpush1.msra.mxu0 0.0
  %859 = vmatprep.subr.mxu0 0.0
  %860 = vmatpush1.msra.mxu0 0.0
  %861 = vmatprep.subr.mxu0 0.0
  %862 = vmatpush1.msra.mxu0 0.0
  %863 = vmatprep.subr.mxu0 0.0
  %864 = vmatpush1.msra.mxu0 0.0
  %865 = vmatprep.subr.mxu0 0.0
  %866 = vmatpush1.msra.mxu0 0.0
  %867 = vmatprep.subr.mxu0 0.0
  %868 = vmatpush1.msra.mxu0 0.0
  %869 = vmatprep.subr.mxu0 0.0
  %870 = vmatpush1.msra.mxu0 0.0
  %871 = vmatprep.subr.mxu0 0.0
  %872 = vmatpush1.msra.mxu0 0.0
  %873 = vmatprep.subr.mxu0 0.0
  %874 = vmatpush1.msra.mxu0 0.0
  %875 = vmatprep.subr.mxu0 0.0
  %876 = vmatpush1.msra.mxu0 0.0
  %877 = vmatprep.subr.mxu0 0.0
  %878 = vmatpush1.msra.mxu0 0.0
  %879 = vmatprep.subr.mxu0 0.0
  %880 = vmatpush1.msra.mxu0 0.0
  %881 = vmatprep.subr.mxu0 0.0
  %882 = vmatpush1.msra.mxu0 0.0
  %883 = vmatprep.subr.mxu0 0.0
  %884 = vmatpush1.msra.mxu0 0.0
  %885 = vmatprep.subr.mxu0 0.0
  %886 = vmatpush1.msra.mxu0 0.0
  %887 = vmatprep.subr.mxu0 0.0
  %888 = vmatpush1.msra.mxu0 0.0
  %889 = vmatprep.subr.mxu0 0.0
  %890 = vmatpush1.msra.mxu0 0.0
  %891 = vmatprep.mubr.f32.mxu0 0.0
  %892 = vmatmul.mubr.f32.gmra.mrb[0].mxu0 %v822
  %v893 = vpop.f32.mrb[0].mxu0
  %v894 = vadd.f32 0.0, %v893
  %v895 = vpop.f32.mrb[0].mxu0
  %896 = vmatprep.mubr.f32.mxu0 0.0
  %897 = vmatmul.mubr.f32.gmra.mrb[0].mxu0 %v825
  %v898 = vpop.f32.mrb[0].mxu0
  %v899 = vadd.f32 0.0, %v898
  %v900 = vpop.f32.mrb[0].mxu0
  %901 = vdwg.mxu0
  %v902 = vadd.f32 %v617, %v894
  %v903 = vadd.f32 %v618, %v899
  %904 = vrot.lane.b32.xlu0 %v335, 112
  %v905 = vpop.permute.xlu0 %904
  %906 = vrot.lane.b32.xlu0 %v336, 112
  %v907 = vpop.permute.xlu0 %906
  %908 = vrot.lane.b32.xlu0 %v252, 112
  %v909 = vpop.permute.xlu0 %908
  %910 = vrot.lane.b32.xlu0 %v258, 112
  %v911 = vpop.permute.xlu0 %910
  %v912 = vsel %vm338, %v905, 0
  %v914 = vsel %vm338, %v907, 0
  %v916 = vsel %vm338, %v909, 0
  %v918 = vsel %vm338, %v911, 0
  %920 = vmatprep.subr.mxu0 0.0
  %921 = vmatpush1.xpose.msra.mxu0 %v916
  %922 = vmatprep.subr.mxu0 0.0
  %923 = vmatpush1.xpose.msra.mxu0 %v918
  %924 = vmatprep.subr.mxu0 0.0
  %925 = vmatpush1.xpose.msra.mxu0 0.0
  %926 = vmatprep.subr.mxu0 0.0
  %927 = vmatpush1.xpose.msra.mxu0 0.0
  %928 = vmatprep.subr.mxu0 0.0
  %929 = vmatpush1.xpose.msra.mxu0 0.0
  %930 = vmatprep.subr.mxu0 0.0
  %931 = vmatpush1.xpose.msra.mxu0 0.0
  %932 = vmatprep.subr.mxu0 0.0
  %933 = vmatpush1.xpose.msra.mxu0 0.0
  %934 = vmatprep.subr.mxu0 0.0
  %935 = vmatpush1.xpose.msra.mxu0 0.0
  %936 = vmatprep.subr.mxu0 0.0
  %937 = vmatpush1.xpose.msra.mxu0 0.0
  %938 = vmatprep.subr.mxu0 0.0
  %939 = vmatpush1.xpose.msra.mxu0 0.0
  %940 = vmatprep.subr.mxu0 0.0
  %941 = vmatpush1.xpose.msra.mxu0 0.0
  %942 = vmatprep.subr.mxu0 0.0
  %943 = vmatpush1.xpose.msra.mxu0 0.0
  %944 = vmatprep.subr.mxu0 0.0
  %945 = vmatpush1.xpose.msra.mxu0 0.0
  %946 = vmatprep.subr.mxu0 0.0
  %947 = vmatpush1.xpose.msra.mxu0 0.0
  %948 = vmatprep.subr.mxu0 0.0
  %949 = vmatpush1.xpose.msra.mxu0 0.0
  %950 = vmatprep.subr.mxu0 0.0
  %951 = vmatpush1.xpose.msra.mxu0 0.0
  %952 = vmatprep.subr.mxu0 0.0
  %953 = vmatpush1.xpose.msra.mxu0 0.0
  %954 = vmatprep.subr.mxu0 0.0
  %955 = vmatpush1.xpose.msra.mxu0 0.0
  %956 = vmatprep.subr.mxu0 0.0
  %957 = vmatpush1.xpose.msra.mxu0 0.0
  %958 = vmatprep.subr.mxu0 0.0
  %959 = vmatpush1.xpose.msra.mxu0 0.0
  %960 = vmatprep.subr.mxu0 0.0
  %961 = vmatpush1.xpose.msra.mxu0 0.0
  %962 = vmatprep.subr.mxu0 0.0
  %963 = vmatpush1.xpose.msra.mxu0 0.0
  %964 = vmatprep.subr.mxu0 0.0
  %965 = vmatpush1.xpose.msra.mxu0 0.0
  %966 = vmatprep.subr.mxu0 0.0
  %967 = vmatpush1.xpose.msra.mxu0 0.0
  %968 = vmatprep.subr.mxu0 0.0
  %969 = vmatpush1.xpose.msra.mxu0 0.0
  %970 = vmatprep.subr.mxu0 0.0
  %971 = vmatpush1.xpose.msra.mxu0 0.0
  %972 = vmatprep.subr.mxu0 0.0
  %973 = vmatpush1.xpose.msra.mxu0 0.0
  %974 = vmatprep.subr.mxu0 0.0
  %975 = vmatpush1.xpose.msra.mxu0 0.0
  %976 = vmatprep.subr.mxu0 0.0
  %977 = vmatpush1.xpose.msra.mxu0 0.0
  %978 = vmatprep.subr.mxu0 0.0
  %979 = vmatpush1.xpose.msra.mxu0 0.0
  %980 = vmatprep.subr.mxu0 0.0
  %981 = vmatpush1.xpose.msra.mxu0 0.0
  %982 = vmatprep.subr.mxu0 0.0
  %983 = vmatpush1.xpose.msra.mxu0 0.0
  %984 = vmatprep.mubr.f32.mxu0 0.0
  %985 = vmatmul.mubr.f32.gmra.mrb[0].mxu0 %v912
  %v986 = vpop.f32.mrb[0].mxu0
  %v987 = vadd.f32 %v66, %v986
  %v988 = vpop.f32.mrb[0].mxu0
  %989 = vmatprep.mubr.f32.mxu0 0.0
  %990 = vmatmul.mubr.f32.gmra.mrb[0].mxu0 %v914
  %v991 = vpop.f32.mrb[0].mxu0
  %v992 = vadd.f32 %v67, %v991
  %v993 = vpop.f32.mrb[0].mxu0
  %994 = vdwg.mxu0
  %v995 = vsel %vm426, %v987, -inf
  %996 = vmax.xlane.f32.xlu0 %v995
  %v997 = vpop.xlane.xlu0 %996
  %v998 = vsel %vm426, %v992, -inf
  %999 = vmax.xlane.f32.xlu0 %v998
  %v1000 = vpop.xlane.xlu0 %999
  %v1001 = vsub.f32 %v987, %v997
  %v1002 = vsub.f32 %v992, %v1000
  %v1003 = vmul.f32 %v1001, 1.442695
  %v1004 = vpow.pop %v1003
  %v1005 = vmul.f32 %v1002, 1.442695
  %v1006 = vpow.pop %v1005
  %v1007 = vsel %vm426, %v1004, 0.0
  %1008 = vadd.xlane.f32.xlu0 %v1007
  %v1009 = vpop.xlane.xlu0 %1008
  %v1010 = vsel %vm426, %v1006, 0.0
  %1011 = vadd.xlane.f32.xlu0 %v1010
  %v1012 = vpop.xlane.xlu0 %1011
  %v1013 = vrcp.pop %v1009
  %v1014 = vrcp.pop %v1012
  %v1015 = vmul.f32 %v1004, %v1013
  %v1016 = vmul.f32 %v1006, %v1014
  %1017 = vrot.lane.b32.xlu0 %v327, 112
  %v1018 = vpop.permute.xlu0 %1017
  %1019 = vrot.lane.b32.xlu0 %v332, 112
  %v1020 = vpop.permute.xlu0 %1019
  %v1024 = vsel %vm426, %v1015, 0
  %v1027 = vsel %vm426, %v1016, 0
  %1029 = vmatprep.subr.mxu0 0.0
  %1030 = vmatpush1.msra.mxu0 %v1018
  %1031 = vmatprep.subr.mxu0 0.0
  %1032 = vmatpush1.msra.mxu0 %v1020
  %1033 = vmatprep.subr.mxu0 0.0
  %1034 = vmatpush1.msra.mxu0 0.0
  %1035 = vmatprep.subr.mxu0 0.0
  %1036 = vmatpush1.msra.mxu0 0.0
  %1037 = vmatprep.subr.mxu0 0.0
  %1038 = vmatpush1.msra.mxu0 0.0
  %1039 = vmatprep.subr.mxu0 0.0
  %1040 = vmatpush1.msra.mxu0 0.0
  %1041 = vmatprep.subr.mxu0 0.0
  %1042 = vmatpush1.msra.mxu0 0.0
  %1043 = vmatprep.subr.mxu0 0.0
  %1044 = vmatpush1.msra.mxu0 0.0
  %1045 = vmatprep.subr.mxu0 0.0
  %1046 = vmatpush1.msra.mxu0 0.0
  %1047 = vmatprep.subr.mxu0 0.0
  %1048 = vmatpush1.msra.mxu0 0.0
  %1049 = vmatprep.subr.mxu0 0.0
  %1050 = vmatpush1.msra.mxu0 0.0
  %1051 = vmatprep.subr.mxu0 0.0
  %1052 = vmatpush1.msra.mxu0 0.0
  %1053 = vmatprep.subr.mxu0 0.0
  %1054 = vmatpush1.msra.mxu0 0.0
  %1055 = vmatprep.subr.mxu0 0.0
  %1056 = vmatpush1.msra.mxu0 0.0
  %1057 = vmatprep.subr.mxu0 0.0
  %1058 = vmatpush1.msra.mxu0 0.0
  %1059 = vmatprep.subr.mxu0 0.0
  %1060 = vmatpush1.msra.mxu0 0.0
  %1061 = vmatprep.subr.mxu0 0.0
  %1062 = vmatpush1.msra.mxu0 0.0
  %1063 = vmatprep.subr.mxu0 0.0
  %1064 = vmatpush1.msra.mxu0 0.0
  %1065 = vmatprep.subr.mxu0 0.0
  %1066 = vmatpush1.msra.mxu0 0.0
  %1067 = vmatprep.subr.mxu0 0.0
  %1068 = vmatpush1.msra.mxu0 0.0
  %1069 = vmatprep.subr.mxu0 0.0
  %1070 = vmatpush1.msra.mxu0 0.0
  %1071 = vmatprep.subr.mxu0 0.0
  %1072 = vmatpush1.msra.mxu0 0.0
  %1073 = vmatprep.subr.mxu0 0.0
  %1074 = vmatpush1.msra.mxu0 0.0
  %1075 = vmatprep.subr.mxu0 0.0
  %1076 = vmatpush1.msra.mxu0 0.0
  %1077 = vmatprep.subr.mxu0 0.0
  %1078 = vmatpush1.msra.mxu0 0.0
  %1079 = vmatprep.subr.mxu0 0.0
  %1080 = vmatpush1.msra.mxu0 0.0
  %1081 = vmatprep.subr.mxu0 0.0
  %1082 = vmatpush1.msra.mxu0 0.0
  %1083 = vmatprep.subr.mxu0 0.0
  %1084 = vmatpush1.msra.mxu0 0.0
  %1085 = vmatprep.subr.mxu0 0.0
  %1086 = vmatpush1.msra.mxu0 0.0
  %1087 = vmatprep.subr.mxu0 0.0
  %1088 = vmatpush1.msra.mxu0 0.0
  %1089 = vmatprep.subr.mxu0 0.0
  %1090 = vmatpush1.msra.mxu0 0.0
  %1091 = vmatprep.subr.mxu0 0.0
  %1092 = vmatpush1.msra.mxu0 0.0
  %1093 = vmatprep.mubr.f32.mxu0 0.0
  %1094 = vmatmul.mubr.f32.gmra.mrb[0].mxu0 %v1024
  %v1095 = vpop.f32.mrb[0].mxu0
  %v1096 = vadd.f32 0.0, %v1095
  %v1097 = vpop.f32.mrb[0].mxu0
  %1098 = vmatprep.mubr.f32.mxu0 0.0
  %1099 = vmatmul.mubr.f32.gmra.mrb[0].mxu0 %v1027
  %v1100 = vpop.f32.mrb[0].mxu0
  %v1101 = vadd.f32 0.0, %v1100
  %v1102 = vpop.f32.mrb[0].mxu0
  %1103 = vdwg.mxu0
  %v1105 = vsel %vm338, %v1096, 0
  %v1108 = vsel %vm338, %v1101, 0
  %1110 = vmatprep.subr.mxu0 0.0
  %1111 = vmatpush1.msra.mxu0 %v164
  %1112 = vmatprep.subr.mxu0 0.0
  %1113 = vmatpush1.msra.mxu0 0.0
  %1114 = vmatprep.subr.mxu0 0.0
  %1115 = vmatpush1.msra.mxu0 0.0
  %1116 = vmatprep.subr.mxu0 0.0
  %1117 = vmatpush1.msra.mxu0 0.0
  %1118 = vmatprep.subr.mxu0 0.0
  %1119 = vmatpush1.msra.mxu0 0.0
  %1120 = vmatprep.subr.mxu0 0.0
  %1121 = vmatpush1.msra.mxu0 0.0
  %1122 = vmatprep.subr.mxu0 0.0
  %1123 = vmatpush1.msra.mxu0 0.0
  %1124 = vmatprep.subr.mxu0 0.0
  %1125 = vmatpush1.msra.mxu0 0.0
  %1126 = vmatprep.subr.mxu0 0.0
  %1127 = vmatpush1.msra.mxu0 0.0
  %1128 = vmatprep.subr.mxu0 0.0
  %1129 = vmatpush1.msra.mxu0 0.0
  %1130 = vmatprep.subr.mxu0 0.0
  %1131 = vmatpush1.msra.mxu0 0.0
  %1132 = vmatprep.subr.mxu0 0.0
  %1133 = vmatpush1.msra.mxu0 0.0
  %1134 = vmatprep.subr.mxu0 0.0
  %1135 = vmatpush1.msra.mxu0 0.0
  %1136 = vmatprep.subr.mxu0 0.0
  %1137 = vmatpush1.msra.mxu0 0.0
  %1138 = vmatprep.subr.mxu0 0.0
  %1139 = vmatpush1.msra.mxu0 0.0
  %1140 = vmatprep.subr.mxu0 0.0
  %1141 = vmatpush1.msra.mxu0 0.0
  %1142 = vmatprep.subr.mxu0 0.0
  %1143 = vmatpush1.msra.mxu0 0.0
  %1144 = vmatprep.subr.mxu0 0.0
  %1145 = vmatpush1.msra.mxu0 0.0
  %1146 = vmatprep.subr.mxu0 0.0
  %1147 = vmatpush1.msra.mxu0 0.0
  %1148 = vmatprep.subr.mxu0 0.0
  %1149 = vmatpush1.msra.mxu0 0.0
  %1150 = vmatprep.subr.mxu0 0.0
  %1151 = vmatpush1.msra.mxu0 0.0
  %1152 = vmatprep.subr.mxu0 0.0
  %1153 = vmatpush1.msra.mxu0 0.0
  %1154 = vmatprep.subr.mxu0 0.0
  %1155 = vmatpush1.msra.mxu0 0.0
  %1156 = vmatprep.subr.mxu0 0.0
  %1157 = vmatpush1.msra.mxu0 0.0
  %1158 = vmatprep.subr.mxu0 0.0
  %1159 = vmatpush1.msra.mxu0 0.0
  %1160 = vmatprep.subr.mxu0 0.0
  %1161 = vmatpush1.msra.mxu0 0.0
  %1162 = vmatprep.subr.mxu0 0.0
  %1163 = vmatpush1.msra.mxu0 0.0
  %1164 = vmatprep.subr.mxu0 0.0
  %1165 = vmatpush1.msra.mxu0 0.0
  %1166 = vmatprep.subr.mxu0 0.0
  %1167 = vmatpush1.msra.mxu0 0.0
  %1168 = vmatprep.subr.mxu0 0.0
  %1169 = vmatpush1.msra.mxu0 0.0
  %1170 = vmatprep.subr.mxu0 0.0
  %1171 = vmatpush1.msra.mxu0 0.0
  %1172 = vmatprep.subr.mxu0 0.0
  %1173 = vmatpush1.msra.mxu0 0.0
  %1174 = vmatprep.mubr.f32.mxu0 0.0
  %1175 = vmatmul.mubr.f32.gmra.mrb[0].mxu0 %v1105
  %v1176 = vpop.f32.mrb[0].mxu0
  %v1177 = vadd.f32 0.0, %v1176
  %v1178 = vpop.f32.mrb[0].mxu0
  %1179 = vmatprep.mubr.f32.mxu0 0.0
  %1180 = vmatmul.mubr.f32.gmra.mrb[0].mxu0 %v1108
  %v1181 = vpop.f32.mrb[0].mxu0
  %v1182 = vadd.f32 0.0, %v1181
  %v1183 = vpop.f32.mrb[0].mxu0
  %1184 = vdwg.mxu0
  %v1185 = vadd.f32 %v902, %v1177
  %v1186 = vadd.f32 %v903, %v1182
  %1187 = vrot.lane.b32.xlu0 %v335, 104
  %v1188 = vpop.permute.xlu0 %1187
  %1189 = vrot.lane.b32.xlu0 %v336, 104
  %v1190 = vpop.permute.xlu0 %1189
  %1191 = vrot.lane.b32.xlu0 %v252, 104
  %v1192 = vpop.permute.xlu0 %1191
  %1193 = vrot.lane.b32.xlu0 %v258, 104
  %v1194 = vpop.permute.xlu0 %1193
  %v1195 = vsel %vm338, %v1188, 0
  %v1197 = vsel %vm338, %v1190, 0
  %v1199 = vsel %vm338, %v1192, 0
  %v1201 = vsel %vm338, %v1194, 0
  %1203 = vmatprep.subr.mxu0 0.0
  %1204 = vmatpush1.xpose.msra.mxu0 %v1199
  %1205 = vmatprep.subr.mxu0 0.0
  %1206 = vmatpush1.xpose.msra.mxu0 %v1201
  %1207 = vmatprep.subr.mxu0 0.0
  %1208 = vmatpush1.xpose.msra.mxu0 0.0
  %1209 = vmatprep.subr.mxu0 0.0
  %1210 = vmatpush1.xpose.msra.mxu0 0.0
  %1211 = vmatprep.subr.mxu0 0.0
  %1212 = vmatpush1.xpose.msra.mxu0 0.0
  %1213 = vmatprep.subr.mxu0 0.0
  %1214 = vmatpush1.xpose.msra.mxu0 0.0
  %1215 = vmatprep.subr.mxu0 0.0
  %1216 = vmatpush1.xpose.msra.mxu0 0.0
  %1217 = vmatprep.subr.mxu0 0.0
  %1218 = vmatpush1.xpose.msra.mxu0 0.0
  %1219 = vmatprep.subr.mxu0 0.0
  %1220 = vmatpush1.xpose.msra.mxu0 0.0
  %1221 = vmatprep.subr.mxu0 0.0
  %1222 = vmatpush1.xpose.msra.mxu0 0.0
  %1223 = vmatprep.subr.mxu0 0.0
  %1224 = vmatpush1.xpose.msra.mxu0 0.0
  %1225 = vmatprep.subr.mxu0 0.0
  %1226 = vmatpush1.xpose.msra.mxu0 0.0
  %1227 = vmatprep.subr.mxu0 0.0
  %1228 = vmatpush1.xpose.msra.mxu0 0.0
  %1229 = vmatprep.subr.mxu0 0.0
  %1230 = vmatpush1.xpose.msra.mxu0 0.0
  %1231 = vmatprep.subr.mxu0 0.0
  %1232 = vmatpush1.xpose.msra.mxu0 0.0
  %1233 = vmatprep.subr.mxu0 0.0
  %1234 = vmatpush1.xpose.msra.mxu0 0.0
  %1235 = vmatprep.subr.mxu0 0.0
  %1236 = vmatpush1.xpose.msra.mxu0 0.0
  %1237 = vmatprep.subr.mxu0 0.0
  %1238 = vmatpush1.xpose.msra.mxu0 0.0
  %1239 = vmatprep.subr.mxu0 0.0
  %1240 = vmatpush1.xpose.msra.mxu0 0.0
  %1241 = vmatprep.subr.mxu0 0.0
  %1242 = vmatpush1.xpose.msra.mxu0 0.0
  %1243 = vmatprep.subr.mxu0 0.0
  %1244 = vmatpush1.xpose.msra.mxu0 0.0
  %1245 = vmatprep.subr.mxu0 0.0
  %1246 = vmatpush1.xpose.msra.mxu0 0.0
  %1247 = vmatprep.subr.mxu0 0.0
  %1248 = vmatpush1.xpose.msra.mxu0 0.0
  %1249 = vmatprep.subr.mxu0 0.0
  %1250 = vmatpush1.xpose.msra.mxu0 0.0
  %1251 = vmatprep.subr.mxu0 0.0
  %1252 = vmatpush1.xpose.msra.mxu0 0.0
  %1253 = vmatprep.subr.mxu0 0.0
  %1254 = vmatpush1.xpose.msra.mxu0 0.0
  %1255 = vmatprep.subr.mxu0 0.0
  %1256 = vmatpush1.xpose.msra.mxu0 0.0
  %1257 = vmatprep.subr.mxu0 0.0
  %1258 = vmatpush1.xpose.msra.mxu0 0.0
  %1259 = vmatprep.subr.mxu0 0.0
  %1260 = vmatpush1.xpose.msra.mxu0 0.0
  %1261 = vmatprep.subr.mxu0 0.0
  %1262 = vmatpush1.xpose.msra.mxu0 0.0
  %1263 = vmatprep.subr.mxu0 0.0
  %1264 = vmatpush1.xpose.msra.mxu0 0.0
  %1265 = vmatprep.subr.mxu0 0.0
  %1266 = vmatpush1.xpose.msra.mxu0 0.0
  %1267 = vmatprep.mubr.f32.mxu0 0.0
  %1268 = vmatmul.mubr.f32.gmra.mrb[0].mxu0 %v1195
  %v1269 = vpop.f32.mrb[0].mxu0
  %v1270 = vadd.f32 %v66, %v1269
  %v1271 = vpop.f32.mrb[0].mxu0
  %1272 = vmatprep.mubr.f32.mxu0 0.0
  %1273 = vmatmul.mubr.f32.gmra.mrb[0].mxu0 %v1197
  %v1274 = vpop.f32.mrb[0].mxu0
  %v1275 = vadd.f32 %v67, %v1274
  %v1276 = vpop.f32.mrb[0].mxu0
  %1277 = vdwg.mxu0
  %v1278 = vsel %vm426, %v1270, -inf
  %1279 = vmax.xlane.f32.xlu0 %v1278
  %v1280 = vpop.xlane.xlu0 %1279
  %v1281 = vsel %vm426, %v1275, -inf
  %1282 = vmax.xlane.f32.xlu0 %v1281
  %v1283 = vpop.xlane.xlu0 %1282
  %v1284 = vsub.f32 %v1270, %v1280
  %v1285 = vsub.f32 %v1275, %v1283
  %v1286 = vmul.f32 %v1284, 1.442695
  %v1287 = vpow.pop %v1286
  %v1288 = vmul.f32 %v1285, 1.442695
  %v1289 = vpow.pop %v1288
  %v1290 = vsel %vm426, %v1287, 0.0
  %1291 = vadd.xlane.f32.xlu0 %v1290
  %v1292 = vpop.xlane.xlu0 %1291
  %v1293 = vsel %vm426, %v1289, 0.0
  %1294 = vadd.xlane.f32.xlu0 %v1293
  %v1295 = vpop.xlane.xlu0 %1294
  %v1296 = vrcp.pop %v1292
  %v1297 = vrcp.pop %v1295
  %v1298 = vmul.f32 %v1287, %v1296
  %v1299 = vmul.f32 %v1289, %v1297
  %1300 = vrot.lane.b32.xlu0 %v327, 104
  %v1301 = vpop.permute.xlu0 %1300
  %1302 = vrot.lane.b32.xlu0 %v332, 104
  %v1303 = vpop.permute.xlu0 %1302
  %v1307 = vsel %vm426, %v1298, 0
  %v1310 = vsel %vm426, %v1299, 0
  %1312 = vmatprep.subr.mxu0 0.0
  %1313 = vmatpush1.msra.mxu0 %v1301
  %1314 = vmatprep.subr.mxu0 0.0
  %1315 = vmatpush1.msra.mxu0 %v1303
  %1316 = vmatprep.subr.mxu0 0.0
  %1317 = vmatpush1.msra.mxu0 0.0
  %1318 = vmatprep.subr.mxu0 0.0
  %1319 = vmatpush1.msra.mxu0 0.0
  %1320 = vmatprep.subr.mxu0 0.0
  %1321 = vmatpush1.msra.mxu0 0.0
  %1322 = vmatprep.subr.mxu0 0.0
  %1323 = vmatpush1.msra.mxu0 0.0
  %1324 = vmatprep.subr.mxu0 0.0
  %1325 = vmatpush1.msra.mxu0 0.0
  %1326 = vmatprep.subr.mxu0 0.0
  %1327 = vmatpush1.msra.mxu0 0.0
  %1328 = vmatprep.subr.mxu0 0.0
  %1329 = vmatpush1.msra.mxu0 0.0
  %1330 = vmatprep.subr.mxu0 0.0
  %1331 = vmatpush1.msra.mxu0 0.0
  %1332 = vmatprep.subr.mxu0 0.0
  %1333 = vmatpush1.msra.mxu0 0.0
  %1334 = vmatprep.subr.mxu0 0.0
  %1335 = vmatpush1.msra.mxu0 0.0
  %1336 = vmatprep.subr.mxu0 0.0
  %1337 = vmatpush1.msra.mxu0 0.0
  %1338 = vmatprep.subr.mxu0 0.0
  %1339 = vmatpush1.msra.mxu0 0.0
  %1340 = vmatprep.subr.mxu0 0.0
  %1341 = vmatpush1.msra.mxu0 0.0
  %1342 = vmatprep.subr.mxu0 0.0
  %1343 = vmatpush1.msra.mxu0 0.0
  %1344 = vmatprep.subr.mxu0 0.0
  %1345 = vmatpush1.msra.mxu0 0.0
  %1346 = vmatprep.subr.mxu0 0.0
  %1347 = vmatpush1.msra.mxu0 0.0
  %1348 = vmatprep.subr.mxu0 0.0
  %1349 = vmatpush1.msra.mxu0 0.0
  %1350 = vmatprep.subr.mxu0 0.0
  %1351 = vmatpush1.msra.mxu0 0.0
  %1352 = vmatprep.subr.mxu0 0.0
  %1353 = vmatpush1.msra.mxu0 0.0
  %1354 = vmatprep.subr.mxu0 0.0
  %1355 = vmatpush1.msra.mxu0 0.0
  %1356 = vmatprep.subr.mxu0 0.0
  %1357 = vmatpush1.msra.mxu0 0.0
  %1358 = vmatprep.subr.mxu0 0.0
  %1359 = vmatpush1.msra.mxu0 0.0
  %1360 = vmatprep.subr.mxu0 0.0
  %1361 = vmatpush1.msra.mxu0 0.0
  %1362 = vmatprep.subr.mxu0 0.0
  %1363 = vmatpush1.msra.mxu0 0.0
  %1364 = vmatprep.subr.mxu0 0.0
  %1365 = vmatpush1.msra.mxu0 0.0
  %1366 = vmatprep.subr.mxu0 0.0
  %1367 = vmatpush1.msra.mxu0 0.0
  %1368 = vmatprep.subr.mxu0 0.0
  %1369 = vmatpush1.msra.mxu0 0.0
  %1370 = vmatprep.subr.mxu0 0.0
  %1371 = vmatpush1.msra.mxu0 0.0
  %1372 = vmatprep.subr.mxu0 0.0
  %1373 = vmatpush1.msra.mxu0 0.0
  %1374 = vmatprep.subr.mxu0 0.0
  %1375 = vmatpush1.msra.mxu0 0.0
  %1376 = vmatprep.mubr.f32.mxu0 0.0
  %1377 = vmatmul.mubr.f32.gmra.mrb[0].mxu0 %v1307
  %v1378 = vpop.f32.mrb[0].mxu0
  %v1379 = vadd.f32 0.0, %v1378
  %v1380 = vpop.f32.mrb[0].mxu0
  %1381 = vmatprep.mubr.f32.mxu0 0.0
  %1382 = vmatmul.mubr.f32.gmra.mrb[0].mxu0 %v1310
  %v1383 = vpop.f32.mrb[0].mxu0
  %v1384 = vadd.f32 0.0, %v1383
  %v1385 = vpop.f32.mrb[0].mxu0
  %1386 = vdwg.mxu0
  %v1388 = vsel %vm338, %v1379, 0
  %v1391 = vsel %vm338, %v1384, 0
  %1393 = vmatprep.subr.mxu0 0.0
  %1394 = vmatpush1.msra.mxu0 %v165
  %1395 = vmatprep.subr.mxu0 0.0
  %1396 = vmatpush1.msra.mxu0 0.0
  %1397 = vmatprep.subr.mxu0 0.0
  %1398 = vmatpush1.msra.mxu0 0.0
  %1399 = vmatprep.subr.mxu0 0.0
  %1400 = vmatpush1.msra.mxu0 0.0
  %1401 = vmatprep.subr.mxu0 0.0
  %1402 = vmatpush1.msra.mxu0 0.0
  %1403 = vmatprep.subr.mxu0 0.0
  %1404 = vmatpush1.msra.mxu0 0.0
  %1405 = vmatprep.subr.mxu0 0.0
  %1406 = vmatpush1.msra.mxu0 0.0
  %1407 = vmatprep.subr.mxu0 0.0
  %1408 = vmatpush1.msra.mxu0 0.0
  %1409 = vmatprep.subr.mxu0 0.0
  %1410 = vmatpush1.msra.mxu0 0.0
  %1411 = vmatprep.subr.mxu0 0.0
  %1412 = vmatpush1.msra.mxu0 0.0
  %1413 = vmatprep.subr.mxu0 0.0
  %1414 = vmatpush1.msra.mxu0 0.0
  %1415 = vmatprep.subr.mxu0 0.0
  %1416 = vmatpush1.msra.mxu0 0.0
  %1417 = vmatprep.subr.mxu0 0.0
  %1418 = vmatpush1.msra.mxu0 0.0
  %1419 = vmatprep.subr.mxu0 0.0
  %1420 = vmatpush1.msra.mxu0 0.0
  %1421 = vmatprep.subr.mxu0 0.0
  %1422 = vmatpush1.msra.mxu0 0.0
  %1423 = vmatprep.subr.mxu0 0.0
  %1424 = vmatpush1.msra.mxu0 0.0
  %1425 = vmatprep.subr.mxu0 0.0
  %1426 = vmatpush1.msra.mxu0 0.0
  %1427 = vmatprep.subr.mxu0 0.0
  %1428 = vmatpush1.msra.mxu0 0.0
  %1429 = vmatprep.subr.mxu0 0.0
  %1430 = vmatpush1.msra.mxu0 0.0
  %1431 = vmatprep.subr.mxu0 0.0
  %1432 = vmatpush1.msra.mxu0 0.0
  %1433 = vmatprep.subr.mxu0 0.0
  %1434 = vmatpush1.msra.mxu0 0.0
  %1435 = vmatprep.subr.mxu0 0.0
  %1436 = vmatpush1.msra.mxu0 0.0
  %1437 = vmatprep.subr.mxu0 0.0
  %1438 = vmatpush1.msra.mxu0 0.0
  %1439 = vmatprep.subr.mxu0 0.0
  %1440 = vmatpush1.msra.mxu0 0.0
  %1441 = vmatprep.subr.mxu0 0.0
  %1442 = vmatpush1.msra.mxu0 0.0
  %1443 = vmatprep.subr.mxu0 0.0
  %1444 = vmatpush1.msra.mxu0 0.0
  %1445 = vmatprep.subr.mxu0 0.0
  %1446 = vmatpush1.msra.mxu0 0.0
  %1447 = vmatprep.subr.mxu0 0.0
  %1448 = vmatpush1.msra.mxu0 0.0
  %1449 = vmatprep.subr.mxu0 0.0
  %1450 = vmatpush1.msra.mxu0 0.0
  %1451 = vmatprep.subr.mxu0 0.0
  %1452 = vmatpush1.msra.mxu0 0.0
  %1453 = vmatprep.subr.mxu0 0.0
  %1454 = vmatpush1.msra.mxu0 0.0
  %1455 = vmatprep.subr.mxu0 0.0
  %1456 = vmatpush1.msra.mxu0 0.0
  %1457 = vmatprep.mubr.f32.mxu0 0.0
  %1458 = vmatmul.mubr.f32.gmra.mrb[0].mxu0 %v1388
  %v1459 = vpop.f32.mrb[0].mxu0
  %v1460 = vadd.f32 0.0, %v1459
  %v1461 = vpop.f32.mrb[0].mxu0
  %1462 = vmatprep.mubr.f32.mxu0 0.0
  %1463 = vmatmul.mubr.f32.gmra.mrb[0].mxu0 %v1391
  %v1464 = vpop.f32.mrb[0].mxu0
  %v1465 = vadd.f32 0.0, %v1464
  %v1466 = vpop.f32.mrb[0].mxu0
  %1467 = vdwg.mxu0
  %v1468 = vadd.f32 %v1185, %v1460
  %v1469 = vadd.f32 %v1186, %v1465
  %v1470 = vadd.f32 %v112, %v1468
  %v1471 = vadd.f32 %v113, %v1469
  %v1472 = vld [vmem:[%s8] sm:$0x1]
  %v1473 = vld [vmem:[%s9] sm:$0x1]
  %v1474 = vmul.f32 %v1470, %v65
  %v1475 = vmul.f32 %v1471, %v65
  %1476 = vadd.xlane.f32.xlu0 %v1474
  %v1477 = vpop.xlane.xlu0 %1476
  %1478 = vadd.xlane.f32.xlu0 %v1475
  %v1479 = vpop.xlane.xlu0 %1478
  %v1480 = vmul.f32 %v1477, 0.03125
  %v1481 = vmul.f32 %v1479, 0.03125
  %v1482 = vsub.f32 %v1474, %v1480
  %v1483 = vsub.f32 %v1475, %v1481
  %v1484 = vmul.f32 %v1482, %v65
  %v1485 = vmul.f32 %v1483, %v65
  %v1486 = vmul.f32 %v1484, %v1484
  %v1487 = vmul.f32 %v1485, %v1485
  %1488 = vadd.xlane.f32.xlu0 %v1486
  %v1489 = vpop.xlane.xlu0 %1488
  %1490 = vadd.xlane.f32.xlu0 %v1487
  %v1491 = vpop.xlane.xlu0 %1490
  %v1492 = vmul.f32 %v1489, 0.03125
  %v1493 = vmul.f32 %v1491, 0.03125
  %v1494 = vadd.f32 %v1492, 1e-12
  %v1495 = vadd.f32 %v1493, 1e-12
  %v1496 = vrsqrt.pop %v1494
  %v1497 = vrsqrt.pop %v1495
  %v1498 = vmul.f32 %v1484, %v1496
  %v1499 = vmul.f32 %v1485, %v1497
  %v1501 = vlaneseq
  %v1502 = vshrl.u32 %v1501, 7
  %v1503 = vsub.s32 0, %v1502
  %v1504 = vrot.slane %v1472, %v1503
  %v1506 = vmul.f32 %v1498, %v1504
  %v1507 = vmul.f32 %v1499, %v1504
  %v1509 = vlaneseq
  %v1510 = vshrl.u32 %v1509, 7
  %v1511 = vsub.s32 0, %v1510
  %v1512 = vrot.slane %v1473, %v1511
  %v1514 = vadd.f32 %v1506, %v1512
  %v1515 = vadd.f32 %v1507, %v1512
  %v1516 = vld [vmem:[%s10] sm:$0xff]
  %v1517 = vld [vmem:[%s10 + $0x8] sm:$0xff]
  %v1518 = vld [vmem:[%s10 + $0x10] sm:$0xff]
  %v1519 = vld [vmem:[%s10 + $0x18] sm:$0xff]
  %v1520 = vld [vmem:[%s10 + $0x20] sm:$0xff]
  %v1521 = vld [vmem:[%s10 + $0x28] sm:$0xff]
  %v1522 = vld [vmem:[%s10 + $0x30] sm:$0xff]
  %v1523 = vld [vmem:[%s10 + $0x38] sm:$0xff]
  %v1524 = vld [vmem:[%s10 + $0x40] sm:$0xff]
  %v1525 = vld [vmem:[%s10 + $0x48] sm:$0xff]
  %v1526 = vld [vmem:[%s10 + $0x50] sm:$0xff]
  %v1527 = vld [vmem:[%s10 + $0x58] sm:$0xff]
  %v1528 = vld [vmem:[%s10 + $0x60] sm:$0xff]
  %v1529 = vld [vmem:[%s10 + $0x68] sm:$0xff]
  %v1530 = vld [vmem:[%s10 + $0x70] sm:$0xff]
  %v1531 = vld [vmem:[%s10 + $0x78] sm:$0xff]
  %v1532 = vld [vmem:[%s11] sm:$0x1]
  %v1534 = vlaneseq
  %v1535 = vshrl.u32 %v1534, 7
  %v1536 = vsub.s32 0, %v1535
  %v1537 = vrot.slane %v1532, %v1536
  %1539 = vmatprep.subr.mxu0 0.0
  %1540 = vmatpush1.msra.mxu0 %v1516
  %1541 = vmatprep.subr.mxu0 0.0
  %1542 = vmatpush1.msra.mxu0 %v1517
  %1543 = vmatprep.subr.mxu0 0.0
  %1544 = vmatpush1.msra.mxu0 %v1518
  %1545 = vmatprep.subr.mxu0 0.0
  %1546 = vmatpush1.msra.mxu0 %v1519
  %1547 = vmatprep.subr.mxu0 0.0
  %1548 = vmatpush1.msra.mxu0 %v1520
  %1549 = vmatprep.subr.mxu0 0.0
  %1550 = vmatpush1.msra.mxu0 %v1521
  %1551 = vmatprep.subr.mxu0 0.0
  %1552 = vmatpush1.msra.mxu0 %v1522
  %1553 = vmatprep.subr.mxu0 0.0
  %1554 = vmatpush1.msra.mxu0 %v1523
  %1555 = vmatprep.subr.mxu0 0.0
  %1556 = vmatpush1.msra.mxu0 %v1524
  %1557 = vmatprep.subr.mxu0 0.0
  %1558 = vmatpush1.msra.mxu0 %v1525
  %1559 = vmatprep.subr.mxu0 0.0
  %1560 = vmatpush1.msra.mxu0 %v1526
  %1561 = vmatprep.subr.mxu0 0.0
  %1562 = vmatpush1.msra.mxu0 %v1527
  %1563 = vmatprep.subr.mxu0 0.0
  %1564 = vmatpush1.msra.mxu0 %v1528
  %1565 = vmatprep.subr.mxu0 0.0
  %1566 = vmatpush1.msra.mxu0 %v1529
  %1567 = vmatprep.subr.mxu0 0.0
  %1568 = vmatpush1.msra.mxu0 %v1530
  %1569 = vmatprep.subr.mxu0 0.0
  %1570 = vmatpush1.msra.mxu0 %v1531
  %1571 = vmatprep.subr.mxu0 0.0
  %1572 = vmatpush1.msra.mxu0 0.0
  %1573 = vmatprep.subr.mxu0 0.0
  %1574 = vmatpush1.msra.mxu0 0.0
  %1575 = vmatprep.subr.mxu0 0.0
  %1576 = vmatpush1.msra.mxu0 0.0
  %1577 = vmatprep.subr.mxu0 0.0
  %1578 = vmatpush1.msra.mxu0 0.0
  %1579 = vmatprep.subr.mxu0 0.0
  %1580 = vmatpush1.msra.mxu0 0.0
  %1581 = vmatprep.subr.mxu0 0.0
  %1582 = vmatpush1.msra.mxu0 0.0
  %1583 = vmatprep.subr.mxu0 0.0
  %1584 = vmatpush1.msra.mxu0 0.0
  %1585 = vmatprep.subr.mxu0 0.0
  %1586 = vmatpush1.msra.mxu0 0.0
  %1587 = vmatprep.subr.mxu0 0.0
  %1588 = vmatpush1.msra.mxu0 0.0
  %1589 = vmatprep.subr.mxu0 0.0
  %1590 = vmatpush1.msra.mxu0 0.0
  %1591 = vmatprep.subr.mxu0 0.0
  %1592 = vmatpush1.msra.mxu0 0.0
  %1593 = vmatprep.subr.mxu0 0.0
  %1594 = vmatpush1.msra.mxu0 0.0
  %1595 = vmatprep.subr.mxu0 0.0
  %1596 = vmatpush1.msra.mxu0 0.0
  %1597 = vmatprep.subr.mxu0 0.0
  %1598 = vmatpush1.msra.mxu0 0.0
  %1599 = vmatprep.subr.mxu0 0.0
  %1600 = vmatpush1.msra.mxu0 0.0
  %1601 = vmatprep.subr.mxu0 0.0
  %1602 = vmatpush1.msra.mxu0 0.0
  %1603 = vmatprep.mubr.f32.mxu0 0.0
  %1604 = vmatmul.mubr.f32.gmra.mrb[0].mxu0 %v1514
  %v1605 = vpop.f32.mrb[0].mxu0
  %v1606 = vadd.f32 %v1537, %v1605
  %v1607 = vpop.f32.mrb[0].mxu0
  %1608 = vmatprep.mubr.f32.mxu0 0.0
  %1609 = vmatmul.mubr.f32.gmra.mrb[0].mxu0 %v1515
  %v1610 = vpop.f32.mrb[0].mxu0
  %v1611 = vadd.f32 %v1537, %v1610
  %v1612 = vpop.f32.mrb[0].mxu0
  %1613 = vdwg.mxu0
  %v1614 = vmul.f32 %v1606, 0.5
  %v1615 = vmul.f32 %v1611, 0.5
  %v1616 = vmul.f32 %v1606, 0.044715
  %v1617 = vmul.f32 %v1611, 0.044715
  %v1618 = vmul.f32 %v1616, %v1606
  %v1619 = vmul.f32 %v1617, %v1611
  %v1620 = vmul.f32 %v1618, %v1606
  %v1621 = vmul.f32 %v1619, %v1611
  %v1622 = vadd.f32 %v1606, %v1620
  %v1623 = vadd.f32 %v1611, %v1621
  %v1624 = vmul.f32 %v1622, 0.7978846
  %v1625 = vmul.f32 %v1623, 0.7978846
  %v1626 = vtanh.pop %v1624
  %v1627 = vtanh.pop %v1625
  %v1628 = vadd.f32 %v1626, 1.0
  %v1629 = vadd.f32 %v1627, 1.0
  %v1630 = vmul.f32 %v1614, %v1628
  %v1631 = vmul.f32 %v1615, %v1629
  %v1632 = vld [vmem:[%s12] sm:$0xff]
  %v1633 = vld [vmem:[%s12 + $0x8] sm:$0xff]
  %v1634 = vld [vmem:[%s12 + $0x10] sm:$0xff]
  %v1635 = vld [vmem:[%s12 + $0x18] sm:$0xff]
  %v1636 = vld [vmem:[%s12 + $0x20] sm:$0xff]
  %v1637 = vld [vmem:[%s12 + $0x28] sm:$0xff]
  %v1638 = vld [vmem:[%s12 + $0x30] sm:$0xff]
  %v1639 = vld [vmem:[%s12 + $0x38] sm:$0xff]
  %v1640 = vld [vmem:[%s12 + $0x40] sm:$0xff]
  %v1641 = vld [vmem:[%s12 + $0x48] sm:$0xff]
  %v1642 = vld [vmem:[%s12 + $0x50] sm:$0xff]
  %v1643 = vld [vmem:[%s12 + $0x58] sm:$0xff]
  %v1644 = vld [vmem:[%s12 + $0x60] sm:$0xff]
  %v1645 = vld [vmem:[%s12 + $0x68] sm:$0xff]
  %v1646 = vld [vmem:[%s12 + $0x70] sm:$0xff]
  %v1647 = vld [vmem:[%s12 + $0x78] sm:$0xff]
  %v1648 = vld [vmem:[%s13] sm:$0x1]
  %v1650 = vlaneseq
  %v1651 = vshrl.u32 %v1650, 7
  %v1652 = vsub.s32 0, %v1651
  %v1653 = vrot.slane %v1648, %v1652
  %1655 = vmatprep.subr.mxu0 0.0
  %1656 = vmatpush1.msra.mxu0 %v1632
  %1657 = vmatprep.subr.mxu0 0.0
  %1658 = vmatpush1.msra.mxu0 %v1633
  %1659 = vmatprep.subr.mxu0 0.0
  %1660 = vmatpush1.msra.mxu0 %v1634
  %1661 = vmatprep.subr.mxu0 0.0
  %1662 = vmatpush1.msra.mxu0 %v1635
  %1663 = vmatprep.subr.mxu0 0.0
  %1664 = vmatpush1.msra.mxu0 %v1636
  %1665 = vmatprep.subr.mxu0 0.0
  %1666 = vmatpush1.msra.mxu0 %v1637
  %1667 = vmatprep.subr.mxu0 0.0
  %1668 = vmatpush1.msra.mxu0 %v1638
  %1669 = vmatprep.subr.mxu0 0.0
  %1670 = vmatpush1.msra.mxu0 %v1639
  %1671 = vmatprep.subr.mxu0 0.0
  %1672 = vmatpush1.msra.mxu0 %v1640
  %1673 = vmatprep.subr.mxu0 0.0
  %1674 = vmatpush1.msra.mxu0 %v1641
  %1675 = vmatprep.subr.mxu0 0.0
  %1676 = vmatpush1.msra.mxu0 %v1642
  %1677 = vmatprep.subr.mxu0 0.0
  %1678 = vmatpush1.msra.mxu0 %v1643
  %1679 = vmatprep.subr.mxu0 0.0
  %1680 = vmatpush1.msra.mxu0 %v1644
  %1681 = vmatprep.subr.mxu0 0.0
  %1682 = vmatpush1.msra.mxu0 %v1645
  %1683 = vmatprep.subr.mxu0 0.0
  %1684 = vmatpush1.msra.mxu0 %v1646
  %1685 = vmatprep.subr.mxu0 0.0
  %1686 = vmatpush1.msra.mxu0 %v1647
  %1687 = vmatprep.subr.mxu0 0.0
  %1688 = vmatpush1.msra.mxu0 0.0
  %1689 = vmatprep.subr.mxu0 0.0
  %1690 = vmatpush1.msra.mxu0 0.0
  %1691 = vmatprep.subr.mxu0 0.0
  %1692 = vmatpush1.msra.mxu0 0.0
  %1693 = vmatprep.subr.mxu0 0.0
  %1694 = vmatpush1.msra.mxu0 0.0
  %1695 = vmatprep.subr.mxu0 0.0
  %1696 = vmatpush1.msra.mxu0 0.0
  %1697 = vmatprep.subr.mxu0 0.0
  %1698 = vmatpush1.msra.mxu0 0.0
  %1699 = vmatprep.subr.mxu0 0.0
  %1700 = vmatpush1.msra.mxu0 0.0
  %1701 = vmatprep.subr.mxu0 0.0
  %1702 = vmatpush1.msra.mxu0 0.0
  %1703 = vmatprep.subr.mxu0 0.0
  %1704 = vmatpush1.msra.mxu0 0.0
  %1705 = vmatprep.subr.mxu0 0.0
  %1706 = vmatpush1.msra.mxu0 0.0
  %1707 = vmatprep.subr.mxu0 0.0
  %1708 = vmatpush1.msra.mxu0 0.0
  %1709 = vmatprep.subr.mxu0 0.0
  %1710 = vmatpush1.msra.mxu0 0.0
  %1711 = vmatprep.subr.mxu0 0.0
  %1712 = vmatpush1.msra.mxu0 0.0
  %1713 = vmatprep.subr.mxu0 0.0
  %1714 = vmatpush1.msra.mxu0 0.0
  %1715 = vmatprep.subr.mxu0 0.0
  %1716 = vmatpush1.msra.mxu0 0.0
  %1717 = vmatprep.subr.mxu0 0.0
  %1718 = vmatpush1.msra.mxu0 0.0
  %1719 = vmatprep.mubr.f32.mxu0 0.0
  %1720 = vmatmul.mubr.f32.gmra.mrb[0].mxu0 %v1630
  %v1721 = vpop.f32.mrb[0].mxu0
  %v1722 = vadd.f32 %v1653, %v1721
  %v1723 = vpop.f32.mrb[0].mxu0
  %1724 = vmatprep.mubr.f32.mxu0 0.0
  %1725 = vmatmul.mubr.f32.gmra.mrb[0].mxu0 %v1631
  %v1726 = vpop.f32.mrb[0].mxu0
  %v1727 = vadd.f32 %v1653, %v1726
  %v1728 = vpop.f32.mrb[0].mxu0
  %1729 = vdwg.mxu0
  %v1730 = vadd.f32 %v1514, %v1722
  %v1731 = vadd.f32 %v1515, %v1727
  %v1732 = vld [vmem:[%s14] sm:$0x1]
  %v1733 = vld [vmem:[%s15] sm:$0x1]
  %v1734 = vmul.f32 %v1730, %v65
  %v1735 = vmul.f32 %v1731, %v65
  %1736 = vadd.xlane.f32.xlu0 %v1734
  %v1737 = vpop.xlane.xlu0 %1736
  %1738 = vadd.xlane.f32.xlu0 %v1735
  %v1739 = vpop.xlane.xlu0 %1738
  %v1740 = vmul.f32 %v1737, 0.03125
  %v1741 = vmul.f32 %v1739, 0.03125
  %v1742 = vsub.f32 %v1734, %v1740
  %v1743 = vsub.f32 %v1735, %v1741
  %v1744 = vmul.f32 %v1742, %v65
  %v1745 = vmul.f32 %v1743, %v65
  %v1746 = vmul.f32 %v1744, %v1744
  %v1747 = vmul.f32 %v1745, %v1745
  %1748 = vadd.xlane.f32.xlu0 %v1746
  %v1749 = vpop.xlane.xlu0 %1748
  %1750 = vadd.xlane.f32.xlu0 %v1747
  %v1751 = vpop.xlane.xlu0 %1750
  %v1752 = vmul.f32 %v1749, 0.03125
  %v1753 = vmul.f32 %v1751, 0.03125
  %v1754 = vadd.f32 %v1752, 1e-12
  %v1755 = vadd.f32 %v1753, 1e-12
  %v1756 = vrsqrt.pop %v1754
  %v1757 = vrsqrt.pop %v1755
  %v1758 = vmul.f32 %v1744, %v1756
  %v1759 = vmul.f32 %v1745, %v1757
  %v1761 = vlaneseq
  %v1762 = vshrl.u32 %v1761, 7
  %v1763 = vsub.s32 0, %v1762
  %v1764 = vrot.slane %v1732, %v1763
  %v1766 = vmul.f32 %v1758, %v1764
  %v1767 = vmul.f32 %v1759, %v1764
  %v1769 = vlaneseq
  %v1770 = vshrl.u32 %v1769, 7
  %v1771 = vsub.s32 0, %v1770
  %v1772 = vrot.slane %v1733, %v1771
  %v1774 = vadd.f32 %v1766, %v1772
  %v1775 = vadd.f32 %v1767, %v1772
  %s1776 = scalar_lea.vmem %s4, 384
  %v1777 = vld [vmem:[%s1776] sm:$0xff]
  %v1778 = vld [vmem:[%s1776 + $0x8] sm:$0xff]
  %v1779 = vld [vmem:[%s1776 + $0x10] sm:$0xff]
  %v1780 = vld [vmem:[%s1776 + $0x18] sm:$0xff]
  %v1781 = vld [vmem:[%s1776 + $0x20] sm:$0xff]
  %v1782 = vld [vmem:[%s1776 + $0x28] sm:$0xff]
  %v1783 = vld [vmem:[%s1776 + $0x30] sm:$0xff]
  %v1784 = vld [vmem:[%s1776 + $0x38] sm:$0xff]
  %v1785 = vld [vmem:[%s1776 + $0x40] sm:$0xff]
  %v1786 = vld [vmem:[%s1776 + $0x48] sm:$0xff]
  %v1787 = vld [vmem:[%s1776 + $0x50] sm:$0xff]
  %v1788 = vld [vmem:[%s1776 + $0x58] sm:$0xff]
  %v1789 = vld [vmem:[%s1776 + $0x60] sm:$0xff]
  %v1790 = vld [vmem:[%s1776 + $0x68] sm:$0xff]
  %v1791 = vld [vmem:[%s1776 + $0x70] sm:$0xff]
  %v1792 = vld [vmem:[%s1776 + $0x78] sm:$0xff]
  %v1793 = vld [vmem:[%s1776 + $0x80] sm:$0xff]
  %v1794 = vld [vmem:[%s1776 + $0x88] sm:$0xff]
  %v1795 = vld [vmem:[%s1776 + $0x90] sm:$0xff]
  %v1796 = vld [vmem:[%s1776 + $0x98] sm:$0xff]
  %v1797 = vld [vmem:[%s1776 + $0xa0] sm:$0xff]
  %v1798 = vld [vmem:[%s1776 + $0xa8] sm:$0xff]
  %v1799 = vld [vmem:[%s1776 + $0xb0] sm:$0xff]
  %v1800 = vld [vmem:[%s1776 + $0xb8] sm:$0xff]
  %v1801 = vld [vmem:[%s1776 + $0xc0] sm:$0xff]
  %v1802 = vld [vmem:[%s1776 + $0xc8] sm:$0xff]
  %v1803 = vld [vmem:[%s1776 + $0xd0] sm:$0xff]
  %v1804 = vld [vmem:[%s1776 + $0xd8] sm:$0xff]
  %v1805 = vld [vmem:[%s1776 + $0xe0] sm:$0xff]
  %v1806 = vld [vmem:[%s1776 + $0xe8] sm:$0xff]
  %v1807 = vld [vmem:[%s1776 + $0xf0] sm:$0xff]
  %v1808 = vld [vmem:[%s1776 + $0xf8] sm:$0xff]
  %v1809 = vld [vmem:[%s1776 + $0x100] sm:$0xff]
  %v1810 = vld [vmem:[%s1776 + $0x108] sm:$0xff]
  %v1811 = vld [vmem:[%s1776 + $0x110] sm:$0xff]
  %v1812 = vld [vmem:[%s1776 + $0x118] sm:$0xff]
  %v1813 = vld [vmem:[%s1776 + $0x120] sm:$0xff]
  %v1814 = vld [vmem:[%s1776 + $0x128] sm:$0xff]
  %v1815 = vld [vmem:[%s1776 + $0x130] sm:$0xff]
  %v1816 = vld [vmem:[%s1776 + $0x138] sm:$0xff]
  %v1817 = vld [vmem:[%s1776 + $0x140] sm:$0xff]
  %v1818 = vld [vmem:[%s1776 + $0x148] sm:$0xff]
  %v1819 = vld [vmem:[%s1776 + $0x150] sm:$0xff]
  %v1820 = vld [vmem:[%s1776 + $0x158] sm:$0xff]
  %v1821 = vld [vmem:[%s1776 + $0x160] sm:$0xff]
  %v1822 = vld [vmem:[%s1776 + $0x168] sm:$0xff]
  %v1823 = vld [vmem:[%s1776 + $0x170] sm:$0xff]
  %v1824 = vld [vmem:[%s1776 + $0x178] sm:$0xff]
  %s1825 = scalar_lea.vmem %s6, 128
  %v1826 = vld [vmem:[%s1825] sm:$0xff]
  %v1827 = vld [vmem:[%s1825 + $0x8] sm:$0xff]
  %v1828 = vld [vmem:[%s1825 + $0x10] sm:$0xff]
  %v1829 = vld [vmem:[%s1825 + $0x18] sm:$0xff]
  %s1830 = scalar_lea.vmem %s5, 3
  %v1831 = vld [vmem:[%s1830] sm:$0x7]
  %v1833 = vlaneseq
  %v1834 = vshrl.u32 %v1833, 7
  %v1835 = vsub.s32 0, %v1834
  %v1836 = vrot.slane %v1831, %v1835
  %v1837 = vlaneseq
  %v1838 = vshrl.u32 %v1837, 7
  %v1839 = vsub.s32 1, %v1838
  %v1840 = vrot.slane %v1831, %v1839
  %v1841 = vlaneseq
  %v1842 = vshrl.u32 %v1841, 7
  %v1843 = vsub.s32 2, %v1842
  %v1844 = vrot.slane %v1831, %v1843
  %1848 = vmatprep.subr.mxu0 %v1778
  %1849 = vmatpush1.msra.mxu0 %v1777
  %1850 = vmatprep.subr.mxu0 %v1781
  %1851 = vmatpush1.msra.mxu0 %v1780
  %1852 = vmatprep.subr.mxu0 %v1784
  %1853 = vmatpush1.msra.mxu0 %v1783
  %1854 = vmatprep.subr.mxu0 %v1787
  %1855 = vmatpush1.msra.mxu0 %v1786
  %1856 = vmatprep.subr.mxu0 %v1790
  %1857 = vmatpush1.msra.mxu0 %v1789
  %1858 = vmatprep.subr.mxu0 %v1793
  %1859 = vmatpush1.msra.mxu0 %v1792
  %1860 = vmatprep.subr.mxu0 %v1796
  %1861 = vmatpush1.msra.mxu0 %v1795
  %1862 = vmatprep.subr.mxu0 %v1799
  %1863 = vmatpush1.msra.mxu0 %v1798
  %1864 = vmatprep.subr.mxu0 %v1802
  %1865 = vmatpush1.msra.mxu0 %v1801
  %1866 = vmatprep.subr.mxu0 %v1805
  %1867 = vmatpush1.msra.mxu0 %v1804
  %1868 = vmatprep.subr.mxu0 %v1808
  %1869 = vmatpush1.msra.mxu0 %v1807
  %1870 = vmatprep.subr.mxu0 %v1811
  %1871 = vmatpush1.msra.mxu0 %v1810
  %1872 = vmatprep.subr.mxu0 %v1814
  %1873 = vmatpush1.msra.mxu0 %v1813
  %1874 = vmatprep.subr.mxu0 %v1817
  %1875 = vmatpush1.msra.mxu0 %v1816
  %1876 = vmatprep.subr.mxu0 %v1820
  %1877 = vmatpush1.msra.mxu0 %v1819
  %1878 = vmatprep.subr.mxu0 %v1823
  %1879 = vmatpush1.msra.mxu0 %v1822
  %1880 = vmatprep.subr.mxu0 0.0
  %1881 = vmatpush1.msra.mxu0 0.0
  %1882 = vmatprep.subr.mxu0 0.0
  %1883 = vmatpush1.msra.mxu0 0.0
  %1884 = vmatprep.subr.mxu0 0.0
  %1885 = vmatpush1.msra.mxu0 0.0
  %1886 = vmatprep.subr.mxu0 0.0
  %1887 = vmatpush1.msra.mxu0 0.0
  %1888 = vmatprep.subr.mxu0 0.0
  %1889 = vmatpush1.msra.mxu0 0.0
  %1890 = vmatprep.subr.mxu0 0.0
  %1891 = vmatpush1.msra.mxu0 0.0
  %1892 = vmatprep.subr.mxu0 0.0
  %1893 = vmatpush1.msra.mxu0 0.0
  %1894 = vmatprep.subr.mxu0 0.0
  %1895 = vmatpush1.msra.mxu0 0.0
  %1896 = vmatprep.subr.mxu0 0.0
  %1897 = vmatpush1.msra.mxu0 0.0
  %1898 = vmatprep.subr.mxu0 0.0
  %1899 = vmatpush1.msra.mxu0 0.0
  %1900 = vmatprep.subr.mxu0 0.0
  %1901 = vmatpush1.msra.mxu0 0.0
  %1902 = vmatprep.subr.mxu0 0.0
  %1903 = vmatpush1.msra.mxu0 0.0
  %1904 = vmatprep.subr.mxu0 0.0
  %1905 = vmatpush1.msra.mxu0 0.0
  %1906 = vmatprep.subr.mxu0 0.0
  %1907 = vmatpush1.msra.mxu0 0.0
  %1908 = vmatprep.subr.mxu0 0.0
  %1909 = vmatpush1.msra.mxu0 0.0
  %1910 = vmatprep.subr.mxu0 0.0
  %1911 = vmatpush1.msra.mxu0 0.0
  %1912 = vmatprep.mubr.f32.mxu0 0.0
  %1913 = vmatmul.mubr.f32.gmra.mrb[0].mxu0 %v1774
  %v1914 = vpop.f32.mrb[0].mxu0
  %v1915 = vadd.f32 %v1836, %v1914
  %v1916 = vpop.f32.mrb[0].mxu0
  %v1917 = vadd.f32 %v1840, %v1916
  %1918 = vmatprep.mubr.f32.mxu0 0.0
  %1919 = vmatmul.mubr.f32.gmra.mrb[0].mxu0 %v1775
  %v1920 = vpop.f32.mrb[0].mxu0
  %v1921 = vadd.f32 %v1836, %v1920
  %v1922 = vpop.f32.mrb[0].mxu0
  %v1923 = vadd.f32 %v1840, %v1922
  %1924 = vdwg.mxu0
  %1925 = vmatprep.subr.mxu0 0.0
  %1926 = vmatpush1.msra.mxu0 %v1779
  %1927 = vmatprep.subr.mxu0 0.0
  %1928 = vmatpush1.msra.mxu0 %v1782
  %1929 = vmatprep.subr.mxu0 0.0
  %1930 = vmatpush1.msra.mxu0 %v1785
  %1931 = vmatprep.subr.mxu0 0.0
  %1932 = vmatpush1.msra.mxu0 %v1788
  %1933 = vmatprep.subr.mxu0 0.0
  %1934 = vmatpush1.msra.mxu0 %v1791
  %1935 = vmatprep.subr.mxu0 0.0
  %1936 = vmatpush1.msra.mxu0 %v1794
  %1937 = vmatprep.subr.mxu0 0.0
  %1938 = vmatpush1.msra.mxu0 %v1797
  %1939 = vmatprep.subr.mxu0 0.0
  %1940 = vmatpush1.msra.mxu0 %v1800
  %1941 = vmatprep.subr.mxu0 0.0
  %1942 = vmatpush1.msra.mxu0 %v1803
  %1943 = vmatprep.subr.mxu0 0.0
  %1944 = vmatpush1.msra.mxu0 %v1806
  %1945 = vmatprep.subr.mxu0 0.0
  %1946 = vmatpush1.msra.mxu0 %v1809
  %1947 = vmatprep.subr.mxu0 0.0
  %1948 = vmatpush1.msra.mxu0 %v1812
  %1949 = vmatprep.subr.mxu0 0.0
  %1950 = vmatpush1.msra.mxu0 %v1815
  %1951 = vmatprep.subr.mxu0 0.0
  %1952 = vmatpush1.msra.mxu0 %v1818
  %1953 = vmatprep.subr.mxu0 0.0
  %1954 = vmatpush1.msra.mxu0 %v1821
  %1955 = vmatprep.subr.mxu0 0.0
  %1956 = vmatpush1.msra.mxu0 %v1824
  %1957 = vmatprep.subr.mxu0 0.0
  %1958 = vmatpush1.msra.mxu0 0.0
  %1959 = vmatprep.subr.mxu0 0.0
  %1960 = vmatpush1.msra.mxu0 0.0
  %1961 = vmatprep.subr.mxu0 0.0
  %1962 = vmatpush1.msra.mxu0 0.0
  %1963 = vmatprep.subr.mxu0 0.0
  %1964 = vmatpush1.msra.mxu0 0.0
  %1965 = vmatprep.subr.mxu0 0.0
  %1966 = vmatpush1.msra.mxu0 0.0
  %1967 = vmatprep.subr.mxu0 0.0
  %1968 = vmatpush1.msra.mxu0 0.0
  %1969 = vmatprep.subr.mxu0 0.0
  %1970 = vmatpush1.msra.mxu0 0.0
  %1971 = vmatprep.subr.mxu0 0.0
  %1972 = vmatpush1.msra.mxu0 0.0
  %1973 = vmatprep.subr.mxu0 0.0
  %1974 = vmatpush1.msra.mxu0 0.0
  %1975 = vmatprep.subr.mxu0 0.0
  %1976 = vmatpush1.msra.mxu0 0.0
  %1977 = vmatprep.subr.mxu0 0.0
  %1978 = vmatpush1.msra.mxu0 0.0
  %1979 = vmatprep.subr.mxu0 0.0
  %1980 = vmatpush1.msra.mxu0 0.0
  %1981 = vmatprep.subr.mxu0 0.0
  %1982 = vmatpush1.msra.mxu0 0.0
  %1983 = vmatprep.subr.mxu0 0.0
  %1984 = vmatpush1.msra.mxu0 0.0
  %1985 = vmatprep.subr.mxu0 0.0
  %1986 = vmatpush1.msra.mxu0 0.0
  %1987 = vmatprep.subr.mxu0 0.0
  %1988 = vmatpush1.msra.mxu0 0.0
  %1989 = vmatprep.mubr.f32.mxu0 0.0
  %1990 = vmatmul.mubr.f32.gmra.mrb[0].mxu0 %v1774
  %v1991 = vpop.f32.mrb[0].mxu0
  %v1992 = vadd.f32 %v1844, %v1991
  %v1993 = vpop.f32.mrb[0].mxu0
  %1994 = vmatprep.mubr.f32.mxu0 0.0
  %1995 = vmatmul.mubr.f32.gmra.mrb[0].mxu0 %v1775
  %v1996 = vpop.f32.mrb[0].mxu0
  %v1997 = vadd.f32 %v1844, %v1996
  %v1998 = vpop.f32.mrb[0].mxu0
  %1999 = vdwg.mxu0
  %v2000 = vmul.f32 %v1915, 0.35355338
  %v2001 = vmul.f32 %v1921, 0.35355338
  %s2002 = scalar_lea.vmem %s7, 1
  %v2003 = vld [vmem:[%s2002] sm:$0x1]
  %v2005 = vsel %vm338, %v2000, 0
  %v2008 = vsel %vm338, %v2001, 0
  %v2011 = vsel %vm338, %v1917, 0
  %v2014 = vsel %vm338, %v1923, 0
  %2016 = vmatprep.subr.mxu0 0.0
  %2017 = vmatpush1.xpose.msra.mxu0 %v2011
  %2018 = vmatprep.subr.mxu0 0.0
  %2019 = vmatpush1.xpose.msra.mxu0 %v2014
  %2020 = vmatprep.subr.mxu0 0.0
  %2021 = vmatpush1.xpose.msra.mxu0 0.0
  %2022 = vmatprep.subr.mxu0 0.0
  %2023 = vmatpush1.xpose.msra.mxu0 0.0
  %2024 = vmatprep.subr.mxu0 0.0
  %2025 = vmatpush1.xpose.msra.mxu0 0.0
  %2026 = vmatprep.subr.mxu0 0.0
  %2027 = vmatpush1.xpose.msra.mxu0 0.0
  %2028 = vmatprep.subr.mxu0 0.0
  %2029 = vmatpush1.xpose.msra.mxu0 0.0
  %2030 = vmatprep.subr.mxu0 0.0
  %2031 = vmatpush1.xpose.msra.mxu0 0.0
  %2032 = vmatprep.subr.mxu0 0.0
  %2033 = vmatpush1.xpose.msra.mxu0 0.0
  %2034 = vmatprep.subr.mxu0 0.0
  %2035 = vmatpush1.xpose.msra.mxu0 0.0
  %2036 = vmatprep.subr.mxu0 0.0
  %2037 = vmatpush1.xpose.msra.mxu0 0.0
  %2038 = vmatprep.subr.mxu0 0.0
  %2039 = vmatpush1.xpose.msra.mxu0 0.0
  %2040 = vmatprep.subr.mxu0 0.0
  %2041 = vmatpush1.xpose.msra.mxu0 0.0
  %2042 = vmatprep.subr.mxu0 0.0
  %2043 = vmatpush1.xpose.msra.mxu0 0.0
  %2044 = vmatprep.subr.mxu0 0.0
  %2045 = vmatpush1.xpose.msra.mxu0 0.0
  %2046 = vmatprep.subr.mxu0 0.0
  %2047 = vmatpush1.xpose.msra.mxu0 0.0
  %2048 = vmatprep.subr.mxu0 0.0
  %2049 = vmatpush1.xpose.msra.mxu0 0.0
  %2050 = vmatprep.subr.mxu0 0.0
  %2051 = vmatpush1.xpose.msra.mxu0 0.0
  %2052 = vmatprep.subr.mxu0 0.0
  %2053 = vmatpush1.xpose.msra.mxu0 0.0
  %2054 = vmatprep.subr.mxu0 0.0
  %2055 = vmatpush1.xpose.msra.mxu0 0.0
  %2056 = vmatprep.subr.mxu0 0.0
  %2057 = vmatpush1.xpose.msra.mxu0 0.0
  %2058 = vmatprep.subr.mxu0 0.0
  %2059 = vmatpush1.xpose.msra.mxu0 0.0
  %2060 = vmatprep.subr.mxu0 0.0
  %2061 = vmatpush1.xpose.msra.mxu0 0.0
  %2062 = vmatprep.subr.mxu0 0.0
  %2063 = vmatpush1.xpose.msra.mxu0 0.0
  %2064 = vmatprep.subr.mxu0 0.0
  %2065 = vmatpush1.xpose.msra.mxu0 0.0
  %2066 = vmatprep.subr.mxu0 0.0
  %2067 = vmatpush1.xpose.msra.mxu0 0.0
  %2068 = vmatprep.subr.mxu0 0.0
  %2069 = vmatpush1.xpose.msra.mxu0 0.0
  %2070 = vmatprep.subr.mxu0 0.0
  %2071 = vmatpush1.xpose.msra.mxu0 0.0
  %2072 = vmatprep.subr.mxu0 0.0
  %2073 = vmatpush1.xpose.msra.mxu0 0.0
  %2074 = vmatprep.subr.mxu0 0.0
  %2075 = vmatpush1.xpose.msra.mxu0 0.0
  %2076 = vmatprep.subr.mxu0 0.0
  %2077 = vmatpush1.xpose.msra.mxu0 0.0
  %2078 = vmatprep.subr.mxu0 0.0
  %2079 = vmatpush1.xpose.msra.mxu0 0.0
  %2080 = vmatprep.mubr.f32.mxu0 0.0
  %2081 = vmatmul.mubr.f32.gmra.mrb[0].mxu0 %v2005
  %v2082 = vpop.f32.mrb[0].mxu0
  %v2083 = vadd.f32 %v66, %v2082
  %v2084 = vpop.f32.mrb[0].mxu0
  %2085 = vmatprep.mubr.f32.mxu0 0.0
  %2086 = vmatmul.mubr.f32.gmra.mrb[0].mxu0 %v2008
  %v2087 = vpop.f32.mrb[0].mxu0
  %v2088 = vadd.f32 %v67, %v2087
  %v2089 = vpop.f32.mrb[0].mxu0
  %2090 = vdwg.mxu0
  %v2091 = vsel %vm426, %v2083, -inf
  %2092 = vmax.xlane.f32.xlu0 %v2091
  %v2093 = vpop.xlane.xlu0 %2092
  %v2094 = vsel %vm426, %v2088, -inf
  %2095 = vmax.xlane.f32.xlu0 %v2094
  %v2096 = vpop.xlane.xlu0 %2095
  %v2097 = vsub.f32 %v2083, %v2093
  %v2098 = vsub.f32 %v2088, %v2096
  %v2099 = vmul.f32 %v2097, 1.442695
  %v2100 = vpow.pop %v2099
  %v2101 = vmul.f32 %v2098, 1.442695
  %v2102 = vpow.pop %v2101
  %v2103 = vsel %vm426, %v2100, 0.0
  %2104 = vadd.xlane.f32.xlu0 %v2103
  %v2105 = vpop.xlane.xlu0 %2104
  %v2106 = vsel %vm426, %v2102, 0.0
  %2107 = vadd.xlane.f32.xlu0 %v2106
  %v2108 = vpop.xlane.xlu0 %2107
  %v2109 = vrcp.pop %v2105
  %v2110 = vrcp.pop %v2108
  %v2111 = vmul.f32 %v2100, %v2109
  %v2112 = vmul.f32 %v2102, %v2110
  %v2114 = vsel %vm426, %v2111, 0
  %v2117 = vsel %vm426, %v2112, 0
  %2119 = vmatprep.subr.mxu0 0.0
  %2120 = vmatpush1.msra.mxu0 %v1992
  %2121 = vmatprep.subr.mxu0 0.0
  %2122 = vmatpush1.msra.mxu0 %v1997
  %2123 = vmatprep.subr.mxu0 0.0
  %2124 = vmatpush1.msra.mxu0 0.0
  %2125 = vmatprep.subr.mxu0 0.0
  %2126 = vmatpush1.msra.mxu0 0.0
  %2127 = vmatprep.subr.mxu0 0.0
  %2128 = vmatpush1.msra.mxu0 0.0
  %2129 = vmatprep.subr.mxu0 0.0
  %2130 = vmatpush1.msra.mxu0 0.0
  %2131 = vmatprep.subr.mxu0 0.0
  %2132 = vmatpush1.msra.mxu0 0.0
  %2133 = vmatprep.subr.mxu0 0.0
  %2134 = vmatpush1.msra.mxu0 0.0
  %2135 = vmatprep.subr.mxu0 0.0
  %2136 = vmatpush1.msra.mxu0 0.0
  %2137 = vmatprep.subr.mxu0 0.0
  %2138 = vmatpush1.msra.mxu0 0.0
  %2139 = vmatprep.subr.mxu0 0.0
  %2140 = vmatpush1.msra.mxu0 0.0
  %2141 = vmatprep.subr.mxu0 0.0
  %2142 = vmatpush1.msra.mxu0 0.0
  %2143 = vmatprep.subr.mxu0 0.0
  %2144 = vmatpush1.msra.mxu0 0.0
  %2145 = vmatprep.subr.mxu0 0.0
  %2146 = vmatpush1.msra.mxu0 0.0
  %2147 = vmatprep.subr.mxu0 0.0
  %2148 = vmatpush1.msra.mxu0 0.0
  %2149 = vmatprep.subr.mxu0 0.0
  %2150 = vmatpush1.msra.mxu0 0.0
  %2151 = vmatprep.subr.mxu0 0.0
  %2152 = vmatpush1.msra.mxu0 0.0
  %2153 = vmatprep.subr.mxu0 0.0
  %2154 = vmatpush1.msra.mxu0 0.0
  %2155 = vmatprep.subr.mxu0 0.0
  %2156 = vmatpush1.msra.mxu0 0.0
  %2157 = vmatprep.subr.mxu0 0.0
  %2158 = vmatpush1.msra.mxu0 0.0
  %2159 = vmatprep.subr.mxu0 0.0
  %2160 = vmatpush1.msra.mxu0 0.0
  %2161 = vmatprep.subr.mxu0 0.0
  %2162 = vmatpush1.msra.mxu0 0.0
  %2163 = vmatprep.subr.mxu0 0.0
  %2164 = vmatpush1.msra.mxu0 0.0
  %2165 = vmatprep.subr.mxu0 0.0
  %2166 = vmatpush1.msra.mxu0 0.0
  %2167 = vmatprep.subr.mxu0 0.0
  %2168 = vmatpush1.msra.mxu0 0.0
  %2169 = vmatprep.subr.mxu0 0.0
  %2170 = vmatpush1.msra.mxu0 0.0
  %2171 = vmatprep.subr.mxu0 0.0
  %2172 = vmatpush1.msra.mxu0 0.0
  %2173 = vmatprep.subr.mxu0 0.0
  %2174 = vmatpush1.msra.mxu0 0.0
  %2175 = vmatprep.subr.mxu0 0.0
  %2176 = vmatpush1.msra.mxu0 0.0
  %2177 = vmatprep.subr.mxu0 0.0
  %2178 = vmatpush1.msra.mxu0 0.0
  %2179 = vmatprep.subr.mxu0 0.0
  %2180 = vmatpush1.msra.mxu0 0.0
  %2181 = vmatprep.subr.mxu0 0.0
  %2182 = vmatpush1.msra.mxu0 0.0
  %2183 = vmatprep.mubr.f32.mxu0 0.0
  %2184 = vmatmul.mubr.f32.gmra.mrb[0].mxu0 %v2114
  %v2185 = vpop.f32.mrb[0].mxu0
  %v2186 = vadd.f32 0.0, %v2185
  %v2187 = vpop.f32.mrb[0].mxu0
  %2188 = vmatprep.mubr.f32.mxu0 0.0
  %2189 = vmatmul.mubr.f32.gmra.mrb[0].mxu0 %v2117
  %v2190 = vpop.f32.mrb[0].mxu0
  %v2191 = vadd.f32 0.0, %v2190
  %v2192 = vpop.f32.mrb[0].mxu0
  %2193 = vdwg.mxu0
  %v2195 = vsel %vm338, %v2186, 0
  %v2198 = vsel %vm338, %v2191, 0
  %2200 = vmatprep.subr.mxu0 0.0
  %2201 = vmatpush1.msra.mxu0 %v1826
  %2202 = vmatprep.subr.mxu0 0.0
  %2203 = vmatpush1.msra.mxu0 0.0
  %2204 = vmatprep.subr.mxu0 0.0
  %2205 = vmatpush1.msra.mxu0 0.0
  %2206 = vmatprep.subr.mxu0 0.0
  %2207 = vmatpush1.msra.mxu0 0.0
  %2208 = vmatprep.subr.mxu0 0.0
  %2209 = vmatpush1.msra.mxu0 0.0
  %2210 = vmatprep.subr.mxu0 0.0
  %2211 = vmatpush1.msra.mxu0 0.0
  %2212 = vmatprep.subr.mxu0 0.0
  %2213 = vmatpush1.msra.mxu0 0.0
  %2214 = vmatprep.subr.mxu0 0.0
  %2215 = vmatpush1.msra.mxu0 0.0
  %2216 = vmatprep.subr.mxu0 0.0
  %2217 = vmatpush1.msra.mxu0 0.0
  %2218 = vmatprep.subr.mxu0 0.0
  %2219 = vmatpush1.msra.mxu0 0.0
  %2220 = vmatprep.subr.mxu0 0.0
  %2221 = vmatpush1.msra.mxu0 0.0
  %2222 = vmatprep.subr.mxu0 0.0
  %2223 = vmatpush1.msra.mxu0 0.0
  %2224 = vmatprep.subr.mxu0 0.0
  %2225 = vmatpush1.msra.mxu0 0.0
  %2226 = vmatprep.subr.mxu0 0.0
  %2227 = vmatpush1.msra.mxu0 0.0
  %2228 = vmatprep.subr.mxu0 0.0
  %2229 = vmatpush1.msra.mxu0 0.0
  %2230 = vmatprep.subr.mxu0 0.0
  %2231 = vmatpush1.msra.mxu0 0.0
  %2232 = vmatprep.subr.mxu0 0.0
  %2233 = vmatpush1.msra.mxu0 0.0
  %2234 = vmatprep.subr.mxu0 0.0
  %2235 = vmatpush1.msra.mxu0 0.0
  %2236 = vmatprep.subr.mxu0 0.0
  %2237 = vmatpush1.msra.mxu0 0.0
  %2238 = vmatprep.subr.mxu0 0.0
  %2239 = vmatpush1.msra.mxu0 0.0
  %2240 = vmatprep.subr.mxu0 0.0
  %2241 = vmatpush1.msra.mxu0 0.0
  %2242 = vmatprep.subr.mxu0 0.0
  %2243 = vmatpush1.msra.mxu0 0.0
  %2244 = vmatprep.subr.mxu0 0.0
  %2245 = vmatpush1.msra.mxu0 0.0
  %2246 = vmatprep.subr.mxu0 0.0
  %2247 = vmatpush1.msra.mxu0 0.0
  %2248 = vmatprep.subr.mxu0 0.0
  %2249 = vmatpush1.msra.mxu0 0.0
  %2250 = vmatprep.subr.mxu0 0.0
  %2251 = vmatpush1.msra.mxu0 0.0
  %2252 = vmatprep.subr.mxu0 0.0
  %2253 = vmatpush1.msra.mxu0 0.0
  %2254 = vmatprep.subr.mxu0 0.0
  %2255 = vmatpush1.msra.mxu0 0.0
  %2256 = vmatprep.subr.mxu0 0.0
  %2257 = vmatpush1.msra.mxu0 0.0
  %2258 = vmatprep.subr.mxu0 0.0
  %2259 = vmatpush1.msra.mxu0 0.0
  %2260 = vmatprep.subr.mxu0 0.0
  %2261 = vmatpush1.msra.mxu0 0.0
  %2262 = vmatprep.subr.mxu0 0.0
  %2263 = vmatpush1.msra.mxu0 0.0
  %2264 = vmatprep.mubr.f32.mxu0 0.0
  %2265 = vmatmul.mubr.f32.gmra.mrb[0].mxu0 %v2195
  %v2266 = vpop.f32.mrb[0].mxu0
  %v2267 = vadd.f32 0.0, %v2266
  %v2268 = vpop.f32.mrb[0].mxu0
  %2269 = vmatprep.mubr.f32.mxu0 0.0
  %2270 = vmatmul.mubr.f32.gmra.mrb[0].mxu0 %v2198
  %v2271 = vpop.f32.mrb[0].mxu0
  %v2272 = vadd.f32 0.0, %v2271
  %v2273 = vpop.f32.mrb[0].mxu0
  %2274 = vdwg.mxu0
  %v2276 = vlaneseq
  %v2277 = vshrl.u32 %v2276, 7
  %v2278 = vsub.s32 0, %v2277
  %v2279 = vrot.slane %v2003, %v2278
  %v2281 = vadd.f32 %v2279, %v2267
  %v2282 = vadd.f32 %v2279, %v2272
  %2283 = vrot.lane.b32.xlu0 %v2000, 120
  %v2284 = vpop.permute.xlu0 %2283
  %2285 = vrot.lane.b32.xlu0 %v2001, 120
  %v2286 = vpop.permute.xlu0 %2285
  %2287 = vrot.lane.b32.xlu0 %v1917, 120
  %v2288 = vpop.permute.xlu0 %2287
  %2289 = vrot.lane.b32.xlu0 %v1923, 120
  %v2290 = vpop.permute.xlu0 %2289
  %v2291 = vsel %vm338, %v2284, 0
  %v2293 = vsel %vm338, %v2286, 0
  %v2295 = vsel %vm338, %v2288, 0
  %v2297 = vsel %vm338, %v2290, 0
  %2299 = vmatprep.subr.mxu0 0.0
  %2300 = vmatpush1.xpose.msra.mxu0 %v2295
  %2301 = vmatprep.subr.mxu0 0.0
  %2302 = vmatpush1.xpose.msra.mxu0 %v2297
  %2303 = vmatprep.subr.mxu0 0.0
  %2304 = vmatpush1.xpose.msra.mxu0 0.0
  %2305 = vmatprep.subr.mxu0 0.0
  %2306 = vmatpush1.xpose.msra.mxu0 0.0
  %2307 = vmatprep.subr.mxu0 0.0
  %2308 = vmatpush1.xpose.msra.mxu0 0.0
  %2309 = vmatprep.subr.mxu0 0.0
  %2310 = vmatpush1.xpose.msra.mxu0 0.0
  %2311 = vmatprep.subr.mxu0 0.0
  %2312 = vmatpush1.xpose.msra.mxu0 0.0
  %2313 = vmatprep.subr.mxu0 0.0
  %2314 = vmatpush1.xpose.msra.mxu0 0.0
  %2315 = vmatprep.subr.mxu0 0.0
  %2316 = vmatpush1.xpose.msra.mxu0 0.0
  %2317 = vmatprep.subr.mxu0 0.0
  %2318 = vmatpush1.xpose.msra.mxu0 0.0
  %2319 = vmatprep.subr.mxu0 0.0
  %2320 = vmatpush1.xpose.msra.mxu0 0.0
  %2321 = vmatprep.subr.mxu0 0.0
  %2322 = vmatpush1.xpose.msra.mxu0 0.0
  %2323 = vmatprep.subr.mxu0 0.0
  %2324 = vmatpush1.xpose.msra.mxu0 0.0
  %2325 = vmatprep.subr.mxu0 0.0
  %2326 = vmatpush1.xpose.msra.mxu0 0.0
  %2327 = vmatprep.subr.mxu0 0.0
  %2328 = vmatpush1.xpose.msra.mxu0 0.0
  %2329 = vmatprep.subr.mxu0 0.0
  %2330 = vmatpush1.xpose.msra.mxu0 0.0
  %2331 = vmatprep.subr.mxu0 0.0
  %2332 = vmatpush1.xpose.msra.mxu0 0.0
  %2333 = vmatprep.subr.mxu0 0.0
  %2334 = vmatpush1.xpose.msra.mxu0 0.0
  %2335 = vmatprep.subr.mxu0 0.0
  %2336 = vmatpush1.xpose.msra.mxu0 0.0
  %2337 = vmatprep.subr.mxu0 0.0
  %2338 = vmatpush1.xpose.msra.mxu0 0.0
  %2339 = vmatprep.subr.mxu0 0.0
  %2340 = vmatpush1.xpose.msra.mxu0 0.0
  %2341 = vmatprep.subr.mxu0 0.0
  %2342 = vmatpush1.xpose.msra.mxu0 0.0
  %2343 = vmatprep.subr.mxu0 0.0
  %2344 = vmatpush1.xpose.msra.mxu0 0.0
  %2345 = vmatprep.subr.mxu0 0.0
  %2346 = vmatpush1.xpose.msra.mxu0 0.0
  %2347 = vmatprep.subr.mxu0 0.0
  %2348 = vmatpush1.xpose.msra.mxu0 0.0
  %2349 = vmatprep.subr.mxu0 0.0
  %2350 = vmatpush1.xpose.msra.mxu0 0.0
  %2351 = vmatprep.subr.mxu0 0.0
  %2352 = vmatpush1.xpose.msra.mxu0 0.0
  %2353 = vmatprep.subr.mxu0 0.0
  %2354 = vmatpush1.xpose.msra.mxu0 0.0
  %2355 = vmatprep.subr.mxu0 0.0
  %2356 = vmatpush1.xpose.msra.mxu0 0.0
  %2357 = vmatprep.subr.mxu0 0.0
  %2358 = vmatpush1.xpose.msra.mxu0 0.0
  %2359 = vmatprep.subr.mxu0 0.0
  %2360 = vmatpush1.xpose.msra.mxu0 0.0
  %2361 = vmatprep.subr.mxu0 0.0
  %2362 = vmatpush1.xpose.msra.mxu0 0.0
  %2363 = vmatprep.mubr.f32.mxu0 0.0
  %2364 = vmatmul.mubr.f32.gmra.mrb[0].mxu0 %v2291
  %v2365 = vpop.f32.mrb[0].mxu0
  %v2366 = vadd.f32 %v66, %v2365
  %v2367 = vpop.f32.mrb[0].mxu0
  %2368 = vmatprep.mubr.f32.mxu0 0.0
  %2369 = vmatmul.mubr.f32.gmra.mrb[0].mxu0 %v2293
  %v2370 = vpop.f32.mrb[0].mxu0
  %v2371 = vadd.f32 %v67, %v2370
  %v2372 = vpop.f32.mrb[0].mxu0
  %2373 = vdwg.mxu0
  %v2374 = vsel %vm426, %v2366, -inf
  %2375 = vmax.xlane.f32.xlu0 %v2374
  %v2376 = vpop.xlane.xlu0 %2375
  %v2377 = vsel %vm426, %v2371, -inf
  %2378 = vmax.xlane.f32.xlu0 %v2377
  %v2379 = vpop.xlane.xlu0 %2378
  %v2380 = vsub.f32 %v2366, %v2376
  %v2381 = vsub.f32 %v2371, %v2379
  %v2382 = vmul.f32 %v2380, 1.442695
  %v2383 = vpow.pop %v2382
  %v2384 = vmul.f32 %v2381, 1.442695
  %v2385 = vpow.pop %v2384
  %v2386 = vsel %vm426, %v2383, 0.0
  %2387 = vadd.xlane.f32.xlu0 %v2386
  %v2388 = vpop.xlane.xlu0 %2387
  %v2389 = vsel %vm426, %v2385, 0.0
  %2390 = vadd.xlane.f32.xlu0 %v2389
  %v2391 = vpop.xlane.xlu0 %2390
  %v2392 = vrcp.pop %v2388
  %v2393 = vrcp.pop %v2391
  %v2394 = vmul.f32 %v2383, %v2392
  %v2395 = vmul.f32 %v2385, %v2393
  %2398 = vrot.lane.b32.xlu0 %v1992, 120
  %v2399 = vpop.permute.xlu0 %2398
  %2400 = vrot.lane.b32.xlu0 %v1997, 120
  %v2401 = vpop.permute.xlu0 %2400
  %v2405 = vsel %vm426, %v2394, 0
  %v2408 = vsel %vm426, %v2395, 0
  %2410 = vmatprep.subr.mxu0 0.0
  %2411 = vmatpush1.msra.mxu0 %v2399
  %2412 = vmatprep.subr.mxu0 0.0
  %2413 = vmatpush1.msra.mxu0 %v2401
  %2414 = vmatprep.subr.mxu0 0.0
  %2415 = vmatpush1.msra.mxu0 0.0
  %2416 = vmatprep.subr.mxu0 0.0
  %2417 = vmatpush1.msra.mxu0 0.0
  %2418 = vmatprep.subr.mxu0 0.0
  %2419 = vmatpush1.msra.mxu0 0.0
  %2420 = vmatprep.subr.mxu0 0.0
  %2421 = vmatpush1.msra.mxu0 0.0
  %2422 = vmatprep.subr.mxu0 0.0
  %2423 = vmatpush1.msra.mxu0 0.0
  %2424 = vmatprep.subr.mxu0 0.0
  %2425 = vmatpush1.msra.mxu0 0.0
  %2426 = vmatprep.subr.mxu0 0.0
  %2427 = vmatpush1.msra.mxu0 0.0
  %2428 = vmatprep.subr.mxu0 0.0
  %2429 = vmatpush1.msra.mxu0 0.0
  %2430 = vmatprep.subr.mxu0 0.0
  %2431 = vmatpush1.msra.mxu0 0.0
  %2432 = vmatprep.subr.mxu0 0.0
  %2433 = vmatpush1.msra.mxu0 0.0
  %2434 = vmatprep.subr.mxu0 0.0
  %2435 = vmatpush1.msra.mxu0 0.0
  %2436 = vmatprep.subr.mxu0 0.0
  %2437 = vmatpush1.msra.mxu0 0.0
  %2438 = vmatprep.subr.mxu0 0.0
  %2439 = vmatpush1.msra.mxu0 0.0
  %2440 = vmatprep.subr.mxu0 0.0
  %2441 = vmatpush1.msra.mxu0 0.0
  %2442 = vmatprep.subr.mxu0 0.0
  %2443 = vmatpush1.msra.mxu0 0.0
  %2444 = vmatprep.subr.mxu0 0.0
  %2445 = vmatpush1.msra.mxu0 0.0
  %2446 = vmatprep.subr.mxu0 0.0
  %2447 = vmatpush1.msra.mxu0 0.0
  %2448 = vmatprep.subr.mxu0 0.0
  %2449 = vmatpush1.msra.mxu0 0.0
  %2450 = vmatprep.subr.mxu0 0.0
  %2451 = vmatpush1.msra.mxu0 0.0
  %2452 = vmatprep.subr.mxu0 0.0
  %2453 = vmatpush1.msra.mxu0 0.0
  %2454 = vmatprep.subr.mxu0 0.0
  %2455 = vmatpush1.msra.mxu0 0.0
  %2456 = vmatprep.subr.mxu0 0.0
  %2457 = vmatpush1.msra.mxu0 0.0
  %2458 = vmatprep.subr.mxu0 0.0
  %2459 = vmatpush1.msra.mxu0 0.0
  %2460 = vmatprep.subr.mxu0 0.0
  %2461 = vmatpush1.msra.mxu0 0.0
  %2462 = vmatprep.subr.mxu0 0.0
  %2463 = vmatpush1.msra.mxu0 0.0
  %2464 = vmatprep.subr.mxu0 0.0
  %2465 = vmatpush1.msra.mxu0 0.0
  %2466 = vmatprep.subr.mxu0 0.0
  %2467 = vmatpush1.msra.mxu0 0.0
  %2468 = vmatprep.subr.mxu0 0.0
  %2469 = vmatpush1.msra.mxu0 0.0
  %2470 = vmatprep.subr.mxu0 0.0
  %2471 = vmatpush1.msra.mxu0 0.0
  %2472 = vmatprep.subr.mxu0 0.0
  %2473 = vmatpush1.msra.mxu0 0.0
  %2474 = vmatprep.mubr.f32.mxu0 0.0
  %2475 = vmatmul.mubr.f32.gmra.mrb[0].mxu0 %v2405
  %v2476 = vpop.f32.mrb[0].mxu0
  %v2477 = vadd.f32 0.0, %v2476
  %v2478 = vpop.f32.mrb[0].mxu0
  %2479 = vmatprep.mubr.f32.mxu0 0.0
  %2480 = vmatmul.mubr.f32.gmra.mrb[0].mxu0 %v2408
  %v2481 = vpop.f32.mrb[0].mxu0
  %v2482 = vadd.f32 0.0, %v2481
  %v2483 = vpop.f32.mrb[0].mxu0
  %2484 = vdwg.mxu0
  %v2486 = vsel %vm338, %v2477, 0
  %v2489 = vsel %vm338, %v2482, 0
  %2491 = vmatprep.subr.mxu0 0.0
  %2492 = vmatpush1.msra.mxu0 %v1827
  %2493 = vmatprep.subr.mxu0 0.0
  %2494 = vmatpush1.msra.mxu0 0.0
  %2495 = vmatprep.subr.mxu0 0.0
  %2496 = vmatpush1.msra.mxu0 0.0
  %2497 = vmatprep.subr.mxu0 0.0
  %2498 = vmatpush1.msra.mxu0 0.0
  %2499 = vmatprep.subr.mxu0 0.0
  %2500 = vmatpush1.msra.mxu0 0.0
  %2501 = vmatprep.subr.mxu0 0.0
  %2502 = vmatpush1.msra.mxu0 0.0
  %2503 = vmatprep.subr.mxu0 0.0
  %2504 = vmatpush1.msra.mxu0 0.0
  %2505 = vmatprep.subr.mxu0 0.0
  %2506 = vmatpush1.msra.mxu0 0.0
  %2507 = vmatprep.subr.mxu0 0.0
  %2508 = vmatpush1.msra.mxu0 0.0
  %2509 = vmatprep.subr.mxu0 0.0
  %2510 = vmatpush1.msra.mxu0 0.0
  %2511 = vmatprep.subr.mxu0 0.0
  %2512 = vmatpush1.msra.mxu0 0.0
  %2513 = vmatprep.subr.mxu0 0.0
  %2514 = vmatpush1.msra.mxu0 0.0
  %2515 = vmatprep.subr.mxu0 0.0
  %2516 = vmatpush1.msra.mxu0 0.0
  %2517 = vmatprep.subr.mxu0 0.0
  %2518 = vmatpush1.msra.mxu0 0.0
  %2519 = vmatprep.subr.mxu0 0.0
  %2520 = vmatpush1.msra.mxu0 0.0
  %2521 = vmatprep.subr.mxu0 0.0
  %2522 = vmatpush1.msra.mxu0 0.0
  %2523 = vmatprep.subr.mxu0 0.0
  %2524 = vmatpush1.msra.mxu0 0.0
  %2525 = vmatprep.subr.mxu0 0.0
  %2526 = vmatpush1.msra.mxu0 0.0
  %2527 = vmatprep.subr.mxu0 0.0
  %2528 = vmatpush1.msra.mxu0 0.0
  %2529 = vmatprep.subr.mxu0 0.0
  %2530 = vmatpush1.msra.mxu0 0.0
  %2531 = vmatprep.subr.mxu0 0.0
  %2532 = vmatpush1.msra.mxu0 0.0
  %2533 = vmatprep.subr.mxu0 0.0
  %2534 = vmatpush1.msra.mxu0 0.0
  %2535 = vmatprep.subr.mxu0 0.0
  %2536 = vmatpush1.msra.mxu0 0.0
  %2537 = vmatprep.subr.mxu0 0.0
  %2538 = vmatpush1.msra.mxu0 0.0
  %2539 = vmatprep.subr.mxu0 0.0
  %2540 = vmatpush1.msra.mxu0 0.0
  %2541 = vmatprep.subr.mxu0 0.0
  %2542 = vmatpush1.msra.mxu0 0.0
  %2543 = vmatprep.subr.mxu0 0.0
  %2544 = vmatpush1.msra.mxu0 0.0
  %2545 = vmatprep.subr.mxu0 0.0
  %2546 = vmatpush1.msra.mxu0 0.0
  %2547 = vmatprep.subr.mxu0 0.0
  %2548 = vmatpush1.msra.mxu0 0.0
  %2549 = vmatprep.subr.mxu0 0.0
  %2550 = vmatpush1.msra.mxu0 0.0
  %2551 = vmatprep.subr.mxu0 0.0
  %2552 = vmatpush1.msra.mxu0 0.0
  %2553 = vmatprep.subr.mxu0 0.0
  %2554 = vmatpush1.msra.mxu0 0.0
  %2555 = vmatprep.mubr.f32.mxu0 0.0
  %2556 = vmatmul.mubr.f32.gmra.mrb[0].mxu0 %v2486
  %v2557 = vpop.f32.mrb[0].mxu0
  %v2558 = vadd.f32 0.0, %v2557
  %v2559 = vpop.f32.mrb[0].mxu0
  %2560 = vmatprep.mubr.f32.mxu0 0.0
  %2561 = vmatmul.mubr.f32.gmra.mrb[0].mxu0 %v2489
  %v2562 = vpop.f32.mrb[0].mxu0
  %v2563 = vadd.f32 0.0, %v2562
  %v2564 = vpop.f32.mrb[0].mxu0
  %2565 = vdwg.mxu0
  %v2566 = vadd.f32 %v2281, %v2558
  %v2567 = vadd.f32 %v2282, %v2563
  %2568 = vrot.lane.b32.xlu0 %v2000, 112
  %v2569 = vpop.permute.xlu0 %2568
  %2570 = vrot.lane.b32.xlu0 %v2001, 112
  %v2571 = vpop.permute.xlu0 %2570
  %2572 = vrot.lane.b32.xlu0 %v1917, 112
  %v2573 = vpop.permute.xlu0 %2572
  %2574 = vrot.lane.b32.xlu0 %v1923, 112
  %v2575 = vpop.permute.xlu0 %2574
  %v2576 = vsel %vm338, %v2569, 0
  %v2578 = vsel %vm338, %v2571, 0
  %v2580 = vsel %vm338, %v2573, 0
  %v2582 = vsel %vm338, %v2575, 0
  %2584 = vmatprep.subr.mxu0 0.0
  %2585 = vmatpush1.xpose.msra.mxu0 %v2580
  %2586 = vmatprep.subr.mxu0 0.0
  %2587 = vmatpush1.xpose.msra.mxu0 %v2582
  %2588 = vmatprep.subr.mxu0 0.0
  %2589 = vmatpush1.xpose.msra.mxu0 0.0
  %2590 = vmatprep.subr.mxu0 0.0
  %2591 = vmatpush1.xpose.msra.mxu0 0.0
  %2592 = vmatprep.subr.mxu0 0.0
  %2593 = vmatpush1.xpose.msra.mxu0 0.0
  %2594 = vmatprep.subr.mxu0 0.0
  %2595 = vmatpush1.xpose.msra.mxu0 0.0
  %2596 = vmatprep.subr.mxu0 0.0
  %2597 = vmatpush1.xpose.msra.mxu0 0.0
  %2598 = vmatprep.subr.mxu0 0.0
  %2599 = vmatpush1.xpose.msra.mxu0 0.0
  %2600 = vmatprep.subr.mxu0 0.0
  %2601 = vmatpush1.xpose.msra.mxu0 0.0
  %2602 = vmatprep.subr.mxu0 0.0
  %2603 = vmatpush1.xpose.msra.mxu0 0.0
  %2604 = vmatprep.subr.mxu0 0.0
  %2605 = vmatpush1.xpose.msra.mxu0 0.0
  %2606 = vmatprep.subr.mxu0 0.0
  %2607 = vmatpush1.xpose.msra.mxu0 0.0
  %2608 = vmatprep.subr.mxu0 0.0
  %2609 = vmatpush1.xpose.msra.mxu0 0.0
  %2610 = vmatprep.subr.mxu0 0.0
  %2611 = vmatpush1.xpose.msra.mxu0 0.0
  %2612 = vmatprep.subr.mxu0 0.0
  %2613 = vmatpush1.xpose.msra.mxu0 0.0
  %2614 = vmatprep.subr.mxu0 0.0
  %2615 = vmatpush1.xpose.msra.mxu0 0.0
  %2616 = vmatprep.subr.mxu0 0.0
  %2617 = vmatpush1.xpose.msra.mxu0 0.0
  %2618 = vmatprep.subr.mxu0 0.0
  %2619 = vmatpush1.xpose.msra.mxu0 0.0
  %2620 = vmatprep.subr.mxu0 0.0
  %2621 = vmatpush1.xpose.msra.mxu0 0.0
  %2622 = vmatprep.subr.mxu0 0.0
  %2623 = vmatpush1.xpose.msra.mxu0 0.0
  %2624 = vmatprep.subr.mxu0 0.0
  %2625 = vmatpush1.xpose.msra.mxu0 0.0
  %2626 = vmatprep.subr.mxu0 0.0
  %2627 = vmatpush1.xpose.msra.mxu0 0.0
  %2628 = vmatprep.subr.mxu0 0.0
  %2629 = vmatpush1.xpose.msra.mxu0 0.0
  %2630 = vmatprep.subr.mxu0 0.0
  %2631 = vmatpush1.xpose.msra.mxu0 0.0
  %2632 = vmatprep.subr.mxu0 0.0
  %2633 = vmatpush1.xpose.msra.mxu0 0.0
  %2634 = vmatprep.subr.mxu0 0.0
  %2635 = vmatpush1.xpose.msra.mxu0 0.0
  %2636 = vmatprep.subr.mxu0 0.0
  %2637 = vmatpush1.xpose.msra.mxu0 0.0
  %2638 = vmatprep.subr.mxu0 0.0
  %2639 = vmatpush1.xpose.msra.mxu0 0.0
  %2640 = vmatprep.subr.mxu0 0.0
  %2641 = vmatpush1.xpose.msra.mxu0 0.0
  %2642 = vmatprep.subr.mxu0 0.0
  %2643 = vmatpush1.xpose.msra.mxu0 0.0
  %2644 = vmatprep.subr.mxu0 0.0
  %2645 = vmatpush1.xpose.msra.mxu0 0.0
  %2646 = vmatprep.subr.mxu0 0.0
  %2647 = vmatpush1.xpose.msra.mxu0 0.0
  %2648 = vmatprep.mubr.f32.mxu0 0.0
  %2649 = vmatmul.mubr.f32.gmra.mrb[0].mxu0 %v2576
  %v2650 = vpop.f32.mrb[0].mxu0
  %v2651 = vadd.f32 %v66, %v2650
  %v2652 = vpop.f32.mrb[0].mxu0
  %2653 = vmatprep.mubr.f32.mxu0 0.0
  %2654 = vmatmul.mubr.f32.gmra.mrb[0].mxu0 %v2578
  %v2655 = vpop.f32.mrb[0].mxu0
  %v2656 = vadd.f32 %v67, %v2655
  %v2657 = vpop.f32.mrb[0].mxu0
  %2658 = vdwg.mxu0
  %v2659 = vsel %vm426, %v2651, -inf
  %2660 = vmax.xlane.f32.xlu0 %v2659
  %v2661 = vpop.xlane.xlu0 %2660
  %v2662 = vsel %vm426, %v2656, -inf
  %2663 = vmax.xlane.f32.xlu0 %v2662
  %v2664 = vpop.xlane.xlu0 %2663
  %v2665 = vsub.f32 %v2651, %v2661
  %v2666 = vsub.f32 %v2656, %v2664
  %v2667 = vmul.f32 %v2665, 1.442695
  %v2668 = vpow.pop %v2667
  %v2669 = vmul.f32 %v2666, 1.442695
  %v2670 = vpow.pop %v2669
  %v2671 = vsel %vm426, %v2668, 0.0
  %2672 = vadd.xlane.f32.xlu0 %v2671
  %v2673 = vpop.xlane.xlu0 %2672
  %v2674 = vsel %vm426, %v2670, 0.0
  %2675 = vadd.xlane.f32.xlu0 %v2674
  %v2676 = vpop.xlane.xlu0 %2675
  %v2677 = vrcp.pop %v2673
  %v2678 = vrcp.pop %v2676
  %v2679 = vmul.f32 %v2668, %v2677
  %v2680 = vmul.f32 %v2670, %v2678
  %2681 = vrot.lane.b32.xlu0 %v1992, 112
  %v2682 = vpop.permute.xlu0 %2681
  %2683 = vrot.lane.b32.xlu0 %v1997, 112
  %v2684 = vpop.permute.xlu0 %2683
  %v2688 = vsel %vm426, %v2679, 0
  %v2691 = vsel %vm426, %v2680, 0
  %2693 = vmatprep.subr.mxu0 0.0
  %2694 = vmatpush1.msra.mxu0 %v2682
  %2695 = vmatprep.subr.mxu0 0.0
  %2696 = vmatpush1.msra.mxu0 %v2684
  %2697 = vmatprep.subr.mxu0 0.0
  %2698 = vmatpush1.msra.mxu0 0.0
  %2699 = vmatprep.subr.mxu0 0.0
  %2700 = vmatpush1.msra.mxu0 0.0
  %2701 = vmatprep.subr.mxu0 0.0
  %2702 = vmatpush1.msra.mxu0 0.0
  %2703 = vmatprep.subr.mxu0 0.0
  %2704 = vmatpush1.msra.mxu0 0.0
  %2705 = vmatprep.subr.mxu0 0.0
  %2706 = vmatpush1.msra.mxu0 0.0
  %2707 = vmatprep.subr.mxu0 0.0
  %2708 = vmatpush1.msra.mxu0 0.0
  %2709 = vmatprep.subr.mxu0 0.0
  %2710 = vmatpush1.msra.mxu0 0.0
  %2711 = vmatprep.subr.mxu0 0.0
  %2712 = vmatpush1.msra.mxu0 0.0
  %2713 = vmatprep.subr.mxu0 0.0
  %2714 = vmatpush1.msra.mxu0 0.0
  %2715 = vmatprep.subr.mxu0 0.0
  %2716 = vmatpush1.msra.mxu0 0.0
  %2717 = vmatprep.subr.mxu0 0.0
  %2718 = vmatpush1.msra.mxu0 0.0
  %2719 = vmatprep.subr.mxu0 0.0
  %2720 = vmatpush1.msra.mxu0 0.0
  %2721 = vmatprep.subr.mxu0 0.0
  %2722 = vmatpush1.msra.mxu0 0.0
  %2723 = vmatprep.subr.mxu0 0.0
  %2724 = vmatpush1.msra.mxu0 0.0
  %2725 = vmatprep.subr.mxu0 0.0
  %2726 = vmatpush1.msra.mxu0 0.0
  %2727 = vmatprep.subr.mxu0 0.0
  %2728 = vmatpush1.msra.mxu0 0.0
  %2729 = vmatprep.subr.mxu0 0.0
  %2730 = vmatpush1.msra.mxu0 0.0
  %2731 = vmatprep.subr.mxu0 0.0
  %2732 = vmatpush1.msra.mxu0 0.0
  %2733 = vmatprep.subr.mxu0 0.0
  %2734 = vmatpush1.msra.mxu0 0.0
  %2735 = vmatprep.subr.mxu0 0.0
  %2736 = vmatpush1.msra.mxu0 0.0
  %2737 = vmatprep.subr.mxu0 0.0
  %2738 = vmatpush1.msra.mxu0 0.0
  %2739 = vmatprep.subr.mxu0 0.0
  %2740 = vmatpush1.msra.mxu0 0.0
  %2741 = vmatprep.subr.mxu0 0.0
  %2742 = vmatpush1.msra.mxu0 0.0
  %2743 = vmatprep.subr.mxu0 0.0
  %2744 = vmatpush1.msra.mxu0 0.0
  %2745 = vmatprep.subr.mxu0 0.0
  %2746 = vmatpush1.msra.mxu0 0.0
  %2747 = vmatprep.subr.mxu0 0.0
  %2748 = vmatpush1.msra.mxu0 0.0
  %2749 = vmatprep.subr.mxu0 0.0
  %2750 = vmatpush1.msra.mxu0 0.0
  %2751 = vmatprep.subr.mxu0 0.0
  %2752 = vmatpush1.msra.mxu0 0.0
  %2753 = vmatprep.subr.mxu0 0.0
  %2754 = vmatpush1.msra.mxu0 0.0
  %2755 = vmatprep.subr.mxu0 0.0
  %2756 = vmatpush1.msra.mxu0 0.0
  %2757 = vmatprep.mubr.f32.mxu0 0.0
  %2758 = vmatmul.mubr.f32.gmra.mrb[0].mxu0 %v2688
  %v2759 = vpop.f32.mrb[0].mxu0
  %v2760 = vadd.f32 0.0, %v2759
  %v2761 = vpop.f32.mrb[0].mxu0
  %2762 = vmatprep.mubr.f32.mxu0 0.0
  %2763 = vmatmul.mubr.f32.gmra.mrb[0].mxu0 %v2691
  %v2764 = vpop.f32.mrb[0].mxu0
  %v2765 = vadd.f32 0.0, %v2764
  %v2766 = vpop.f32.mrb[0].mxu0
  %2767 = vdwg.mxu0
  %v2769 = vsel %vm338, %v2760, 0
  %v2772 = vsel %vm338, %v2765, 0
  %2774 = vmatprep.subr.mxu0 0.0
  %2775 = vmatpush1.msra.mxu0 %v1828
  %2776 = vmatprep.subr.mxu0 0.0
  %2777 = vmatpush1.msra.mxu0 0.0
  %2778 = vmatprep.subr.mxu0 0.0
  %2779 = vmatpush1.msra.mxu0 0.0
  %2780 = vmatprep.subr.mxu0 0.0
  %2781 = vmatpush1.msra.mxu0 0.0
  %2782 = vmatprep.subr.mxu0 0.0
  %2783 = vmatpush1.msra.mxu0 0.0
  %2784 = vmatprep.subr.mxu0 0.0
  %2785 = vmatpush1.msra.mxu0 0.0
  %2786 = vmatprep.subr.mxu0 0.0
  %2787 = vmatpush1.msra.mxu0 0.0
  %2788 = vmatprep.subr.mxu0 0.0
  %2789 = vmatpush1.msra.mxu0 0.0
  %2790 = vmatprep.subr.mxu0 0.0
  %2791 = vmatpush1.msra.mxu0 0.0
  %2792 = vmatprep.subr.mxu0 0.0
  %2793 = vmatpush1.msra.mxu0 0.0
  %2794 = vmatprep.subr.mxu0 0.0
  %2795 = vmatpush1.msra.mxu0 0.0
  %2796 = vmatprep.subr.mxu0 0.0
  %2797 = vmatpush1.msra.mxu0 0.0
  %2798 = vmatprep.subr.mxu0 0.0
  %2799 = vmatpush1.msra.mxu0 0.0
  %2800 = vmatprep.subr.mxu0 0.0
  %2801 = vmatpush1.msra.mxu0 0.0
  %2802 = vmatprep.subr.mxu0 0.0
  %2803 = vmatpush1.msra.mxu0 0.0
  %2804 = vmatprep.subr.mxu0 0.0
  %2805 = vmatpush1.msra.mxu0 0.0
  %2806 = vmatprep.subr.mxu0 0.0
  %2807 = vmatpush1.msra.mxu0 0.0
  %2808 = vmatprep.subr.mxu0 0.0
  %2809 = vmatpush1.msra.mxu0 0.0
  %2810 = vmatprep.subr.mxu0 0.0
  %2811 = vmatpush1.msra.mxu0 0.0
  %2812 = vmatprep.subr.mxu0 0.0
  %2813 = vmatpush1.msra.mxu0 0.0
  %2814 = vmatprep.subr.mxu0 0.0
  %2815 = vmatpush1.msra.mxu0 0.0
  %2816 = vmatprep.subr.mxu0 0.0
  %2817 = vmatpush1.msra.mxu0 0.0
  %2818 = vmatprep.subr.mxu0 0.0
  %2819 = vmatpush1.msra.mxu0 0.0
  %2820 = vmatprep.subr.mxu0 0.0
  %2821 = vmatpush1.msra.mxu0 0.0
  %2822 = vmatprep.subr.mxu0 0.0
  %2823 = vmatpush1.msra.mxu0 0.0
  %2824 = vmatprep.subr.mxu0 0.0
  %2825 = vmatpush1.msra.mxu0 0.0
  %2826 = vmatprep.subr.mxu0 0.0
  %2827 = vmatpush1.msra.mxu0 0.0
  %2828 = vmatprep.subr.mxu0 0.0
  %2829 = vmatpush1.msra.mxu0 0.0
  %2830 = vmatprep.subr.mxu0 0.0
  %2831 = vmatpush1.msra.mxu0 0.0
  %2832 = vmatprep.subr.mxu0 0.0
  %2833 = vmatpush1.msra.mxu0 0.0
  %2834 = vmatprep.subr.mxu0 0.0
  %2835 = vmatpush1.msra.mxu0 0.0
  %2836 = vmatprep.subr.mxu0 0.0
  %2837 = vmatpush1.msra.mxu0 0.0
  %2838 = vmatprep.mubr.f32.mxu0 0.0
  %2839 = vmatmul.mubr.f32.gmra.mrb[0].mxu0 %v2769
  %v2840 = vpop.f32.mrb[0].mxu0
  %v2841 = vadd.f32 0.0, %v2840
  %v2842 = vpop.f32.mrb[0].mxu0
  %2843 = vmatprep.mubr.f32.mxu0 0.0
  %2844 = vmatmul.mubr.f32.gmra.mrb[0].mxu0 %v2772
  %v2845 = vpop.f32.mrb[0].mxu0
  %v2846 = vadd.f32 0.0, %v2845
  %v2847 = vpop.f32.mrb[0].mxu0
  %2848 = vdwg.mxu0
  %v2849 = vadd.f32 %v2566, %v2841
  %v2850 = vadd.f32 %v2567, %v2846
  %2851 = vrot.lane.b32.xlu0 %v2000, 104
  %v2852 = vpop.permute.xlu0 %2851
  %2853 = vrot.lane.b32.xlu0 %v2001, 104
  %v2854 = vpop.permute.xlu0 %2853
  %2855 = vrot.lane.b32.xlu0 %v1917, 104
  %v2856 = vpop.permute.xlu0 %2855
  %2857 = vrot.lane.b32.xlu0 %v1923, 104
  %v2858 = vpop.permute.xlu0 %2857
  %v2859 = vsel %vm338, %v2852, 0
  %v2861 = vsel %vm338, %v2854, 0
  %v2863 = vsel %vm338, %v2856, 0
  %v2865 = vsel %vm338, %v2858, 0
  %2867 = vmatprep.subr.mxu0 0.0
  %2868 = vmatpush1.xpose.msra.mxu0 %v2863
  %2869 = vmatprep.subr.mxu0 0.0
  %2870 = vmatpush1.xpose.msra.mxu0 %v2865
  %2871 = vmatprep.subr.mxu0 0.0
  %2872 = vmatpush1.xpose.msra.mxu0 0.0
  %2873 = vmatprep.subr.mxu0 0.0
  %2874 = vmatpush1.xpose.msra.mxu0 0.0
  %2875 = vmatprep.subr.mxu0 0.0
  %2876 = vmatpush1.xpose.msra.mxu0 0.0
  %2877 = vmatprep.subr.mxu0 0.0
  %2878 = vmatpush1.xpose.msra.mxu0 0.0
  %2879 = vmatprep.subr.mxu0 0.0
  %2880 = vmatpush1.xpose.msra.mxu0 0.0
  %2881 = vmatprep.subr.mxu0 0.0
  %2882 = vmatpush1.xpose.msra.mxu0 0.0
  %2883 = vmatprep.subr.mxu0 0.0
  %2884 = vmatpush1.xpose.msra.mxu0 0.0
  %2885 = vmatprep.subr.mxu0 0.0
  %2886 = vmatpush1.xpose.msra.mxu0 0.0
  %2887 = vmatprep.subr.mxu0 0.0
  %2888 = vmatpush1.xpose.msra.mxu0 0.0
  %2889 = vmatprep.subr.mxu0 0.0
  %2890 = vmatpush1.xpose.msra.mxu0 0.0
  %2891 = vmatprep.subr.mxu0 0.0
  %2892 = vmatpush1.xpose.msra.mxu0 0.0
  %2893 = vmatprep.subr.mxu0 0.0
  %2894 = vmatpush1.xpose.msra.mxu0 0.0
  %2895 = vmatprep.subr.mxu0 0.0
  %2896 = vmatpush1.xpose.msra.mxu0 0.0
  %2897 = vmatprep.subr.mxu0 0.0
  %2898 = vmatpush1.xpose.msra.mxu0 0.0
  %2899 = vmatprep.subr.mxu0 0.0
  %2900 = vmatpush1.xpose.msra.mxu0 0.0
  %2901 = vmatprep.subr.mxu0 0.0
  %2902 = vmatpush1.xpose.msra.mxu0 0.0
  %2903 = vmatprep.subr.mxu0 0.0
  %2904 = vmatpush1.xpose.msra.mxu0 0.0
  %2905 = vmatprep.subr.mxu0 0.0
  %2906 = vmatpush1.xpose.msra.mxu0 0.0
  %2907 = vmatprep.subr.mxu0 0.0
  %2908 = vmatpush1.xpose.msra.mxu0 0.0
  %2909 = vmatprep.subr.mxu0 0.0
  %2910 = vmatpush1.xpose.msra.mxu0 0.0
  %2911 = vmatprep.subr.mxu0 0.0
  %2912 = vmatpush1.xpose.msra.mxu0 0.0
  %2913 = vmatprep.subr.mxu0 0.0
  %2914 = vmatpush1.xpose.msra.mxu0 0.0
  %2915 = vmatprep.subr.mxu0 0.0
  %2916 = vmatpush1.xpose.msra.mxu0 0.0
  %2917 = vmatprep.subr.mxu0 0.0
  %2918 = vmatpush1.xpose.msra.mxu0 0.0
  %2919 = vmatprep.subr.mxu0 0.0
  %2920 = vmatpush1.xpose.msra.mxu0 0.0
  %2921 = vmatprep.subr.mxu0 0.0
  %2922 = vmatpush1.xpose.msra.mxu0 0.0
  %2923 = vmatprep.subr.mxu0 0.0
  %2924 = vmatpush1.xpose.msra.mxu0 0.0
  %2925 = vmatprep.subr.mxu0 0.0
  %2926 = vmatpush1.xpose.msra.mxu0 0.0
  %2927 = vmatprep.subr.mxu0 0.0
  %2928 = vmatpush1.xpose.msra.mxu0 0.0
  %2929 = vmatprep.subr.mxu0 0.0
  %2930 = vmatpush1.xpose.msra.mxu0 0.0
  %2931 = vmatprep.mubr.f32.mxu0 0.0
  %2932 = vmatmul.mubr.f32.gmra.mrb[0].mxu0 %v2859
  %v2933 = vpop.f32.mrb[0].mxu0
  %v2934 = vadd.f32 %v66, %v2933
  %v2935 = vpop.f32.mrb[0].mxu0
  %2936 = vmatprep.mubr.f32.mxu0 0.0
  %2937 = vmatmul.mubr.f32.gmra.mrb[0].mxu0 %v2861
  %v2938 = vpop.f32.mrb[0].mxu0
  %v2939 = vadd.f32 %v67, %v2938
  %v2940 = vpop.f32.mrb[0].mxu0
  %2941 = vdwg.mxu0
  %v2942 = vsel %vm426, %v2934, -inf
  %2943 = vmax.xlane.f32.xlu0 %v2942
  %v2944 = vpop.xlane.xlu0 %2943
  %v2945 = vsel %vm426, %v2939, -inf
  %2946 = vmax.xlane.f32.xlu0 %v2945
  %v2947 = vpop.xlane.xlu0 %2946
  %v2948 = vsub.f32 %v2934, %v2944
  %v2949 = vsub.f32 %v2939, %v2947
  %v2950 = vmul.f32 %v2948, 1.442695
  %v2951 = vpow.pop %v2950
  %v2952 = vmul.f32 %v2949, 1.442695
  %v2953 = vpow.pop %v2952
  %v2954 = vsel %vm426, %v2951, 0.0
  %2955 = vadd.xlane.f32.xlu0 %v2954
  %v2956 = vpop.xlane.xlu0 %2955
  %v2957 = vsel %vm426, %v2953, 0.0
  %2958 = vadd.xlane.f32.xlu0 %v2957
  %v2959 = vpop.xlane.xlu0 %2958
  %v2960 = vrcp.pop %v2956
  %v2961 = vrcp.pop %v2959
  %v2962 = vmul.f32 %v2951, %v2960
  %v2963 = vmul.f32 %v2953, %v2961
  %2964 = vrot.lane.b32.xlu0 %v1992, 104
  %v2965 = vpop.permute.xlu0 %2964
  %2966 = vrot.lane.b32.xlu0 %v1997, 104
  %v2967 = vpop.permute.xlu0 %2966
  %v2971 = vsel %vm426, %v2962, 0
  %v2974 = vsel %vm426, %v2963, 0
  %2976 = vmatprep.subr.mxu0 0.0
  %2977 = vmatpush1.msra.mxu0 %v2965
  %2978 = vmatprep.subr.mxu0 0.0
  %2979 = vmatpush1.msra.mxu0 %v2967
  %2980 = vmatprep.subr.mxu0 0.0
  %2981 = vmatpush1.msra.mxu0 0.0
  %2982 = vmatprep.subr.mxu0 0.0
  %2983 = vmatpush1.msra.mxu0 0.0
  %2984 = vmatprep.subr.mxu0 0.0
  %2985 = vmatpush1.msra.mxu0 0.0
  %2986 = vmatprep.subr.mxu0 0.0
  %2987 = vmatpush1.msra.mxu0 0.0
  %2988 = vmatprep.subr.mxu0 0.0
  %2989 = vmatpush1.msra.mxu0 0.0
  %2990 = vmatprep.subr.mxu0 0.0
  %2991 = vmatpush1.msra.mxu0 0.0
  %2992 = vmatprep.subr.mxu0 0.0
  %2993 = vmatpush1.msra.mxu0 0.0
  %2994 = vmatprep.subr.mxu0 0.0
  %2995 = vmatpush1.msra.mxu0 0.0
  %2996 = vmatprep.subr.mxu0 0.0
  %2997 = vmatpush1.msra.mxu0 0.0
  %2998 = vmatprep.subr.mxu0 0.0
  %2999 = vmatpush1.msra.mxu0 0.0
  %3000 = vmatprep.subr.mxu0 0.0
  %3001 = vmatpush1.msra.mxu0 0.0
  %3002 = vmatprep.subr.mxu0 0.0
  %3003 = vmatpush1.msra.mxu0 0.0
  %3004 = vmatprep.subr.mxu0 0.0
  %3005 = vmatpush1.msra.mxu0 0.0
  %3006 = vmatprep.subr.mxu0 0.0
  %3007 = vmatpush1.msra.mxu0 0.0
  %3008 = vmatprep.subr.mxu0 0.0
  %3009 = vmatpush1.msra.mxu0 0.0
  %3010 = vmatprep.subr.mxu0 0.0
  %3011 = vmatpush1.msra.mxu0 0.0
  %3012 = vmatprep.subr.mxu0 0.0
  %3013 = vmatpush1.msra.mxu0 0.0
  %3014 = vmatprep.subr.mxu0 0.0
  %3015 = vmatpush1.msra.mxu0 0.0
  %3016 = vmatprep.subr.mxu0 0.0
  %3017 = vmatpush1.msra.mxu0 0.0
  %3018 = vmatprep.subr.mxu0 0.0
  %3019 = vmatpush1.msra.mxu0 0.0
  %3020 = vmatprep.subr.mxu0 0.0
  %3021 = vmatpush1.msra.mxu0 0.0
  %3022 = vmatprep.subr.mxu0 0.0
  %3023 = vmatpush1.msra.mxu0 0.0
  %3024 = vmatprep.subr.mxu0 0.0
  %3025 = vmatpush1.msra.mxu0 0.0
  %3026 = vmatprep.subr.mxu0 0.0
  %3027 = vmatpush1.msra.mxu0 0.0
  %3028 = vmatprep.subr.mxu0 0.0
  %3029 = vmatpush1.msra.mxu0 0.0
  %3030 = vmatprep.subr.mxu0 0.0
  %3031 = vmatpush1.msra.mxu0 0.0
  %3032 = vmatprep.subr.mxu0 0.0
  %3033 = vmatpush1.msra.mxu0 0.0
  %3034 = vmatprep.subr.mxu0 0.0
  %3035 = vmatpush1.msra.mxu0 0.0
  %3036 = vmatprep.subr.mxu0 0.0
  %3037 = vmatpush1.msra.mxu0 0.0
  %3038 = vmatprep.subr.mxu0 0.0
  %3039 = vmatpush1.msra.mxu0 0.0
  %3040 = vmatprep.mubr.f32.mxu0 0.0
  %3041 = vmatmul.mubr.f32.gmra.mrb[0].mxu0 %v2971
  %v3042 = vpop.f32.mrb[0].mxu0
  %v3043 = vadd.f32 0.0, %v3042
  %v3044 = vpop.f32.mrb[0].mxu0
  %3045 = vmatprep.mubr.f32.mxu0 0.0
  %3046 = vmatmul.mubr.f32.gmra.mrb[0].mxu0 %v2974
  %v3047 = vpop.f32.mrb[0].mxu0
  %v3048 = vadd.f32 0.0, %v3047
  %v3049 = vpop.f32.mrb[0].mxu0
  %3050 = vdwg.mxu0
  %v3052 = vsel %vm338, %v3043, 0
  %v3055 = vsel %vm338, %v3048, 0
  %3057 = vmatprep.subr.mxu0 0.0
  %3058 = vmatpush1.msra.mxu0 %v1829
  %3059 = vmatprep.subr.mxu0 0.0
  %3060 = vmatpush1.msra.mxu0 0.0
  %3061 = vmatprep.subr.mxu0 0.0
  %3062 = vmatpush1.msra.mxu0 0.0
  %3063 = vmatprep.subr.mxu0 0.0
  %3064 = vmatpush1.msra.mxu0 0.0
  %3065 = vmatprep.subr.mxu0 0.0
  %3066 = vmatpush1.msra.mxu0 0.0
  %3067 = vmatprep.subr.mxu0 0.0
  %3068 = vmatpush1.msra.mxu0 0.0
  %3069 = vmatprep.subr.mxu0 0.0
  %3070 = vmatpush1.msra.mxu0 0.0
  %3071 = vmatprep.subr.mxu0 0.0
  %3072 = vmatpush1.msra.mxu0 0.0
  %3073 = vmatprep.subr.mxu0 0.0
  %3074 = vmatpush1.msra.mxu0 0.0
  %3075 = vmatprep.subr.mxu0 0.0
  %3076 = vmatpush1.msra.mxu0 0.0
  %3077 = vmatprep.subr.mxu0 0.0
  %3078 = vmatpush1.msra.mxu0 0.0
  %3079 = vmatprep.subr.mxu0 0.0
  %3080 = vmatpush1.msra.mxu0 0.0
  %3081 = vmatprep.subr.mxu0 0.0
  %3082 = vmatpush1.msra.mxu0 0.0
  %3083 = vmatprep.subr.mxu0 0.0
  %3084 = vmatpush1.msra.mxu0 0.0
  %3085 = vmatprep.subr.mxu0 0.0
  %3086 = vmatpush1.msra.mxu0 0.0
  %3087 = vmatprep.subr.mxu0 0.0
  %3088 = vmatpush1.msra.mxu0 0.0
  %3089 = vmatprep.subr.mxu0 0.0
  %3090 = vmatpush1.msra.mxu0 0.0
  %3091 = vmatprep.subr.mxu0 0.0
  %3092 = vmatpush1.msra.mxu0 0.0
  %3093 = vmatprep.subr.mxu0 0.0
  %3094 = vmatpush1.msra.mxu0 0.0
  %3095 = vmatprep.subr.mxu0 0.0
  %3096 = vmatpush1.msra.mxu0 0.0
  %3097 = vmatprep.subr.mxu0 0.0
  %3098 = vmatpush1.msra.mxu0 0.0
  %3099 = vmatprep.subr.mxu0 0.0
  %3100 = vmatpush1.msra.mxu0 0.0
  %3101 = vmatprep.subr.mxu0 0.0
  %3102 = vmatpush1.msra.mxu0 0.0
  %3103 = vmatprep.subr.mxu0 0.0
  %3104 = vmatpush1.msra.mxu0 0.0
  %3105 = vmatprep.subr.mxu0 0.0
  %3106 = vmatpush1.msra.mxu0 0.0
  %3107 = vmatprep.subr.mxu0 0.0
  %3108 = vmatpush1.msra.mxu0 0.0
  %3109 = vmatprep.subr.mxu0 0.0
  %3110 = vmatpush1.msra.mxu0 0.0
  %3111 = vmatprep.subr.mxu0 0.0
  %3112 = vmatpush1.msra.mxu0 0.0
  %3113 = vmatprep.subr.mxu0 0.0
  %3114 = vmatpush1.msra.mxu0 0.0
  %3115 = vmatprep.subr.mxu0 0.0
  %3116 = vmatpush1.msra.mxu0 0.0
  %3117 = vmatprep.subr.mxu0 0.0
  %3118 = vmatpush1.msra.mxu0 0.0
  %3119 = vmatprep.subr.mxu0 0.0
  %3120 = vmatpush1.msra.mxu0 0.0
  %3121 = vmatprep.mubr.f32.mxu0 0.0
  %3122 = vmatmul.mubr.f32.gmra.mrb[0].mxu0 %v3052
  %v3123 = vpop.f32.mrb[0].mxu0
  %v3124 = vadd.f32 0.0, %v3123
  %v3125 = vpop.f32.mrb[0].mxu0
  %3126 = vmatprep.mubr.f32.mxu0 0.0
  %3127 = vmatmul.mubr.f32.gmra.mrb[0].mxu0 %v3055
  %v3128 = vpop.f32.mrb[0].mxu0
  %v3129 = vadd.f32 0.0, %v3128
  %v3130 = vpop.f32.mrb[0].mxu0
  %3131 = vdwg.mxu0
  %v3132 = vadd.f32 %v2849, %v3124
  %v3133 = vadd.f32 %v2850, %v3129
  %v3134 = vadd.f32 %v1774, %v3132
  %v3135 = vadd.f32 %v1775, %v3133
  %s3136 = scalar_lea.vmem %s8, 1
  %v3137 = vld [vmem:[%s3136] sm:$0x1]
  %s3138 = scalar_lea.vmem %s9, 1
  %v3139 = vld [vmem:[%s3138] sm:$0x1]
  %v3140 = vmul.f32 %v3134, %v65
  %v3141 = vmul.f32 %v3135, %v65
  %3142 = vadd.xlane.f32.xlu0 %v3140
  %v3143 = vpop.xlane.xlu0 %3142
  %3144 = vadd.xlane.f32.xlu0 %v3141
  %v3145 = vpop.xlane.xlu0 %3144
  %v3146 = vmul.f32 %v3143, 0.03125
  %v3147 = vmul.f32 %v3145, 0.03125
  %v3148 = vsub.f32 %v3140, %v3146
  %v3149 = vsub.f32 %v3141, %v3147
  %v3150 = vmul.f32 %v3148, %v65
  %v3151 = vmul.f32 %v3149, %v65
  %v3152 = vmul.f32 %v3150, %v3150
  %v3153 = vmul.f32 %v3151, %v3151
  %3154 = vadd.xlane.f32.xlu0 %v3152
  %v3155 = vpop.xlane.xlu0 %3154
  %3156 = vadd.xlane.f32.xlu0 %v3153
  %v3157 = vpop.xlane.xlu0 %3156
  %v3158 = vmul.f32 %v3155, 0.03125
  %v3159 = vmul.f32 %v3157, 0.03125
  %v3160 = vadd.f32 %v3158, 1e-12
  %v3161 = vadd.f32 %v3159, 1e-12
  %v3162 = vrsqrt.pop %v3160
  %v3163 = vrsqrt.pop %v3161
  %v3164 = vmul.f32 %v3150, %v3162
  %v3165 = vmul.f32 %v3151, %v3163
  %v3167 = vlaneseq
  %v3168 = vshrl.u32 %v3167, 7
  %v3169 = vsub.s32 0, %v3168
  %v3170 = vrot.slane %v3137, %v3169
  %v3172 = vmul.f32 %v3164, %v3170
  %v3173 = vmul.f32 %v3165, %v3170
  %v3175 = vlaneseq
  %v3176 = vshrl.u32 %v3175, 7
  %v3177 = vsub.s32 0, %v3176
  %v3178 = vrot.slane %v3139, %v3177
  %v3180 = vadd.f32 %v3172, %v3178
  %v3181 = vadd.f32 %v3173, %v3178
  %s3182 = scalar_lea.vmem %s10, 128
  %v3183 = vld [vmem:[%s3182] sm:$0xff]
  %v3184 = vld [vmem:[%s3182 + $0x8] sm:$0xff]
  %v3185 = vld [vmem:[%s3182 + $0x10] sm:$0xff]
  %v3186 = vld [vmem:[%s3182 + $0x18] sm:$0xff]
  %v3187 = vld [vmem:[%s3182 + $0x20] sm:$0xff]
  %v3188 = vld [vmem:[%s3182 + $0x28] sm:$0xff]
  %v3189 = vld [vmem:[%s3182 + $0x30] sm:$0xff]
  %v3190 = vld [vmem:[%s3182 + $0x38] sm:$0xff]
  %v3191 = vld [vmem:[%s3182 + $0x40] sm:$0xff]
  %v3192 = vld [vmem:[%s3182 + $0x48] sm:$0xff]
  %v3193 = vld [vmem:[%s3182 + $0x50] sm:$0xff]
  %v3194 = vld [vmem:[%s3182 + $0x58] sm:$0xff]
  %v3195 = vld [vmem:[%s3182 + $0x60] sm:$0xff]
  %v3196 = vld [vmem:[%s3182 + $0x68] sm:$0xff]
  %v3197 = vld [vmem:[%s3182 + $0x70] sm:$0xff]
  %v3198 = vld [vmem:[%s3182 + $0x78] sm:$0xff]
  %s3199 = scalar_lea.vmem %s11, 1
  %v3200 = vld [vmem:[%s3199] sm:$0x1]
  %v3202 = vlaneseq
  %v3203 = vshrl.u32 %v3202, 7
  %v3204 = vsub.s32 0, %v3203
  %v3205 = vrot.slane %v3200, %v3204
  %3207 = vmatprep.subr.mxu0 0.0
  %3208 = vmatpush1.msra.mxu0 %v3183
  %3209 = vmatprep.subr.mxu0 0.0
  %3210 = vmatpush1.msra.mxu0 %v3184
  %3211 = vmatprep.subr.mxu0 0.0
  %3212 = vmatpush1.msra.mxu0 %v3185
  %3213 = vmatprep.subr.mxu0 0.0
  %3214 = vmatpush1.msra.mxu0 %v3186
  %3215 = vmatprep.subr.mxu0 0.0
  %3216 = vmatpush1.msra.mxu0 %v3187
  %3217 = vmatprep.subr.mxu0 0.0
  %3218 = vmatpush1.msra.mxu0 %v3188
  %3219 = vmatprep.subr.mxu0 0.0
  %3220 = vmatpush1.msra.mxu0 %v3189
  %3221 = vmatprep.subr.mxu0 0.0
  %3222 = vmatpush1.msra.mxu0 %v3190
  %3223 = vmatprep.subr.mxu0 0.0
  %3224 = vmatpush1.msra.mxu0 %v3191
  %3225 = vmatprep.subr.mxu0 0.0
  %3226 = vmatpush1.msra.mxu0 %v3192
  %3227 = vmatprep.subr.mxu0 0.0
  %3228 = vmatpush1.msra.mxu0 %v3193
  %3229 = vmatprep.subr.mxu0 0.0
  %3230 = vmatpush1.msra.mxu0 %v3194
  %3231 = vmatprep.subr.mxu0 0.0
  %3232 = vmatpush1.msra.mxu0 %v3195
  %3233 = vmatprep.subr.mxu0 0.0
  %3234 = vmatpush1.msra.mxu0 %v3196
  %3235 = vmatprep.subr.mxu0 0.0
  %3236 = vmatpush1.msra.mxu0 %v3197
  %3237 = vmatprep.subr.mxu0 0.0
  %3238 = vmatpush1.msra.mxu0 %v3198
  %3239 = vmatprep.subr.mxu0 0.0
  %3240 = vmatpush1.msra.mxu0 0.0
  %3241 = vmatprep.subr.mxu0 0.0
  %3242 = vmatpush1.msra.mxu0 0.0
  %3243 = vmatprep.subr.mxu0 0.0
  %3244 = vmatpush1.msra.mxu0 0.0
  %3245 = vmatprep.subr.mxu0 0.0
  %3246 = vmatpush1.msra.mxu0 0.0
  %3247 = vmatprep.subr.mxu0 0.0
  %3248 = vmatpush1.msra.mxu0 0.0
  %3249 = vmatprep.subr.mxu0 0.0
  %3250 = vmatpush1.msra.mxu0 0.0
  %3251 = vmatprep.subr.mxu0 0.0
  %3252 = vmatpush1.msra.mxu0 0.0
  %3253 = vmatprep.subr.mxu0 0.0
  %3254 = vmatpush1.msra.mxu0 0.0
  %3255 = vmatprep.subr.mxu0 0.0
  %3256 = vmatpush1.msra.mxu0 0.0
  %3257 = vmatprep.subr.mxu0 0.0
  %3258 = vmatpush1.msra.mxu0 0.0
  %3259 = vmatprep.subr.mxu0 0.0
  %3260 = vmatpush1.msra.mxu0 0.0
  %3261 = vmatprep.subr.mxu0 0.0
  %3262 = vmatpush1.msra.mxu0 0.0
  %3263 = vmatprep.subr.mxu0 0.0
  %3264 = vmatpush1.msra.mxu0 0.0
  %3265 = vmatprep.subr.mxu0 0.0
  %3266 = vmatpush1.msra.mxu0 0.0
  %3267 = vmatprep.subr.mxu0 0.0
  %3268 = vmatpush1.msra.mxu0 0.0
  %3269 = vmatprep.subr.mxu0 0.0
  %3270 = vmatpush1.msra.mxu0 0.0
  %3271 = vmatprep.mubr.f32.mxu0 0.0
  %3272 = vmatmul.mubr.f32.gmra.mrb[0].mxu0 %v3180
  %v3273 = vpop.f32.mrb[0].mxu0
  %v3274 = vadd.f32 %v3205, %v3273
  %v3275 = vpop.f32.mrb[0].mxu0
  %3276 = vmatprep.mubr.f32.mxu0 0.0
  %3277 = vmatmul.mubr.f32.gmra.mrb[0].mxu0 %v3181
  %v3278 = vpop.f32.mrb[0].mxu0
  %v3279 = vadd.f32 %v3205, %v3278
  %v3280 = vpop.f32.mrb[0].mxu0
  %3281 = vdwg.mxu0
  %v3282 = vmul.f32 %v3274, 0.5
  %v3283 = vmul.f32 %v3279, 0.5
  %v3284 = vmul.f32 %v3274, 0.044715
  %v3285 = vmul.f32 %v3279, 0.044715
  %v3286 = vmul.f32 %v3284, %v3274
  %v3287 = vmul.f32 %v3285, %v3279
  %v3288 = vmul.f32 %v3286, %v3274
  %v3289 = vmul.f32 %v3287, %v3279
  %v3290 = vadd.f32 %v3274, %v3288
  %v3291 = vadd.f32 %v3279, %v3289
  %v3292 = vmul.f32 %v3290, 0.7978846
  %v3293 = vmul.f32 %v3291, 0.7978846
  %v3294 = vtanh.pop %v3292
  %v3295 = vtanh.pop %v3293
  %v3296 = vadd.f32 %v3294, 1.0
  %v3297 = vadd.f32 %v3295, 1.0
  %v3298 = vmul.f32 %v3282, %v3296
  %v3299 = vmul.f32 %v3283, %v3297
  %s3300 = scalar_lea.vmem %s12, 128
  %v3301 = vld [vmem:[%s3300] sm:$0xff]
  %v3302 = vld [vmem:[%s3300 + $0x8] sm:$0xff]
  %v3303 = vld [vmem:[%s3300 + $0x10] sm:$0xff]
  %v3304 = vld [vmem:[%s3300 + $0x18] sm:$0xff]
  %v3305 = vld [vmem:[%s3300 + $0x20] sm:$0xff]
  %v3306 = vld [vmem:[%s3300 + $0x28] sm:$0xff]
  %v3307 = vld [vmem:[%s3300 + $0x30] sm:$0xff]
  %v3308 = vld [vmem:[%s3300 + $0x38] sm:$0xff]
  %v3309 = vld [vmem:[%s3300 + $0x40] sm:$0xff]
  %v3310 = vld [vmem:[%s3300 + $0x48] sm:$0xff]
  %v3311 = vld [vmem:[%s3300 + $0x50] sm:$0xff]
  %v3312 = vld [vmem:[%s3300 + $0x58] sm:$0xff]
  %v3313 = vld [vmem:[%s3300 + $0x60] sm:$0xff]
  %v3314 = vld [vmem:[%s3300 + $0x68] sm:$0xff]
  %v3315 = vld [vmem:[%s3300 + $0x70] sm:$0xff]
  %v3316 = vld [vmem:[%s3300 + $0x78] sm:$0xff]
  %s3317 = scalar_lea.vmem %s13, 1
  %v3318 = vld [vmem:[%s3317] sm:$0x1]
  %v3320 = vlaneseq
  %v3321 = vshrl.u32 %v3320, 7
  %v3322 = vsub.s32 0, %v3321
  %v3323 = vrot.slane %v3318, %v3322
  %3325 = vmatprep.subr.mxu0 0.0
  %3326 = vmatpush1.msra.mxu0 %v3301
  %3327 = vmatprep.subr.mxu0 0.0
  %3328 = vmatpush1.msra.mxu0 %v3302
  %3329 = vmatprep.subr.mxu0 0.0
  %3330 = vmatpush1.msra.mxu0 %v3303
  %3331 = vmatprep.subr.mxu0 0.0
  %3332 = vmatpush1.msra.mxu0 %v3304
  %3333 = vmatprep.subr.mxu0 0.0
  %3334 = vmatpush1.msra.mxu0 %v3305
  %3335 = vmatprep.subr.mxu0 0.0
  %3336 = vmatpush1.msra.mxu0 %v3306
  %3337 = vmatprep.subr.mxu0 0.0
  %3338 = vmatpush1.msra.mxu0 %v3307
  %3339 = vmatprep.subr.mxu0 0.0
  %3340 = vmatpush1.msra.mxu0 %v3308
  %3341 = vmatprep.subr.mxu0 0.0
  %3342 = vmatpush1.msra.mxu0 %v3309
  %3343 = vmatprep.subr.mxu0 0.0
  %3344 = vmatpush1.msra.mxu0 %v3310
  %3345 = vmatprep.subr.mxu0 0.0
  %3346 = vmatpush1.msra.mxu0 %v3311
  %3347 = vmatprep.subr.mxu0 0.0
  %3348 = vmatpush1.msra.mxu0 %v3312
  %3349 = vmatprep.subr.mxu0 0.0
  %3350 = vmatpush1.msra.mxu0 %v3313
  %3351 = vmatprep.subr.mxu0 0.0
  %3352 = vmatpush1.msra.mxu0 %v3314
  %3353 = vmatprep.subr.mxu0 0.0
  %3354 = vmatpush1.msra.mxu0 %v3315
  %3355 = vmatprep.subr.mxu0 0.0
  %3356 = vmatpush1.msra.mxu0 %v3316
  %3357 = vmatprep.subr.mxu0 0.0
  %3358 = vmatpush1.msra.mxu0 0.0
  %3359 = vmatprep.subr.mxu0 0.0
  %3360 = vmatpush1.msra.mxu0 0.0
  %3361 = vmatprep.subr.mxu0 0.0
  %3362 = vmatpush1.msra.mxu0 0.0
  %3363 = vmatprep.subr.mxu0 0.0
  %3364 = vmatpush1.msra.mxu0 0.0
  %3365 = vmatprep.subr.mxu0 0.0
  %3366 = vmatpush1.msra.mxu0 0.0
  %3367 = vmatprep.subr.mxu0 0.0
  %3368 = vmatpush1.msra.mxu0 0.0
  %3369 = vmatprep.subr.mxu0 0.0
  %3370 = vmatpush1.msra.mxu0 0.0
  %3371 = vmatprep.subr.mxu0 0.0
  %3372 = vmatpush1.msra.mxu0 0.0
  %3373 = vmatprep.subr.mxu0 0.0
  %3374 = vmatpush1.msra.mxu0 0.0
  %3375 = vmatprep.subr.mxu0 0.0
  %3376 = vmatpush1.msra.mxu0 0.0
  %3377 = vmatprep.subr.mxu0 0.0
  %3378 = vmatpush1.msra.mxu0 0.0
  %3379 = vmatprep.subr.mxu0 0.0
  %3380 = vmatpush1.msra.mxu0 0.0
  %3381 = vmatprep.subr.mxu0 0.0
  %3382 = vmatpush1.msra.mxu0 0.0
  %3383 = vmatprep.subr.mxu0 0.0
  %3384 = vmatpush1.msra.mxu0 0.0
  %3385 = vmatprep.subr.mxu0 0.0
  %3386 = vmatpush1.msra.mxu0 0.0
  %3387 = vmatprep.subr.mxu0 0.0
  %3388 = vmatpush1.msra.mxu0 0.0
  %3389 = vmatprep.mubr.f32.mxu0 0.0
  %3390 = vmatmul.mubr.f32.gmra.mrb[0].mxu0 %v3298
  %v3391 = vpop.f32.mrb[0].mxu0
  %v3392 = vadd.f32 %v3323, %v3391
  %v3393 = vpop.f32.mrb[0].mxu0
  %3394 = vmatprep.mubr.f32.mxu0 0.0
  %3395 = vmatmul.mubr.f32.gmra.mrb[0].mxu0 %v3299
  %v3396 = vpop.f32.mrb[0].mxu0
  %v3397 = vadd.f32 %v3323, %v3396
  %v3398 = vpop.f32.mrb[0].mxu0
  %3399 = vdwg.mxu0
  %v3400 = vadd.f32 %v3180, %v3392
  %v3401 = vadd.f32 %v3181, %v3397
  %s3402 = scalar_lea.vmem %s14, 1
  %v3403 = vld [vmem:[%s3402] sm:$0x1]
  %s3404 = scalar_lea.vmem %s15, 1
  %v3405 = vld [vmem:[%s3404] sm:$0x1]
  %v3406 = vmul.f32 %v3400, %v65
  %v3407 = vmul.f32 %v3401, %v65
  %3408 = vadd.xlane.f32.xlu0 %v3406
  %v3409 = vpop.xlane.xlu0 %3408
  %3410 = vadd.xlane.f32.xlu0 %v3407
  %v3411 = vpop.xlane.xlu0 %3410
  %v3412 = vmul.f32 %v3409, 0.03125
  %v3413 = vmul.f32 %v3411, 0.03125
  %v3414 = vsub.f32 %v3406, %v3412
  %v3415 = vsub.f32 %v3407, %v3413
  %v3416 = vmul.f32 %v3414, %v65
  %v3417 = vmul.f32 %v3415, %v65
  %v3418 = vmul.f32 %v3416, %v3416
  %v3419 = vmul.f32 %v3417, %v3417
  %3420 = vadd.xlane.f32.xlu0 %v3418
  %v3421 = vpop.xlane.xlu0 %3420
  %3422 = vadd.xlane.f32.xlu0 %v3419
  %v3423 = vpop.xlane.xlu0 %3422
  %v3424 = vmul.f32 %v3421, 0.03125
  %v3425 = vmul.f32 %v3423, 0.03125
  %v3426 = vadd.f32 %v3424, 1e-12
  %v3427 = vadd.f32 %v3425, 1e-12
  %v3428 = vrsqrt.pop %v3426
  %v3429 = vrsqrt.pop %v3427
  %v3430 = vmul.f32 %v3416, %v3428
  %v3431 = vmul.f32 %v3417, %v3429
  %v3433 = vlaneseq
  %v3434 = vshrl.u32 %v3433, 7
  %v3435 = vsub.s32 0, %v3434
  %v3436 = vrot.slane %v3403, %v3435
  %v3438 = vmul.f32 %v3430, %v3436
  %v3439 = vmul.f32 %v3431, %v3436
  %v3441 = vlaneseq
  %v3442 = vshrl.u32 %v3441, 7
  %v3443 = vsub.s32 0, %v3442
  %v3444 = vrot.slane %v3405, %v3443
  %v3446 = vadd.f32 %v3438, %v3444
  %v3447 = vadd.f32 %v3439, %v3444
  %3448 = vst [vmem:[%s18] sm:$0xff] %v3446
  %3449 = vst [vmem:[%s18 + $0x8] sm:$0xff] %v3447
  %v3450 = vld [vmem:[%s16] sm:$0xff]
  %v3451 = vld [vmem:[%s16 + $0x8] sm:$0xff]
  %v3452 = vld [vmem:[%s16 + $0x10] sm:$0xff]
  %v3453 = vld [vmem:[%s16 + $0x18] sm:$0xff]
  %v3454 = vld [vmem:[%s16 + $0x20] sm:$0xff]
  %v3455 = vld [vmem:[%s16 + $0x28] sm:$0xff]
  %v3456 = vld [vmem:[%s16 + $0x30] sm:$0xff]
  %v3457 = vld [vmem:[%s16 + $0x38] sm:$0xff]
  %v3458 = vld [vmem:[%s16 + $0x40] sm:$0xff]
  %v3459 = vld [vmem:[%s16 + $0x48] sm:$0xff]
  %v3460 = vld [vmem:[%s16 + $0x50] sm:$0xff]
  %v3461 = vld [vmem:[%s16 + $0x58] sm:$0xff]
  %v3462 = vld [vmem:[%s16 + $0x60] sm:$0xff]
  %v3463 = vld [vmem:[%s16 + $0x68] sm:$0xff]
  %v3464 = vld [vmem:[%s16 + $0x70] sm:$0xff]
  %v3465 = vld [vmem:[%s16 + $0x78] sm:$0xff]
  %v3466 = vld [vmem:[%s17] sm:$0x1]
  %v3468 = vlaneseq
  %v3469 = vshrl.u32 %v3468, 7
  %v3470 = vsub.s32 0, %v3469
  %v3471 = vrot.slane %v3466, %v3470
  %3473 = vmatprep.subr.mxu0 0.0
  %3474 = vmatpush1.msra.mxu0 %v3450
  %3475 = vmatprep.subr.mxu0 0.0
  %3476 = vmatpush1.msra.mxu0 %v3451
  %3477 = vmatprep.subr.mxu0 0.0
  %3478 = vmatpush1.msra.mxu0 %v3452
  %3479 = vmatprep.subr.mxu0 0.0
  %3480 = vmatpush1.msra.mxu0 %v3453
  %3481 = vmatprep.subr.mxu0 0.0
  %3482 = vmatpush1.msra.mxu0 %v3454
  %3483 = vmatprep.subr.mxu0 0.0
  %3484 = vmatpush1.msra.mxu0 %v3455
  %3485 = vmatprep.subr.mxu0 0.0
  %3486 = vmatpush1.msra.mxu0 %v3456
  %3487 = vmatprep.subr.mxu0 0.0
  %3488 = vmatpush1.msra.mxu0 %v3457
  %3489 = vmatprep.subr.mxu0 0.0
  %3490 = vmatpush1.msra.mxu0 %v3458
  %3491 = vmatprep.subr.mxu0 0.0
  %3492 = vmatpush1.msra.mxu0 %v3459
  %3493 = vmatprep.subr.mxu0 0.0
  %3494 = vmatpush1.msra.mxu0 %v3460
  %3495 = vmatprep.subr.mxu0 0.0
  %3496 = vmatpush1.msra.mxu0 %v3461
  %3497 = vmatprep.subr.mxu0 0.0
  %3498 = vmatpush1.msra.mxu0 %v3462
  %3499 = vmatprep.subr.mxu0 0.0
  %3500 = vmatpush1.msra.mxu0 %v3463
  %3501 = vmatprep.subr.mxu0 0.0
  %3502 = vmatpush1.msra.mxu0 %v3464
  %3503 = vmatprep.subr.mxu0 0.0
  %3504 = vmatpush1.msra.mxu0 %v3465
  %3505 = vmatprep.subr.mxu0 0.0
  %3506 = vmatpush1.msra.mxu0 0.0
  %3507 = vmatprep.subr.mxu0 0.0
  %3508 = vmatpush1.msra.mxu0 0.0
  %3509 = vmatprep.subr.mxu0 0.0
  %3510 = vmatpush1.msra.mxu0 0.0
  %3511 = vmatprep.subr.mxu0 0.0
  %3512 = vmatpush1.msra.mxu0 0.0
  %3513 = vmatprep.subr.mxu0 0.0
  %3514 = vmatpush1.msra.mxu0 0.0
  %3515 = vmatprep.subr.mxu0 0.0
  %3516 = vmatpush1.msra.mxu0 0.0
  %3517 = vmatprep.subr.mxu0 0.0
  %3518 = vmatpush1.msra.mxu0 0.0
  %3519 = vmatprep.subr.mxu0 0.0
  %3520 = vmatpush1.msra.mxu0 0.0
  %3521 = vmatprep.subr.mxu0 0.0
  %3522 = vmatpush1.msra.mxu0 0.0
  %3523 = vmatprep.subr.mxu0 0.0
  %3524 = vmatpush1.msra.mxu0 0.0
  %3525 = vmatprep.subr.mxu0 0.0
  %3526 = vmatpush1.msra.mxu0 0.0
  %3527 = vmatprep.subr.mxu0 0.0
  %3528 = vmatpush1.msra.mxu0 0.0
  %3529 = vmatprep.subr.mxu0 0.0
  %3530 = vmatpush1.msra.mxu0 0.0
  %3531 = vmatprep.subr.mxu0 0.0
  %3532 = vmatpush1.msra.mxu0 0.0
  %3533 = vmatprep.subr.mxu0 0.0
  %3534 = vmatpush1.msra.mxu0 0.0
  %3535 = vmatprep.subr.mxu0 0.0
  %3536 = vmatpush1.msra.mxu0 0.0
  %3537 = vmatprep.mubr.f32.mxu0 0.0
  %3538 = vmatmul.mubr.f32.gmra.mrb[0].mxu0 %v3446
  %v3539 = vpop.f32.mrb[0].mxu0
  %v3540 = vadd.f32 %v3471, %v3539
  %v3541 = vpop.f32.mrb[0].mxu0
  %3542 = vmatprep.mubr.f32.mxu0 0.0
  %3543 = vmatmul.mubr.f32.gmra.mrb[0].mxu0 %v3447
  %v3544 = vpop.f32.mrb[0].mxu0
  %v3545 = vadd.f32 %v3471, %v3544
  %v3546 = vpop.f32.mrb[0].mxu0
  %3547 = vdwg.mxu0
  %v3548 = vtanh.pop %v3540
  %v3549 = vtanh.pop %v3545
  %3550 = vst [vmem:[%s19] sm:$0xff] %v3548
  %3551 = vst [vmem:[%s19 + $0x8] sm:$0xff] %v3549
  // Predicated region
  $region74: #{transformer_based_encoder_forward.1} parent=0 // pred_check
    _
  $region75: #{transformer_based_encoder_forward.1} parent=0 // pred_check_branch
    %3553 = sbr.rel (0) target = $region77
  $region76: #{transformer_based_encoder_forward.1} parent=0 // pred_region
    _
  $region77: #{transformer_based_encoder_forward.1} parent=0 // pred_fallthru
    _
  // Predicated region
  $region78: #{transformer_based_encoder_forward.1} parent=0 // pred_check
    _
  $region79: #{transformer_based_encoder_forward.1} parent=0 // pred_check_branch
    %3555 = sbr.rel (0) target = $region81
  $region80: #{transformer_based_encoder_forward.1} parent=0 // pred_region
    _
  $region81: #{transformer_based_encoder_forward.1} parent=0 // pred_fallthru
    _
  // Predicated region
  $region82: #{transformer_based_encoder_forward.1} parent=0 // pred_check
    _
  $region83: #{transformer_based_encoder_forward.1} parent=0 // pred_check_branch
    %3557 = sbr.rel (0) target = $region85
  $region84: #{transformer_based_encoder_forward.1} parent=0 // pred_region
    _
  $region85: #{transformer_based_encoder_forward.1} parent=0 // pred_fallthru
    _
  // Predicated region
  $region86: #{transformer_based_encoder_forward.1} parent=0 // pred_check
    _
  $region87: #{transformer_based_encoder_forward.1} parent=0 // pred_check_branch
    %3559 = sbr.rel (0) target = $region89
  $region88: #{transformer_based_encoder_forward.1} parent=0 // pred_region
    _
  $region89: #{transformer_based_encoder_forward.1} parent=0 // pred_fallthru
    _

</llo_original>
